<compile_context>
chip_gen: v7x
topology: tpu7x:2x2x1
jax: 0.10.0
libtpu: 0.0.40
codegen_flags: <defaults>
</compile_context>

<pallas_src>
import jax
import jax.numpy as jnp
from jax import lax
from jax.experimental import pallas as pl
from jax.experimental.pallas import tpu as pltpu

KSIZE = 9
PAD = 4
CG_ITERS = 10


# ----------------------------------------------------------------------------
# Pallas kernel
# ----------------------------------------------------------------------------
def _bddc_kernel(miu_ref, mask_ref, dty_ref, z_ref, ws_ref, sf_ref, sb_ref, out_ref):
    m, nc2 = out_ref.shape
    nc = nc2 // 2

    # |miu| from SMEM scalar (stays on the scalar path, splat on use)
    miu_abs = jnp.abs(miu_ref[0, 0])

    mask = mask_ref[...]          # (m, 2nc) 0/1 sampling mask (tiled over re|im)
    dty = dty_ref[...]            # DTy = kk * mask, lane-dense
    z = z_ref[...]
    ws = ws_ref[...]

    # sign pattern for "multiply by i":  [-1]*nc ++ [+1]*nc along lanes
    lane = lax.broadcasted_iota(jnp.int32, (m, nc2), 1)
    sgn = jnp.where(lane < nc, jnp.float32(-1.0), jnp.float32(1.0))

    zrows = jnp.zeros((PAD, nc2), jnp.float32)

    def conv(x, s_ref):
        # out[y] = sum_p x[y + p - PAD] @ B_p  ==  im2col over rows + ONE bf16 matmul
        xp = jnp.concatenate([zrows, x, zrows], axis=0)                    # (m+8, 2nc)
        xbig = jnp.concatenate([xp[p:p + m, :] for p in range(KSIZE)], axis=1)
        return jnp.dot(xbig.astype(jnp.bfloat16), s_ref[...],
                       preferred_element_type=jnp.float32)                 # (m, 2nc) f32

    def ata(x):
        # selection + adjoint-selection == multiply by sampling mask; rho == 1
        b1 = conv(x, sf_ref) - x
        b2 = conv(b1, sb_ref) - b1
        return mask * x + b2

    def times_i(x):
        # (xr + i*xi) * i == (-xi + i*xr): swap lane halves, negate the real half
        return pltpu.roll(x, nc, axis=1) * sgn

    # p0 = DTy + |miu| z - ATA(ws) - |miu| ws
    p0 = dty + miu_abs * z - ata(ws) - miu_abs * ws
    rr0 = jnp.sum(p0 * p0)                     # sum(r conj r) is exactly real
    eps = jnp.float32(1e-30)                   # guard against 0/0 once CG converges

    def cg_body(_, carry):
        p, r, b, rr = carry                    # rr = ||r||^2 carried (saves 1 reduction)
        q = ata(p) + miu_abs * p
        jp = times_i(p)
        jq = times_i(q)
        pq_r = jnp.sum(q * p)                  # Re sum(q conj p)
        pq_i = jnp.sum(q * jp)                 # Im sum(q conj p)
        den = pq_r * pq_r + pq_i * pq_i + eps
        al_r = rr * pq_r / den                 # alpha = rr / pq
        al_i = -rr * pq_i / den
        b_n = b + al_r * p + al_i * jp
        r_n = r - (al_r * q + al_i * jq)
        rr_n = jnp.sum(r_n * r_n)
        beta = rr_n / (rr + eps)
        p_n = r_n + beta * p
        return p_n, r_n, b_n, rr_n

    _, _, b_fin, _ = lax.fori_loop(0, CG_ITERS, cg_body, (p0, p0, ws, rr0))
    out_ref[...] = b_fin


# ----------------------------------------------------------------------------
# Glue: band-matrix construction + wrapper
# ----------------------------------------------------------------------------
def _band_matrices(C, n, no_c):
    # C[p, q, i, o] complex conv coefficients:
    #   out[y, x, o] = sum_{p,q,i} pad(x_in)[y+p, x+q, i] * C[p, q, i, o]
    # S[p, x_in*no_c + i, x_out*no_c + o] = C[p, x_in - x_out + PAD, i, o] (0 if OOR)
    q_idx = jnp.arange(n)[:, None] - jnp.arange(n)[None, :] + PAD       # (n_in, n_out)
    valid = ((q_idx >= 0) & (q_idx < KSIZE)).astype(C.dtype)
    q_clip = jnp.clip(q_idx, 0, KSIZE - 1)
    G = C[:, q_clip, :, :] * valid[None, :, :, None, None]              # (9, n_in, n_out, i, o)
    return jnp.transpose(G, (0, 1, 3, 2, 4)).reshape(KSIZE, n * no_c, n * no_c)


def _block_real_stack(S):
    # complex (9, nc, nc) -> real block form [[Sr, Si], [-Si, Sr]] per offset p,
    # stacked on the contraction dim: rows p*2nc + [re rows | im rows]. bf16.
    sr = jnp.real(S).astype(jnp.float32)
    si = jnp.imag(S).astype(jnp.float32)
    top = jnp.concatenate([sr, si], axis=2)         # rows hit by the real input lanes
    bot = jnp.concatenate([-si, sr], axis=2)        # rows hit by the imag input lanes
    blk = jnp.concatenate([top, bot], axis=1)       # (9, 2nc, 2nc)
    k, r, c = blk.shape
    return blk.reshape(k * r, c).astype(jnp.bfloat16)


@jax.jit
def bddc_2d_forward(miu, z, kspace, kernel, spirit_kernels, prev_kspace):
    # spirit_kernels is accepted for API parity but, exactly as in the PyTorch
    # forward, is never used by the math.
    del spirit_kernels
    divp = kspace.shape[3] // 2
    _, m, n, _ = kspace.shape
    no_c = divp
    nc = n * no_c
    nc2 = 2 * nc

    kk_r = kspace[0, :, :, :divp].astype(jnp.float32)
    kk_i = kspace[0, :, :, divp:].astype(jnp.float32)
    mask = (jnp.abs(kk_r + 1j * kk_i) > 0).astype(jnp.float32)          # locs

    flat = lambda a: a.astype(jnp.float32).reshape(m, nc)
    pack = lambda ar, ai: jnp.concatenate([flat(ar), flat(ai)], axis=1)  # lane-dense [re|im]

    mask2 = pack(mask, mask)
    dty2 = pack(kk_r * mask, kk_i * mask)                               # DTy == kk * mask
    z2 = pack(z[0, :, :, :divp], z[0, :, :, divp:])
    ws2 = pack(prev_kspace[0, :, :, :divp], prev_kspace[0, :, :, divp:])

    K = kernel[0].reshape(KSIZE, KSIZE, no_c, no_c)
    # forward conv:   weight[o,i,p,q] = K[q,p,i,o]  ->  Cf[p,q,i,o] = K[q,p,i,o]
    Cf = jnp.transpose(K, (1, 0, 2, 3))
    # backward conv:  weight[o,i,p,q] = conj(K[8-q, 8-p, o, i])
    Cb = jnp.conj(jnp.transpose(K[::-1, ::-1, :, :], (1, 0, 3, 2)))
    sf_big = _block_real_stack(_band_matrices(Cf, n, no_c))             # (9*2nc, 2nc) bf16
    sb_big = _block_real_stack(_band_matrices(Cb, n, no_c))

    miu_in = jnp.reshape(jnp.asarray(miu, jnp.float32), (1, 1))

    def vspec(shape):
        return pl.BlockSpec(shape, lambda i: (0,) * len(shape))

    out2 = pl.pallas_call(
        _bddc_kernel,
        grid=(1,),
        in_specs=[
            pl.BlockSpec(memory_space=pltpu.MemorySpace.SMEM),          # miu scalar
            vspec((m, nc2)),                                            # mask
            vspec((m, nc2)),                                            # DTy
            vspec((m, nc2)),                                            # z
            vspec((m, nc2)),                                            # warm start
            vspec((KSIZE * nc2, nc2)),                                  # S forward (bf16)
            vspec((KSIZE * nc2, nc2)),                                  # S backward (bf16)
        ],
        out_specs=vspec((m, nc2)),
        out_shape=jax.ShapeDtypeStruct((m, nc2), jnp.float32),
        input_output_aliases={4: 0},                                    # reuse ws buffer
        compiler_params=pltpu.CompilerParams(
            dimension_semantics=("arbitrary",),
            vmem_limit_bytes=48 * 1024 * 1024),
    )(miu_in, mask2, dty2, z2, ws2, sf_big, sb_big)

    b_r = out2[:, :nc].reshape(1, m, n, no_c)
    b_i = out2[:, nc:].reshape(1, m, n, no_c)
    return jnp.concatenate([b_r, b_i], axis=3)


# ----------------------------------------------------------------------------
# Pure-JAX reference (direct transcription of the PyTorch forward)
# ----------------------------------------------------------------------------
def _conv2d_torch(x_c, w_c):
    # torch.nn.functional.conv2d(NCHW input, OIHW weight, padding=4), complex via 4 real convs
    def rconv(x, w):
        lhs = jnp.transpose(x, (2, 0, 1))[None]
        out = lax.conv_general_dilated(
            lhs, w, window_strides=(1, 1), padding=((PAD, PAD), (PAD, PAD)),
            dimension_numbers=('NCHW', 'OIHW', 'NCHW'))
        return jnp.transpose(out[0], (1, 2, 0))
    xr, xi = jnp.real(x_c), jnp.imag(x_c)
    wr, wi = jnp.real(w_c), jnp.imag(w_c)
    return (rconv(xr, wr) - rconv(xi, wi)) + 1j * (rconv(xr, wi) + rconv(xi, wr))


@jax.jit
def forward_reference(miu, z, kspace, kernel, prev_kspace):
    divp = kspace.shape[3] // 2
    kk = kspace[0, :, :, :divp] + 1j * kspace[0, :, :, divp:]
    m, n, no_c = kk.shape
    mask = (jnp.abs(kk) > 0).astype(jnp.complex64)
    K = kernel[0].reshape(KSIZE, KSIZE, no_c, no_c)
    w_fwd = jnp.transpose(K, (3, 2, 1, 0))                   # (O, I, kH, kW)
    kernel_mid = jnp.conj(K[::-1, ::-1, :, :])
    w_bwd = jnp.transpose(kernel_mid, (2, 3, 1, 0))          # (O, I, kH, kW)

    def ata(x):
        a2 = x * mask
        b1 = _conv2d_torch(x, w_fwd) - x
        b2 = _conv2d_torch(b1, w_bwd) - b1
        return a2 + b2                                       # rho == 1

    DTy = kk * mask
    ws = prev_kspace[0, :, :, :divp] + 1j * prev_kspace[0, :, :, divp:]
    zc = z[0, :, :, :divp] + 1j * z[0, :, :, divp:]
    am = jnp.abs(miu)
    p_now = DTy + am * zc - ata(ws) - am * ws
    r_now = p_now
    b_approx = ws
    for _ in range(CG_ITERS):
        q = ata(p_now) + am * p_now
        alpha = jnp.sum(r_now * jnp.conj(r_now)) / jnp.sum(q * jnp.conj(p_now))
        b_next = b_approx + alpha * p_now
        r_next = r_now - alpha * q
        p_next = r_next + jnp.sum(r_next * jnp.conj(r_next)) / jnp.sum(r_now * jnp.conj(r_now)) * p_now
        b_approx, p_now, r_now = b_next, p_next, r_next
    return jnp.concatenate([jnp.real(b_approx), jnp.imag(b_approx)], axis=2)[None]


# ----------------------------------------------------------------------------
if __name__ == "__main__":
    key = jax.random.PRNGKey(0)
    k1, k2, k3, k4, k5 = jax.random.split(key, 5)
    m = n = 16
    no_c = 4

    # undersampled k-space: zero out odd columns so that `locs` is a real mask
    kspace_full = jax.random.normal(k1, (1, m, n, 2 * no_c), jnp.float32)
    col_keep = (jnp.arange(n) % 2 == 0).astype(jnp.float32)[None, None, :, None]
    kspace = kspace_full * col_keep

    z = jax.random.normal(k2, (1, m, n, 2 * no_c), jnp.float32)
    prev_kspace = 0.5 * jax.random.normal(k3, (1, m, n, 2 * no_c), jnp.float32)

    kr = 0.02 * jax.random.normal(k4, (1, 81, no_c, no_c), jnp.float32)
    ki = 0.02 * jax.random.normal(k5, (1, 81, no_c, no_c), jnp.float32)
    kernel = (kr + 1j * ki).astype(jnp.complex64)
    spirit_kernels = jnp.zeros((1, 81, no_c, no_c), jnp.complex64)    # unused by forward

    miu = jnp.float32(0.8)                                            # deterministic "parameter"

    out = bddc_2d_forward(miu, z, kspace, kernel, spirit_kernels, prev_kspace)
    out = jax.block_until_ready(out)
    assert out.shape == (1, m, n, 2 * no_c)

    ref = jax.block_until_ready(forward_reference(miu, z, kspace, kernel, prev_kspace))
    rel_err = float(jnp.max(jnp.abs(out - ref)) / (jnp.max(jnp.abs(ref)) + 1e-8))
    assert rel_err < 5e-2, f"Pallas result mismatch vs reference: rel_err={rel_err}"

    print("KERNEL_OK")
</pallas_src>

<mosaic_0001>
module attributes {stable_mosaic.version = 11 : i64} {
  func.func @_bddc_kernel(%arg0: i32, %arg1: memref<1x1xf32, #tpu.memory_space<smem>>, %arg2: memref<16x128xf32, #tpu.memory_space<vmem>>, %arg3: memref<16x128xf32, #tpu.memory_space<vmem>>, %arg4: memref<16x128xf32, #tpu.memory_space<vmem>>, %arg5: memref<16x128xf32, #tpu.memory_space<vmem>>, %arg6: memref<1152x128xbf16, #tpu.memory_space<vmem>>, %arg7: memref<1152x128xbf16, #tpu.memory_space<vmem>>, %arg8: memref<16x128xf32, #tpu.memory_space<vmem>>) attributes {dimension_semantics = [#tpu.dimension_semantics<arbitrary>], iteration_bounds = array<i64: 1>, scalar_prefetch = 0 : i64, scratch_operands = 0 : i64, tpu.core_type = #tpu.core_type<tc>, window_params = [{transform_indices = @transform_0, window_bounds = array<i64: 1, 1>}, {pipeline_mode = #tpu.pipeline_mode<synchronous>, transform_indices = @transform_1, window_bounds = array<i64: 16, 128>}, {pipeline_mode = #tpu.pipeline_mode<synchronous>, transform_indices = @transform_2, window_bounds = array<i64: 16, 128>}, {pipeline_mode = #tpu.pipeline_mode<synchronous>, transform_indices = @transform_3, window_bounds = array<i64: 16, 128>}, {pipeline_mode = #tpu.pipeline_mode<synchronous>, transform_indices = @transform_4, window_bounds = array<i64: 16, 128>}, {pipeline_mode = #tpu.pipeline_mode<synchronous>, transform_indices = @transform_5, window_bounds = array<i64: 1152, 128>}, {pipeline_mode = #tpu.pipeline_mode<synchronous>, transform_indices = @transform_6, window_bounds = array<i64: 1152, 128>}, {pipeline_mode = #tpu.pipeline_mode<synchronous>, transform_indices = @transform_7, window_bounds = array<i64: 16, 128>}]} {
    %c0 = arith.constant 0 : index
    %c0_0 = arith.constant 0 : index
    %0 = memref.load %arg1[%c0, %c0_0] : memref<1x1xf32, #tpu.memory_space<smem>>
    %1 = math.absf %0 : f32
    %c0_1 = arith.constant 0 : index
    %c0_2 = arith.constant 0 : index
    %2 = vector.load %arg2[%c0_1, %c0_2] : memref<16x128xf32, #tpu.memory_space<vmem>>, vector<16x128xf32>
    %c0_3 = arith.constant 0 : index
    %c0_4 = arith.constant 0 : index
    %3 = vector.load %arg3[%c0_3, %c0_4] : memref<16x128xf32, #tpu.memory_space<vmem>>, vector<16x128xf32>
    %c0_5 = arith.constant 0 : index
    %c0_6 = arith.constant 0 : index
    %4 = vector.load %arg4[%c0_5, %c0_6] : memref<16x128xf32, #tpu.memory_space<vmem>>, vector<16x128xf32>
    %c0_7 = arith.constant 0 : index
    %c0_8 = arith.constant 0 : index
    %5 = vector.load %arg5[%c0_7, %c0_8] : memref<16x128xf32, #tpu.memory_space<vmem>>, vector<16x128xf32>
    %6 = tpu.iota {dimensions = array<i32: 1>} : vector<16x128xi32>
    %c64_i32 = arith.constant 64 : i32
    %7 = vector.broadcast %c64_i32 : i32 to vector<16x128xi32>
    %8 = arith.cmpi slt, %6, %7 : vector<16x128xi32>
    %cst = arith.constant -1.000000e+00 : f32
    %cst_9 = arith.constant 1.000000e+00 : f32
    %9 = vector.broadcast %cst : f32 to vector<16x128xf32>
    %10 = vector.broadcast %cst_9 : f32 to vector<16x128xf32>
    %11 = arith.select %8, %9, %10 : vector<16x128xi1>, vector<16x128xf32>
    %cst_10 = arith.constant 0.000000e+00 : f32
    %12 = vector.broadcast %cst_10 : f32 to vector<4x128xf32>
    %13 = vector.broadcast %1 : f32 to vector<16x128xf32>
    %14 = arith.mulf %13, %4 : vector<16x128xf32>
    %15 = arith.addf %3, %14 : vector<16x128xf32>
    %16 = tpu.concatenate %12, %5, %12 in 0 : vector<4x128xf32>, vector<16x128xf32>, vector<4x128xf32> -> vector<24x128xf32>
    %17 = vector.extract_strided_slice %16 {offsets = [0, 0], sizes = [16, 128], strides = [1, 1]} : vector<24x128xf32> to vector<16x128xf32>
    %18 = vector.extract_strided_slice %16 {offsets = [1, 0], sizes = [16, 128], strides = [1, 1]} : vector<24x128xf32> to vector<16x128xf32>
    %19 = vector.extract_strided_slice %16 {offsets = [2, 0], sizes = [16, 128], strides = [1, 1]} : vector<24x128xf32> to vector<16x128xf32>
    %20 = vector.extract_strided_slice %16 {offsets = [3, 0], sizes = [16, 128], strides = [1, 1]} : vector<24x128xf32> to vector<16x128xf32>
    %21 = vector.extract_strided_slice %16 {offsets = [4, 0], sizes = [16, 128], strides = [1, 1]} : vector<24x128xf32> to vector<16x128xf32>
    %22 = vector.extract_strided_slice %16 {offsets = [5, 0], sizes = [16, 128], strides = [1, 1]} : vector<24x128xf32> to vector<16x128xf32>
    %23 = vector.extract_strided_slice %16 {offsets = [6, 0], sizes = [16, 128], strides = [1, 1]} : vector<24x128xf32> to vector<16x128xf32>
    %24 = vector.extract_strided_slice %16 {offsets = [7, 0], sizes = [16, 128], strides = [1, 1]} : vector<24x128xf32> to vector<16x128xf32>
    %25 = vector.extract_strided_slice %16 {offsets = [8, 0], sizes = [16, 128], strides = [1, 1]} : vector<24x128xf32> to vector<16x128xf32>
    %26 = tpu.concatenate %17, %18, %19, %20, %21, %22, %23, %24, %25 in 1 : vector<16x128xf32>, vector<16x128xf32>, vector<16x128xf32>, vector<16x128xf32>, vector<16x128xf32>, vector<16x128xf32>, vector<16x128xf32>, vector<16x128xf32>, vector<16x128xf32> -> vector<16x1152xf32>
    %27 = arith.truncf %26 : vector<16x1152xf32> to vector<16x1152xbf16>
    %c0_11 = arith.constant 0 : index
    %c0_12 = arith.constant 0 : index
    %28 = vector.load %arg6[%c0_11, %c0_12] : memref<1152x128xbf16, #tpu.memory_space<vmem>>, vector<1152x128xbf16>
    %cst_13 = arith.constant dense<0.000000e+00> : vector<16x128xf32>
    %29 = tpu.matmul %27, %28, %cst_13 {dimension_numbers = #tpu.dot_dimension_numbers<[1], [0], [0], [1], [0, 0, 1, 1], [], []>} : vector<16x1152xbf16>, vector<1152x128xbf16>, vector<16x128xf32> -> vector<16x128xf32>
    %30 = arith.subf %29, %5 : vector<16x128xf32>
    %31 = tpu.concatenate %12, %30, %12 in 0 : vector<4x128xf32>, vector<16x128xf32>, vector<4x128xf32> -> vector<24x128xf32>
    %32 = vector.extract_strided_slice %31 {offsets = [0, 0], sizes = [16, 128], strides = [1, 1]} : vector<24x128xf32> to vector<16x128xf32>
    %33 = vector.extract_strided_slice %31 {offsets = [1, 0], sizes = [16, 128], strides = [1, 1]} : vector<24x128xf32> to vector<16x128xf32>
    %34 = vector.extract_strided_slice %31 {offsets = [2, 0], sizes = [16, 128], strides = [1, 1]} : vector<24x128xf32> to vector<16x128xf32>
    %35 = vector.extract_strided_slice %31 {offsets = [3, 0], sizes = [16, 128], strides = [1, 1]} : vector<24x128xf32> to vector<16x128xf32>
    %36 = vector.extract_strided_slice %31 {offsets = [4, 0], sizes = [16, 128], strides = [1, 1]} : vector<24x128xf32> to vector<16x128xf32>
    %37 = vector.extract_strided_slice %31 {offsets = [5, 0], sizes = [16, 128], strides = [1, 1]} : vector<24x128xf32> to vector<16x128xf32>
    %38 = vector.extract_strided_slice %31 {offsets = [6, 0], sizes = [16, 128], strides = [1, 1]} : vector<24x128xf32> to vector<16x128xf32>
    %39 = vector.extract_strided_slice %31 {offsets = [7, 0], sizes = [16, 128], strides = [1, 1]} : vector<24x128xf32> to vector<16x128xf32>
    %40 = vector.extract_strided_slice %31 {offsets = [8, 0], sizes = [16, 128], strides = [1, 1]} : vector<24x128xf32> to vector<16x128xf32>
    %41 = tpu.concatenate %32, %33, %34, %35, %36, %37, %38, %39, %40 in 1 : vector<16x128xf32>, vector<16x128xf32>, vector<16x128xf32>, vector<16x128xf32>, vector<16x128xf32>, vector<16x128xf32>, vector<16x128xf32>, vector<16x128xf32>, vector<16x128xf32> -> vector<16x1152xf32>
    %42 = arith.truncf %41 : vector<16x1152xf32> to vector<16x1152xbf16>
    %c0_14 = arith.constant 0 : index
    %c0_15 = arith.constant 0 : index
    %43 = vector.load %arg7[%c0_14, %c0_15] : memref<1152x128xbf16, #tpu.memory_space<vmem>>, vector<1152x128xbf16>
    %cst_16 = arith.constant dense<0.000000e+00> : vector<16x128xf32>
    %44 = tpu.matmul %42, %43, %cst_16 {dimension_numbers = #tpu.dot_dimension_numbers<[1], [0], [0], [1], [0, 0, 1, 1], [], []>} : vector<16x1152xbf16>, vector<1152x128xbf16>, vector<16x128xf32> -> vector<16x128xf32>
    %45 = arith.subf %44, %30 : vector<16x128xf32>
    %46 = arith.mulf %2, %5 : vector<16x128xf32>
    %47 = arith.addf %46, %45 : vector<16x128xf32>
    %48 = arith.subf %15, %47 : vector<16x128xf32>
    %49 = vector.broadcast %1 : f32 to vector<16x128xf32>
    %50 = arith.mulf %49, %5 : vector<16x128xf32>
    %51 = arith.subf %48, %50 : vector<16x128xf32>
    %52 = arith.mulf %51, %51 : vector<16x128xf32>
    %53 = vector.shape_cast %52 : vector<16x128xf32> to vector<1x16x128xf32>
    %cst_17 = arith.constant dense<0.000000e+00> : vector<1xf32>
    %54 = vector.multi_reduction <add>, %53, %cst_17 [1, 2] : vector<1x16x128xf32> to vector<1xf32>
    %55 = vector.shape_cast %54 : vector<1xf32> to vector<1x1x1xf32>
    %56 = vector.extract %55[0, 0, 0] : f32 from vector<1x1x1xf32>
    %cst_18 = arith.constant 1.000000e-30 : f32
    %c0_i32 = arith.constant 0 : i32
    %c10_i32 = arith.constant 10 : i32
    %57 = arith.addi %c0_i32, %c10_i32 : i32
    %c1_i32 = arith.constant 1 : i32
    %58:4 = scf.for %arg9 = %c0_i32 to %57 step %c1_i32 iter_args(%arg10 = %51, %arg11 = %51, %arg12 = %5, %arg13 = %56) -> (vector<16x128xf32>, vector<16x128xf32>, vector<16x128xf32>, f32)  : i32 {
      %60 = tpu.concatenate %12, %arg10, %12 in 0 : vector<4x128xf32>, vector<16x128xf32>, vector<4x128xf32> -> vector<24x128xf32>
      %61 = vector.extract_strided_slice %60 {offsets = [0, 0], sizes = [16, 128], strides = [1, 1]} : vector<24x128xf32> to vector<16x128xf32>
      %62 = vector.extract_strided_slice %60 {offsets = [1, 0], sizes = [16, 128], strides = [1, 1]} : vector<24x128xf32> to vector<16x128xf32>
      %63 = vector.extract_strided_slice %60 {offsets = [2, 0], sizes = [16, 128], strides = [1, 1]} : vector<24x128xf32> to vector<16x128xf32>
      %64 = vector.extract_strided_slice %60 {offsets = [3, 0], sizes = [16, 128], strides = [1, 1]} : vector<24x128xf32> to vector<16x128xf32>
      %65 = vector.extract_strided_slice %60 {offsets = [4, 0], sizes = [16, 128], strides = [1, 1]} : vector<24x128xf32> to vector<16x128xf32>
      %66 = vector.extract_strided_slice %60 {offsets = [5, 0], sizes = [16, 128], strides = [1, 1]} : vector<24x128xf32> to vector<16x128xf32>
      %67 = vector.extract_strided_slice %60 {offsets = [6, 0], sizes = [16, 128], strides = [1, 1]} : vector<24x128xf32> to vector<16x128xf32>
      %68 = vector.extract_strided_slice %60 {offsets = [7, 0], sizes = [16, 128], strides = [1, 1]} : vector<24x128xf32> to vector<16x128xf32>
      %69 = vector.extract_strided_slice %60 {offsets = [8, 0], sizes = [16, 128], strides = [1, 1]} : vector<24x128xf32> to vector<16x128xf32>
      %70 = tpu.concatenate %61, %62, %63, %64, %65, %66, %67, %68, %69 in 1 : vector<16x128xf32>, vector<16x128xf32>, vector<16x128xf32>, vector<16x128xf32>, vector<16x128xf32>, vector<16x128xf32>, vector<16x128xf32>, vector<16x128xf32>, vector<16x128xf32> -> vector<16x1152xf32>
      %71 = arith.truncf %70 : vector<16x1152xf32> to vector<16x1152xbf16>
      %c0_21 = arith.constant 0 : index
      %c0_22 = arith.constant 0 : index
      %72 = vector.load %arg6[%c0_21, %c0_22] : memref<1152x128xbf16, #tpu.memory_space<vmem>>, vector<1152x128xbf16>
      %cst_23 = arith.constant dense<0.000000e+00> : vector<16x128xf32>
      %73 = tpu.matmul %71, %72, %cst_23 {dimension_numbers = #tpu.dot_dimension_numbers<[1], [0], [0], [1], [0, 0, 1, 1], [], []>} : vector<16x1152xbf16>, vector<1152x128xbf16>, vector<16x128xf32> -> vector<16x128xf32>
      %74 = arith.subf %73, %arg10 : vector<16x128xf32>
      %75 = tpu.concatenate %12, %74, %12 in 0 : vector<4x128xf32>, vector<16x128xf32>, vector<4x128xf32> -> vector<24x128xf32>
      %76 = vector.extract_strided_slice %75 {offsets = [0, 0], sizes = [16, 128], strides = [1, 1]} : vector<24x128xf32> to vector<16x128xf32>
      %77 = vector.extract_strided_slice %75 {offsets = [1, 0], sizes = [16, 128], strides = [1, 1]} : vector<24x128xf32> to vector<16x128xf32>
      %78 = vector.extract_strided_slice %75 {offsets = [2, 0], sizes = [16, 128], strides = [1, 1]} : vector<24x128xf32> to vector<16x128xf32>
      %79 = vector.extract_strided_slice %75 {offsets = [3, 0], sizes = [16, 128], strides = [1, 1]} : vector<24x128xf32> to vector<16x128xf32>
      %80 = vector.extract_strided_slice %75 {offsets = [4, 0], sizes = [16, 128], strides = [1, 1]} : vector<24x128xf32> to vector<16x128xf32>
      %81 = vector.extract_strided_slice %75 {offsets = [5, 0], sizes = [16, 128], strides = [1, 1]} : vector<24x128xf32> to vector<16x128xf32>
      %82 = vector.extract_strided_slice %75 {offsets = [6, 0], sizes = [16, 128], strides = [1, 1]} : vector<24x128xf32> to vector<16x128xf32>
      %83 = vector.extract_strided_slice %75 {offsets = [7, 0], sizes = [16, 128], strides = [1, 1]} : vector<24x128xf32> to vector<16x128xf32>
      %84 = vector.extract_strided_slice %75 {offsets = [8, 0], sizes = [16, 128], strides = [1, 1]} : vector<24x128xf32> to vector<16x128xf32>
      %85 = tpu.concatenate %76, %77, %78, %79, %80, %81, %82, %83, %84 in 1 : vector<16x128xf32>, vector<16x128xf32>, vector<16x128xf32>, vector<16x128xf32>, vector<16x128xf32>, vector<16x128xf32>, vector<16x128xf32>, vector<16x128xf32>, vector<16x128xf32> -> vector<16x1152xf32>
      %86 = arith.truncf %85 : vector<16x1152xf32> to vector<16x1152xbf16>
      %c0_24 = arith.constant 0 : index
      %c0_25 = arith.constant 0 : index
      %87 = vector.load %arg7[%c0_24, %c0_25] : memref<1152x128xbf16, #tpu.memory_space<vmem>>, vector<1152x128xbf16>
      %cst_26 = arith.constant dense<0.000000e+00> : vector<16x128xf32>
      %88 = tpu.matmul %86, %87, %cst_26 {dimension_numbers = #tpu.dot_dimension_numbers<[1], [0], [0], [1], [0, 0, 1, 1], [], []>} : vector<16x1152xbf16>, vector<1152x128xbf16>, vector<16x128xf32> -> vector<16x128xf32>
      %89 = arith.subf %88, %74 : vector<16x128xf32>
      %90 = arith.mulf %2, %arg10 : vector<16x128xf32>
      %91 = arith.addf %90, %89 : vector<16x128xf32>
      %92 = vector.broadcast %1 : f32 to vector<16x128xf32>
      %93 = arith.mulf %92, %arg10 : vector<16x128xf32>
      %94 = arith.addf %91, %93 : vector<16x128xf32>
      %c64_i32_27 = arith.constant 64 : i32
      %95 = tpu.dynamic_rotate %arg10 by %c64_i32_27 dim 1 : vector<16x128xf32>, i32 -> vector<16x128xf32>
      %96 = arith.mulf %95, %11 : vector<16x128xf32>
      %c64_i32_28 = arith.constant 64 : i32
      %97 = tpu.dynamic_rotate %94 by %c64_i32_28 dim 1 : vector<16x128xf32>, i32 -> vector<16x128xf32>
      %98 = arith.mulf %97, %11 : vector<16x128xf32>
      %99 = arith.mulf %94, %arg10 : vector<16x128xf32>
      %100 = vector.shape_cast %99 : vector<16x128xf32> to vector<1x16x128xf32>
      %cst_29 = arith.constant dense<0.000000e+00> : vector<1xf32>
      %101 = vector.multi_reduction <add>, %100, %cst_29 [1, 2] : vector<1x16x128xf32> to vector<1xf32>
      %102 = vector.shape_cast %101 : vector<1xf32> to vector<1x1x1xf32>
      %103 = vector.extract %102[0, 0, 0] : f32 from vector<1x1x1xf32>
      %104 = arith.mulf %94, %96 : vector<16x128xf32>
      %105 = vector.shape_cast %104 : vector<16x128xf32> to vector<1x16x128xf32>
      %cst_30 = arith.constant dense<0.000000e+00> : vector<1xf32>
      %106 = vector.multi_reduction <add>, %105, %cst_30 [1, 2] : vector<1x16x128xf32> to vector<1xf32>
      %107 = vector.shape_cast %106 : vector<1xf32> to vector<1x1x1xf32>
      %108 = vector.extract %107[0, 0, 0] : f32 from vector<1x1x1xf32>
      %109 = arith.mulf %103, %103 : f32
      %110 = arith.mulf %108, %108 : f32
      %111 = arith.addf %109, %110 : f32
      %112 = arith.addf %111, %cst_18 : f32
      %113 = arith.mulf %arg13, %103 : f32
      %114 = arith.divf %113, %112 : f32
      %cst_31 = arith.constant 0.000000e+00 : f32
      %115 = arith.subf %cst_31, %arg13 : f32
      %116 = arith.mulf %115, %108 : f32
      %117 = arith.divf %116, %112 : f32
      %118 = vector.broadcast %114 : f32 to vector<16x128xf32>
      %119 = arith.mulf %118, %arg10 : vector<16x128xf32>
      %120 = arith.addf %arg12, %119 : vector<16x128xf32>
      %121 = vector.broadcast %117 : f32 to vector<16x128xf32>
      %122 = arith.mulf %121, %96 : vector<16x128xf32>
      %123 = arith.addf %120, %122 : vector<16x128xf32>
      %124 = vector.broadcast %114 : f32 to vector<16x128xf32>
      %125 = arith.mulf %124, %94 : vector<16x128xf32>
      %126 = vector.broadcast %117 : f32 to vector<16x128xf32>
      %127 = arith.mulf %126, %98 : vector<16x128xf32>
      %128 = arith.addf %125, %127 : vector<16x128xf32>
      %129 = arith.subf %arg11, %128 : vector<16x128xf32>
      %130 = arith.mulf %129, %129 : vector<16x128xf32>
      %131 = vector.shape_cast %130 : vector<16x128xf32> to vector<1x16x128xf32>
      %cst_32 = arith.constant dense<0.000000e+00> : vector<1xf32>
      %132 = vector.multi_reduction <add>, %131, %cst_32 [1, 2] : vector<1x16x128xf32> to vector<1xf32>
      %133 = vector.shape_cast %132 : vector<1xf32> to vector<1x1x1xf32>
      %134 = vector.extract %133[0, 0, 0] : f32 from vector<1x1x1xf32>
      %135 = arith.addf %arg13, %cst_18 : f32
      %136 = arith.divf %134, %135 : f32
      %137 = vector.broadcast %136 : f32 to vector<16x128xf32>
      %138 = arith.mulf %137, %arg10 : vector<16x128xf32>
      %139 = arith.addf %129, %138 : vector<16x128xf32>
      scf.yield %139, %129, %123, %134 : vector<16x128xf32>, vector<16x128xf32>, vector<16x128xf32>, f32
    }
    %c0_19 = arith.constant 0 : index
    %c0_20 = arith.constant 0 : index
    %59 = vector.load %arg8[%c0_19, %c0_20] : memref<16x128xf32, #tpu.memory_space<vmem>>, vector<16x128xf32>
    tpu.vector_store %arg8[%c0_19, %c0_20], %58#2 {strides = array<i32>} : memref<16x128xf32, #tpu.memory_space<vmem>>, vector<16x128xf32>,
    return
  }
  func.func @transform_0(%arg0: i32) -> (i32, i32) {
    %c0_i32 = arith.constant 0 : i32
    %c0_i32_0 = arith.constant 0 : i32
    %c0_i32_1 = arith.constant 0 : i32
    return %c0_i32, %c0_i32_0 : i32, i32
  }
  func.func @transform_1(%arg0: i32) -> (i32, i32) {
    %c0_i32 = arith.constant 0 : i32
    %c0_i32_0 = arith.constant 0 : i32
    %c0_i32_1 = arith.constant 0 : i32
    return %c0_i32, %c0_i32_0 : i32, i32
  }
  func.func @transform_2(%arg0: i32) -> (i32, i32) {
    %c0_i32 = arith.constant 0 : i32
    %c0_i32_0 = arith.constant 0 : i32
    %c0_i32_1 = arith.constant 0 : i32
    return %c0_i32, %c0_i32_0 : i32, i32
  }
  func.func @transform_3(%arg0: i32) -> (i32, i32) {
    %c0_i32 = arith.constant 0 : i32
    %c0_i32_0 = arith.constant 0 : i32
    %c0_i32_1 = arith.constant 0 : i32
    return %c0_i32, %c0_i32_0 : i32, i32
  }
  func.func @transform_4(%arg0: i32) -> (i32, i32) {
    %c0_i32 = arith.constant 0 : i32
    %c0_i32_0 = arith.constant 0 : i32
    %c0_i32_1 = arith.constant 0 : i32
    return %c0_i32, %c0_i32_0 : i32, i32
  }
  func.func @transform_5(%arg0: i32) -> (i32, i32) {
    %c0_i32 = arith.constant 0 : i32
    %c0_i32_0 = arith.constant 0 : i32
    %c0_i32_1 = arith.constant 0 : i32
    return %c0_i32, %c0_i32_0 : i32, i32
  }
  func.func @transform_6(%arg0: i32) -> (i32, i32) {
    %c0_i32 = arith.constant 0 : i32
    %c0_i32_0 = arith.constant 0 : i32
    %c0_i32_1 = arith.constant 0 : i32
    return %c0_i32, %c0_i32_0 : i32, i32
  }
  func.func @transform_7(%arg0: i32) -> (i32, i32) {
    %c0_i32 = arith.constant 0 : i32
    %c0_i32_0 = arith.constant 0 : i32
    %c0_i32_1 = arith.constant 0 : i32
    return %c0_i32, %c0_i32_0 : i32, i32
  }
}

</mosaic_0001>

<llo_original>
// kernel: custom-call.1
$region0: #{custom-call.1}
  %s0 = inlined_call_operand.hbm [shape: c64[1,81,4,4], index: 0, kind: input, shape index: {}]
  %s1 = inlined_call_operand.vmem [shape: f32[1,81,4,4], index: 1, kind: output, shape index: {}]
  %s2 = scalar_lea.hbm %s0, 256
  $region1: #{custom-call.1} parent=0
    #allocation0 [shape = 's32[1]{0}', space=sflag, size = 0x4, scoped, tag = 'scoped memory for custom-call.1']
    %3 = vsyncpa [#allocation0], 0
    %s4 = sshll.u32 %s1, 4
    %s5 = int_to_ptr.vmem [resolvable:$true] %s4
    %7 = dma.hbm_to_vmem [thread:$0]  %s2, 256, %s5, [#allocation0]
    %8 = dma.done [#allocation0], 256
    %9 = vsyncpa [#allocation0], 1

// kernel: squeeze.0
$region0: #{squeeze.0}
  %s0 = inlined_call_operand.vmem [shape: f32[1,81,4,4], index: 0, kind: input, shape index: {}]
  %s1 = inlined_call_operand.vmem [shape: f32[9,9,4,4], index: 1, kind: output, shape index: {}]
  $region1: #{squeeze.0} parent=0
    #allocation0 [shape = 'u8[16384]{0}', space=vmem, size = 0x4000, scoped, tag = 'scoped mem for input reshape']
    %s3 = sshllo.u32 0, 4
    %s4 = smul.addr 4, 3
    %s5 = scalar_lea.vmem %s0, %s4
    %v6 = vld [vmem:[%s5] sm:%s3]
    %s7 = scalar_lea.vmem [#allocation0], 24
    %8 = vst [vmem:[%s7] sm:%s3] %v6
    %s9 = smul.addr 4, 2
    %s10 = scalar_lea.vmem %s0, %s9
    %v11 = vld [vmem:[%s10] sm:%s3]
    %s12 = scalar_lea.vmem [#allocation0], 16
    %13 = vst [vmem:[%s12] sm:%s3] %v11
    %s14 = scalar_lea.vmem %s0, 4
    %v15 = vld [vmem:[%s14] sm:%s3]
    %s16 = scalar_lea.vmem [#allocation0], 8
    %17 = vst [vmem:[%s16] sm:%s3] %v15
    %v18 = vld [vmem:[%s0] sm:%s3]
    %19 = vst [vmem:[#allocation0] sm:%s3] %v18
    %v20 = vld [vmem:[#allocation0] sm:$0xf]
    %vm21 = vcmask 72704
    %22 = vst.msk [vmem:[%s1] ss:$16 sm:$0x3] %vm21, %v20
    %23 = vst.msk [vmem:[%s1] ss:$16 sm:$0xc] %vm21, %v20
    %s24 = scalar_lea.vmem [#allocation0], 8
    %v25 = vld [vmem:[%s24] sm:$0xf]
    %vm26 = vcmask 72704
    %s27 = scalar_lea.vmem %s1, 64
    %28 = vst.msk [vmem:[%s27] ss:$16 sm:$0x3] %vm26, %v25
    %s29 = scalar_lea.vmem %s1, 64
    %30 = vst.msk [vmem:[%s29] ss:$16 sm:$0xc] %vm26, %v25
    %s31 = scalar_lea.vmem [#allocation0], 16
    %v32 = vld [vmem:[%s31] sm:$0xf]
    %vm33 = vcmask 72704
    %s34 = scalar_lea.vmem %s1, 128
    %35 = vst.msk [vmem:[%s34] ss:$16 sm:$0x3] %vm33, %v32
    %s36 = scalar_lea.vmem %s1, 128
    %37 = vst.msk [vmem:[%s36] ss:$16 sm:$0xc] %vm33, %v32
    %s38 = scalar_lea.vmem [#allocation0], 24
    %v39 = vld [vmem:[%s38] sm:$0xf]
    %vm40 = vcmask 72704
    %s41 = scalar_lea.vmem %s1, 192
    %42 = vst.msk [vmem:[%s41] ss:$16 sm:$0x3] %vm40, %v39
    %s43 = scalar_lea.vmem %s1, 192
    %44 = vst.msk [vmem:[%s43] ss:$16 sm:$0xc] %vm40, %v39
    %v45 = vld.sshfl [vmem:[#allocation0] sm:$0xff pattern:$0xba983210]
    %46 = vrot.lane.b32.xlu0 %v45, 119
    %v47 = vpop.permute.xlu0 %46
    %vm48 = vcmask 72704
    %s49 = scalar_lea.vmem %s1, 1
    %50 = vst.msk [vmem:[%s49] ss:$16 sm:$0x3] %vm48, %v47
    %s51 = scalar_lea.vmem %s1, 1
    %52 = vst.msk [vmem:[%s51] ss:$16 sm:$0xc] %vm48, %v47
    %s53 = scalar_lea.vmem %s1, 1
    %54 = vst.msk [vmem:[%s53] ss:$16 sm:$0x30] %vm48, %v47
    %s55 = scalar_lea.vmem %s1, 1
    %56 = vst.msk [vmem:[%s55] ss:$16 sm:$0xc0] %vm48, %v47
    %s57 = scalar_lea.vmem [#allocation0], 16
    %v58 = vld.sshfl [vmem:[%s57] sm:$0xff pattern:$0xba983210]
    %59 = vrot.lane.b32.xlu0 %v58, 119
    %v60 = vpop.permute.xlu0 %59
    %vm61 = vcmask 72704
    %s62 = scalar_lea.vmem %s1, 129
    %63 = vst.msk [vmem:[%s62] ss:$16 sm:$0x3] %vm61, %v60
    %s64 = scalar_lea.vmem %s1, 129
    %65 = vst.msk [vmem:[%s64] ss:$16 sm:$0xc] %vm61, %v60
    %s66 = scalar_lea.vmem %s1, 129
    %67 = vst.msk [vmem:[%s66] ss:$16 sm:$0x30] %vm61, %v60
    %s68 = scalar_lea.vmem %s1, 129
    %69 = vst.msk [vmem:[%s68] ss:$16 sm:$0xc0] %vm61, %v60
    %v70 = vld.sshfl [vmem:[#allocation0] sm:$0xff pattern:$0xba983210]
    %71 = vrot.lane.b32.xlu0 %v70, 110
    %v72 = vpop.permute.xlu0 %71
    %vm73 = vcmask 72704
    %s74 = scalar_lea.vmem %s1, 2
    %75 = vst.msk [vmem:[%s74] ss:$16 sm:$0x3] %vm73, %v72
    %s76 = scalar_lea.vmem %s1, 2
    %77 = vst.msk [vmem:[%s76] ss:$16 sm:$0xc] %vm73, %v72
    %s78 = scalar_lea.vmem %s1, 2
    %79 = vst.msk [vmem:[%s78] ss:$16 sm:$0x30] %vm73, %v72
    %s80 = scalar_lea.vmem %s1, 2
    %81 = vst.msk [vmem:[%s80] ss:$16 sm:$0xc0] %vm73, %v72
    %s82 = scalar_lea.vmem [#allocation0], 16
    %v83 = vld.sshfl [vmem:[%s82] sm:$0xff pattern:$0xba983210]
    %84 = vrot.lane.b32.xlu0 %v83, 110
    %v85 = vpop.permute.xlu0 %84
    %vm86 = vcmask 72704
    %s87 = scalar_lea.vmem %s1, 130
    %88 = vst.msk [vmem:[%s87] ss:$16 sm:$0x3] %vm86, %v85
    %s89 = scalar_lea.vmem %s1, 130
    %90 = vst.msk [vmem:[%s89] ss:$16 sm:$0xc] %vm86, %v85
    %s91 = scalar_lea.vmem %s1, 130
    %92 = vst.msk [vmem:[%s91] ss:$16 sm:$0x30] %vm86, %v85
    %s93 = scalar_lea.vmem %s1, 130
    %94 = vst.msk [vmem:[%s93] ss:$16 sm:$0xc0] %vm86, %v85
    %v95 = vld.sshfl [vmem:[#allocation0] sm:$0xff pattern:$0xba983210]
    %96 = vrot.lane.b32.xlu0 %v95, 101
    %v97 = vpop.permute.xlu0 %96
    %vm98 = vcmask 72704
    %s99 = scalar_lea.vmem %s1, 3
    %100 = vst.msk [vmem:[%s99] ss:$16 sm:$0x3] %vm98, %v97
    %s101 = scalar_lea.vmem %s1, 3
    %102 = vst.msk [vmem:[%s101] ss:$16 sm:$0xc] %vm98, %v97
    %s103 = scalar_lea.vmem %s1, 3
    %104 = vst.msk [vmem:[%s103] ss:$16 sm:$0x30] %vm98, %v97
    %s105 = scalar_lea.vmem %s1, 3
    %106 = vst.msk [vmem:[%s105] ss:$16 sm:$0xc0] %vm98, %v97
    %s107 = scalar_lea.vmem [#allocation0], 16
    %v108 = vld.sshfl [vmem:[%s107] sm:$0xff pattern:$0xba983210]
    %109 = vrot.lane.b32.xlu0 %v108, 101
    %v110 = vpop.permute.xlu0 %109
    %vm111 = vcmask 72704
    %s112 = scalar_lea.vmem %s1, 131
    %113 = vst.msk [vmem:[%s112] ss:$16 sm:$0x3] %vm111, %v110
    %s114 = scalar_lea.vmem %s1, 131
    %115 = vst.msk [vmem:[%s114] ss:$16 sm:$0xc] %vm111, %v110
    %s116 = scalar_lea.vmem %s1, 131
    %117 = vst.msk [vmem:[%s116] ss:$16 sm:$0x30] %vm111, %v110
    %s118 = scalar_lea.vmem %s1, 131
    %119 = vst.msk [vmem:[%s118] ss:$16 sm:$0xc0] %vm111, %v110
    %v120 = vld.sshfl [vmem:[#allocation0] sm:$0xff pattern:$0xba983210]
    %121 = vrot.lane.b32.xlu0 %v120, 92
    %v122 = vpop.permute.xlu0 %121
    %vm123 = vcmask 72704
    %s124 = scalar_lea.vmem %s1, 4
    %125 = vst.msk [vmem:[%s124] ss:$16 sm:$0x3] %vm123, %v122
    %s126 = scalar_lea.vmem %s1, 4
    %127 = vst.msk [vmem:[%s126] ss:$16 sm:$0xc] %vm123, %v122
    %s128 = scalar_lea.vmem %s1, 4
    %129 = vst.msk [vmem:[%s128] ss:$16 sm:$0x30] %vm123, %v122
    %s130 = scalar_lea.vmem %s1, 4
    %131 = vst.msk [vmem:[%s130] ss:$16 sm:$0xc0] %vm123, %v122
    %s132 = scalar_lea.vmem [#allocation0], 16
    %v133 = vld.sshfl [vmem:[%s132] sm:$0xff pattern:$0xba983210]
    %134 = vrot.lane.b32.xlu0 %v133, 92
    %v135 = vpop.permute.xlu0 %134
    %vm136 = vcmask 72704
    %s137 = scalar_lea.vmem %s1, 132
    %138 = vst.msk [vmem:[%s137] ss:$16 sm:$0x3] %vm136, %v135
    %s139 = scalar_lea.vmem %s1, 132
    %140 = vst.msk [vmem:[%s139] ss:$16 sm:$0xc] %vm136, %v135
    %s141 = scalar_lea.vmem %s1, 132
    %142 = vst.msk [vmem:[%s141] ss:$16 sm:$0x30] %vm136, %v135
    %s143 = scalar_lea.vmem %s1, 132
    %144 = vst.msk [vmem:[%s143] ss:$16 sm:$0xc0] %vm136, %v135
    %v145 = vld.sshfl [vmem:[#allocation0] sm:$0xff pattern:$0xba983210]
    %146 = vrot.lane.b32.xlu0 %v145, 83
    %v147 = vpop.permute.xlu0 %146
    %vm148 = vcmask 72704
    %s149 = scalar_lea.vmem %s1, 5
    %150 = vst.msk [vmem:[%s149] ss:$16 sm:$0x3] %vm148, %v147
    %s151 = scalar_lea.vmem %s1, 5
    %152 = vst.msk [vmem:[%s151] ss:$16 sm:$0xc] %vm148, %v147
    %s153 = scalar_lea.vmem %s1, 5
    %154 = vst.msk [vmem:[%s153] ss:$16 sm:$0x30] %vm148, %v147
    %s155 = scalar_lea.vmem %s1, 5
    %156 = vst.msk [vmem:[%s155] ss:$16 sm:$0xc0] %vm148, %v147
    %s157 = scalar_lea.vmem [#allocation0], 16
    %v158 = vld.sshfl [vmem:[%s157] sm:$0xff pattern:$0xba983210]
    %159 = vrot.lane.b32.xlu0 %v158, 83
    %v160 = vpop.permute.xlu0 %159
    %vm161 = vcmask 72704
    %s162 = scalar_lea.vmem %s1, 133
    %163 = vst.msk [vmem:[%s162] ss:$16 sm:$0x3] %vm161, %v160
    %s164 = scalar_lea.vmem %s1, 133
    %165 = vst.msk [vmem:[%s164] ss:$16 sm:$0xc] %vm161, %v160
    %s166 = scalar_lea.vmem %s1, 133
    %167 = vst.msk [vmem:[%s166] ss:$16 sm:$0x30] %vm161, %v160
    %s168 = scalar_lea.vmem %s1, 133
    %169 = vst.msk [vmem:[%s168] ss:$16 sm:$0xc0] %vm161, %v160
    %v170 = vld.sshfl [vmem:[#allocation0] sm:$0xff pattern:$0xba983210]
    %171 = vrot.lane.b32.xlu0 %v170, 74
    %v172 = vpop.permute.xlu0 %171
    %vm173 = vcmask 72704
    %s174 = scalar_lea.vmem %s1, 6
    %175 = vst.msk [vmem:[%s174] ss:$16 sm:$0x3] %vm173, %v172
    %s176 = scalar_lea.vmem %s1, 6
    %177 = vst.msk [vmem:[%s176] ss:$16 sm:$0xc] %vm173, %v172
    %s178 = scalar_lea.vmem %s1, 6
    %179 = vst.msk [vmem:[%s178] ss:$16 sm:$0x30] %vm173, %v172
    %s180 = scalar_lea.vmem %s1, 6
    %181 = vst.msk [vmem:[%s180] ss:$16 sm:$0xc0] %vm173, %v172
    %s182 = scalar_lea.vmem [#allocation0], 16
    %v183 = vld.sshfl [vmem:[%s182] sm:$0xff pattern:$0xba983210]
    %184 = vrot.lane.b32.xlu0 %v183, 74
    %v185 = vpop.permute.xlu0 %184
    %vm186 = vcmask 72704
    %s187 = scalar_lea.vmem %s1, 134
    %188 = vst.msk [vmem:[%s187] ss:$16 sm:$0x3] %vm186, %v185
    %s189 = scalar_lea.vmem %s1, 134
    %190 = vst.msk [vmem:[%s189] ss:$16 sm:$0xc] %vm186, %v185
    %s191 = scalar_lea.vmem %s1, 134
    %192 = vst.msk [vmem:[%s191] ss:$16 sm:$0x30] %vm186, %v185
    %s193 = scalar_lea.vmem %s1, 134
    %194 = vst.msk [vmem:[%s193] ss:$16 sm:$0xc0] %vm186, %v185
    %v195 = vld.sshfl [vmem:[#allocation0] sm:$0xff pattern:$0xba983210]
    %196 = vrot.lane.b32.xlu0 %v195, 65
    %v197 = vpop.permute.xlu0 %196
    %vm198 = vcmask 72704
    %s199 = scalar_lea.vmem %s1, 7
    %200 = vst.msk [vmem:[%s199] ss:$16 sm:$0x3] %vm198, %v197
    %s201 = scalar_lea.vmem %s1, 7
    %202 = vst.msk [vmem:[%s201] ss:$16 sm:$0xc] %vm198, %v197
    %s203 = scalar_lea.vmem %s1, 7
    %204 = vst.msk [vmem:[%s203] ss:$16 sm:$0x30] %vm198, %v197
    %s205 = scalar_lea.vmem %s1, 7
    %206 = vst.msk [vmem:[%s205] ss:$16 sm:$0xc0] %vm198, %v197
    %s207 = scalar_lea.vmem [#allocation0], 16
    %v208 = vld.sshfl [vmem:[%s207] sm:$0xff pattern:$0xba983210]
    %209 = vrot.lane.b32.xlu0 %v208, 65
    %v210 = vpop.permute.xlu0 %209
    %vm211 = vcmask 72704
    %s212 = scalar_lea.vmem %s1, 135
    %213 = vst.msk [vmem:[%s212] ss:$16 sm:$0x3] %vm211, %v210
    %s214 = scalar_lea.vmem %s1, 135
    %215 = vst.msk [vmem:[%s214] ss:$16 sm:$0xc] %vm211, %v210
    %s216 = scalar_lea.vmem %s1, 135
    %217 = vst.msk [vmem:[%s216] ss:$16 sm:$0x30] %vm211, %v210
    %s218 = scalar_lea.vmem %s1, 135
    %219 = vst.msk [vmem:[%s218] ss:$16 sm:$0xc0] %vm211, %v210
    %v220 = vld.sshfl [vmem:[#allocation0] sm:$0xff pattern:$0xba983210]
    %221 = vrot.lane.b32.xlu0 %v220, 56
    %v222 = vpop.permute.xlu0 %221
    %vm223 = vcmask 72704
    %s224 = scalar_lea.vmem %s1, 8
    %225 = vst.msk [vmem:[%s224] ss:$16 sm:$0x3] %vm223, %v222
    %s226 = scalar_lea.vmem %s1, 8
    %227 = vst.msk [vmem:[%s226] ss:$16 sm:$0xc] %vm223, %v222
    %s228 = scalar_lea.vmem %s1, 8
    %229 = vst.msk [vmem:[%s228] ss:$16 sm:$0x30] %vm223, %v222
    %s230 = scalar_lea.vmem %s1, 8
    %231 = vst.msk [vmem:[%s230] ss:$16 sm:$0xc0] %vm223, %v222
    %s232 = scalar_lea.vmem [#allocation0], 16
    %v233 = vld.sshfl [vmem:[%s232] sm:$0xff pattern:$0xba983210]
    %234 = vrot.lane.b32.xlu0 %v233, 56
    %v235 = vpop.permute.xlu0 %234
    %vm236 = vcmask 72704
    %s237 = scalar_lea.vmem %s1, 136
    %238 = vst.msk [vmem:[%s237] ss:$16 sm:$0x3] %vm236, %v235
    %s239 = scalar_lea.vmem %s1, 136
    %240 = vst.msk [vmem:[%s239] ss:$16 sm:$0xc] %vm236, %v235
    %s241 = scalar_lea.vmem %s1, 136
    %242 = vst.msk [vmem:[%s241] ss:$16 sm:$0x30] %vm236, %v235
    %s243 = scalar_lea.vmem %s1, 136
    %244 = vst.msk [vmem:[%s243] ss:$16 sm:$0xc0] %vm236, %v235

// kernel: custom-call
$region0: #{custom-call}
  %s0 = inlined_call_operand.hbm [shape: c64[1,81,4,4], index: 0, kind: input, shape index: {}]
  %s1 = inlined_call_operand.vmem [shape: f32[1,81,4,4], index: 1, kind: output, shape index: {}]
  $region1: #{custom-call} parent=0
    #allocation0 [shape = 's32[1]{0}', space=sflag, size = 0x4, scoped, tag = 'scoped memory for custom-call']
    %2 = vsyncpa [#allocation0], 0
    %s3 = sshll.u32 %s1, 4
    %s4 = int_to_ptr.vmem [resolvable:$true] %s3
    %6 = dma.hbm_to_vmem [thread:$0]  %s0, 256, %s4, [#allocation0]
    %7 = dma.done [#allocation0], 256
    %8 = vsyncpa [#allocation0], 1

// kernel: bddc_2d_forward.1
$region0: #{bddc_2d_forward.1}
  #allocation0 [shape = 'u32[]', space=smem, size = 0x4, offset = 0x4, fixed_abs, tag = 'smem constant byte address 0x4 - core index']
  #allocation1 [shape = 'u32[144,128]{1,0:T(1,128)}', space=vmem, size = 0x12000, scoped, tag = 'internal scratch']
  #allocation2 [shape = 'f32[1,1]{1,0:T(1,128)S(6)}', space=smem, size = 0x200, scoped, tag = 'scoped memory for bddc_2d_forward.1']
  %s0 = inlined_call_operand.<no memory space> [shape: f32[1,1], index: 0, kind: input, shape index: {}]
  %s1 = inlined_call_operand.vmem [shape: f32[16,128], index: 1, kind: input, shape index: {}]
  %s2 = inlined_call_operand.vmem [shape: f32[16,128], index: 2, kind: input, shape index: {}]
  %s3 = inlined_call_operand.vmem [shape: f32[16,128], index: 3, kind: input, shape index: {}]
  %s4 = inlined_call_operand.vmem [shape: f32[16,128], index: 4, kind: input, shape index: {}, may-alias: {4,7}]
  %s5 = inlined_call_operand.vmem [shape: bf16[1152,128], index: 5, kind: input, shape index: {}]
  %s6 = inlined_call_operand.vmem [shape: bf16[1152,128], index: 6, kind: input, shape index: {}]
  %s7 = inlined_call_operand.vmem [shape: f32[16,128], index: 7, kind: output, shape index: {}, may-alias: {4,7}]
  %s8 = sld [smem:[#allocation0]]
  $region45: #{bddc_2d_forward.1} parent=0
    _
  %s10 = ssub.s32 1, %s8
  %s11 = scalar_select 0, %s10, %s8
  %12 = sst [smem:[#allocation2]] %s0
  // Predicated region
  $region2: #{bddc_2d_forward.1} parent=0 // pred_check
    _
  $region3: #{bddc_2d_forward.1} parent=0 // pred_check_branch
    %14 = sbr.rel (0) target = $region5
  $region4: #{bddc_2d_forward.1} parent=0 // pred_region
    _
  $region5: #{bddc_2d_forward.1} parent=0 // pred_fallthru
    _
  // Predicated region
  $region6: #{bddc_2d_forward.1} parent=0 // pred_check
    _
  $region7: #{bddc_2d_forward.1} parent=0 // pred_check_branch
    %16 = sbr.rel (0) target = $region9
  $region8: #{bddc_2d_forward.1} parent=0 // pred_region
    _
  $region9: #{bddc_2d_forward.1} parent=0 // pred_fallthru
    _
  // Predicated region
  $region10: #{bddc_2d_forward.1} parent=0 // pred_check
    _
  $region11: #{bddc_2d_forward.1} parent=0 // pred_check_branch
    %18 = sbr.rel (0) target = $region13
  $region12: #{bddc_2d_forward.1} parent=0 // pred_region
    _
  $region13: #{bddc_2d_forward.1} parent=0 // pred_fallthru
    _
  // Predicated region
  $region14: #{bddc_2d_forward.1} parent=0 // pred_check
    _
  $region15: #{bddc_2d_forward.1} parent=0 // pred_check_branch
    %20 = sbr.rel (0) target = $region17
  $region16: #{bddc_2d_forward.1} parent=0 // pred_region
    _
  $region17: #{bddc_2d_forward.1} parent=0 // pred_fallthru
    _
  // Predicated region
  $region18: #{bddc_2d_forward.1} parent=0 // pred_check
    _
  $region19: #{bddc_2d_forward.1} parent=0 // pred_check_branch
    %22 = sbr.rel (0) target = $region21
  $region20: #{bddc_2d_forward.1} parent=0 // pred_region
    _
  $region21: #{bddc_2d_forward.1} parent=0 // pred_fallthru
    _
  // Predicated region
  $region22: #{bddc_2d_forward.1} parent=0 // pred_check
    _
  $region23: #{bddc_2d_forward.1} parent=0 // pred_check_branch
    %24 = sbr.rel (0) target = $region25
  $region24: #{bddc_2d_forward.1} parent=0 // pred_region
    _
  $region25: #{bddc_2d_forward.1} parent=0 // pred_fallthru
    _
  // Predicated region
  $region26: #{bddc_2d_forward.1} parent=0 // pred_check
    _
  $region27: #{bddc_2d_forward.1} parent=0 // pred_check_branch
    %26 = sbr.rel (0) target = $region29
  $region28: #{bddc_2d_forward.1} parent=0 // pred_region
    _
  $region29: #{bddc_2d_forward.1} parent=0 // pred_fallthru
    _
  %s28 = sld [smem:[#allocation2]]
  %s29 = sand.u32 2147483647, %s28
  %v30 = vld [vmem:[%s1] sm:$0xff]
  %v31 = vld [vmem:[%s1 + $0x8] sm:$0xff]
  %v32 = vld [vmem:[%s2] sm:$0xff]
  %v33 = vld [vmem:[%s2 + $0x8] sm:$0xff]
  %v34 = vld [vmem:[%s3] sm:$0xff]
  %v35 = vld [vmem:[%s3 + $0x8] sm:$0xff]
  %v36 = vld [vmem:[%s4] sm:$0xff]
  %v37 = vld [vmem:[%s4 + $0x8] sm:$0xff]
  %v38 = vlaneseq
  %v39 = vand.u32 %v38, 127
  %vm40 = vcmp.lt.s32.totalorder %v39, 64
  %v41 = vsel %vm40, -1.0, 1.0
  %v42 = vstv %s29
  %v43 = vmul.f32 %v42, %v34
  %v44 = vmul.f32 %v42, %v35
  %v45 = vadd.f32 %v32, %v43
  %v46 = vadd.f32 %v33, %v44
  %vm49 = vcmask 1043456
  %v50 = vrot.slane %v36, 4
  %v51 = vrot.slane %v37, 4
  %v52 = vsel %vm49, %v50, %v51
  %v56 = vsel %vm49, 0.0, %v50
  %v57 = vsel %vm49, %v51, 0.0
  %vm60 = vcmask 1046528
  %v61 = vrot.slane %v56, 1
  %v62 = vrot.slane %v52, 1
  %v63 = vsel %vm60, %v61, %v62
  %v64 = vrot.slane %v57, 1
  %v65 = vsel %vm60, %v62, %v64
  %vm68 = vcmask 1045504
  %v69 = vrot.slane %v56, 2
  %v70 = vrot.slane %v52, 2
  %v71 = vsel %vm68, %v69, %v70
  %v72 = vrot.slane %v57, 2
  %v73 = vsel %vm68, %v70, %v72
  %vm76 = vcmask 1044480
  %v77 = vrot.slane %v56, 3
  %v78 = vrot.slane %v52, 3
  %v79 = vsel %vm76, %v77, %v78
  %v80 = vrot.slane %v57, 3
  %v81 = vsel %vm76, %v78, %v80
  %v84 = vrot.slane %v56, 4
  %v85 = vrot.slane %v52, 4
  %v86 = vsel %vm49, %v84, %v85
  %v87 = vrot.slane %v57, 4
  %v88 = vsel %vm49, %v85, %v87
  %vm91 = vcmask 1042432
  %v92 = vrot.slane %v56, 5
  %v93 = vrot.slane %v52, 5
  %v94 = vsel %vm91, %v92, %v93
  %v95 = vrot.slane %v57, 5
  %v96 = vsel %vm91, %v93, %v95
  %vm99 = vcmask 1041408
  %v100 = vrot.slane %v56, 6
  %v101 = vrot.slane %v52, 6
  %v102 = vsel %vm99, %v100, %v101
  %v103 = vrot.slane %v57, 6
  %v104 = vsel %vm99, %v101, %v103
  %vm107 = vcmask 1040384
  %v108 = vrot.slane %v56, 7
  %v109 = vrot.slane %v52, 7
  %v110 = vsel %vm107, %v108, %v109
  %v111 = vrot.slane %v57, 7
  %v112 = vsel %vm107, %v109, %v111
  %v115 = vpack.c.bf16 %v52, %v56
  %v116 = vpack.c.bf16 %v65, %v63
  %v117 = vpack.c.bf16 %v73, %v71
  %v118 = vpack.c.bf16 %v81, %v79
  %v119 = vpack.c.bf16 %v88, %v86
  %v120 = vpack.c.bf16 %v96, %v94
  %v121 = vpack.c.bf16 %v104, %v102
  %v122 = vpack.c.bf16 %v112, %v110
  %v123 = vpack.c.bf16 %v57, %v52
  %v124 = vld [vmem:[%s5] sm:$0xf]
  %v125 = vld [vmem:[%s5 + $0x4] sm:$0xf]
  %v126 = vld [vmem:[%s5 + $0x8] sm:$0xf]
  %v127 = vld [vmem:[%s5 + $0xc] sm:$0xf]
  %v128 = vld [vmem:[%s5 + $0x10] sm:$0xf]
  %v129 = vld [vmem:[%s5 + $0x14] sm:$0xf]
  %v130 = vld [vmem:[%s5 + $0x18] sm:$0xf]
  %v131 = vld [vmem:[%s5 + $0x1c] sm:$0xf]
  %v132 = vld [vmem:[%s5 + $0x20] sm:$0xf]
  %v133 = vld [vmem:[%s5 + $0x24] sm:$0xf]
  %v134 = vld [vmem:[%s5 + $0x28] sm:$0xf]
  %v135 = vld [vmem:[%s5 + $0x2c] sm:$0xf]
  %v136 = vld [vmem:[%s5 + $0x30] sm:$0xf]
  %v137 = vld [vmem:[%s5 + $0x34] sm:$0xf]
  %v138 = vld [vmem:[%s5 + $0x38] sm:$0xf]
  %v139 = vld [vmem:[%s5 + $0x3c] sm:$0xf]
  %v140 = vld [vmem:[%s5 + $0x40] sm:$0xf]
  %v141 = vld [vmem:[%s5 + $0x44] sm:$0xf]
  %v142 = vld [vmem:[%s5 + $0x48] sm:$0xf]
  %v143 = vld [vmem:[%s5 + $0x4c] sm:$0xf]
  %v144 = vld [vmem:[%s5 + $0x50] sm:$0xf]
  %v145 = vld [vmem:[%s5 + $0x54] sm:$0xf]
  %v146 = vld [vmem:[%s5 + $0x58] sm:$0xf]
  %v147 = vld [vmem:[%s5 + $0x5c] sm:$0xf]
  %v148 = vld [vmem:[%s5 + $0x60] sm:$0xf]
  %v149 = vld [vmem:[%s5 + $0x64] sm:$0xf]
  %v150 = vld [vmem:[%s5 + $0x68] sm:$0xf]
  %v151 = vld [vmem:[%s5 + $0x6c] sm:$0xf]
  %v152 = vld [vmem:[%s5 + $0x70] sm:$0xf]
  %v153 = vld [vmem:[%s5 + $0x74] sm:$0xf]
  %v154 = vld [vmem:[%s5 + $0x78] sm:$0xf]
  %v155 = vld [vmem:[%s5 + $0x7c] sm:$0xf]
  %v156 = vld [vmem:[%s5 + $0x80] sm:$0xf]
  %v157 = vld [vmem:[%s5 + $0x84] sm:$0xf]
  %v158 = vld [vmem:[%s5 + $0x88] sm:$0xf]
  %v159 = vld [vmem:[%s5 + $0x8c] sm:$0xf]
  %v160 = vld [vmem:[%s5 + $0x90] sm:$0xf]
  %v161 = vld [vmem:[%s5 + $0x94] sm:$0xf]
  %v162 = vld [vmem:[%s5 + $0x98] sm:$0xf]
  %v163 = vld [vmem:[%s5 + $0x9c] sm:$0xf]
  %v164 = vld [vmem:[%s5 + $0xa0] sm:$0xf]
  %v165 = vld [vmem:[%s5 + $0xa4] sm:$0xf]
  %v166 = vld [vmem:[%s5 + $0xa8] sm:$0xf]
  %v167 = vld [vmem:[%s5 + $0xac] sm:$0xf]
  %v168 = vld [vmem:[%s5 + $0xb0] sm:$0xf]
  %v169 = vld [vmem:[%s5 + $0xb4] sm:$0xf]
  %v170 = vld [vmem:[%s5 + $0xb8] sm:$0xf]
  %v171 = vld [vmem:[%s5 + $0xbc] sm:$0xf]
  %v172 = vld [vmem:[%s5 + $0xc0] sm:$0xf]
  %v173 = vld [vmem:[%s5 + $0xc4] sm:$0xf]
  %v174 = vld [vmem:[%s5 + $0xc8] sm:$0xf]
  %v175 = vld [vmem:[%s5 + $0xcc] sm:$0xf]
  %v176 = vld [vmem:[%s5 + $0xd0] sm:$0xf]
  %v177 = vld [vmem:[%s5 + $0xd4] sm:$0xf]
  %v178 = vld [vmem:[%s5 + $0xd8] sm:$0xf]
  %v179 = vld [vmem:[%s5 + $0xdc] sm:$0xf]
  %v180 = vld [vmem:[%s5 + $0xe0] sm:$0xf]
  %v181 = vld [vmem:[%s5 + $0xe4] sm:$0xf]
  %v182 = vld [vmem:[%s5 + $0xe8] sm:$0xf]
  %v183 = vld [vmem:[%s5 + $0xec] sm:$0xf]
  %v184 = vld [vmem:[%s5 + $0xf0] sm:$0xf]
  %v185 = vld [vmem:[%s5 + $0xf4] sm:$0xf]
  %v186 = vld [vmem:[%s5 + $0xf8] sm:$0xf]
  %v187 = vld [vmem:[%s5 + $0xfc] sm:$0xf]
  %v188 = vld [vmem:[%s5 + $0x100] sm:$0xf]
  %v189 = vld [vmem:[%s5 + $0x104] sm:$0xf]
  %v190 = vld [vmem:[%s5 + $0x108] sm:$0xf]
  %v191 = vld [vmem:[%s5 + $0x10c] sm:$0xf]
  %v192 = vld [vmem:[%s5 + $0x110] sm:$0xf]
  %v193 = vld [vmem:[%s5 + $0x114] sm:$0xf]
  %v194 = vld [vmem:[%s5 + $0x118] sm:$0xf]
  %v195 = vld [vmem:[%s5 + $0x11c] sm:$0xf]
  %v196 = vld [vmem:[%s5 + $0x120] sm:$0xf]
  %v197 = vld [vmem:[%s5 + $0x124] sm:$0xf]
  %v198 = vld [vmem:[%s5 + $0x128] sm:$0xf]
  %v199 = vld [vmem:[%s5 + $0x12c] sm:$0xf]
  %v200 = vld [vmem:[%s5 + $0x130] sm:$0xf]
  %v201 = vld [vmem:[%s5 + $0x134] sm:$0xf]
  %v202 = vld [vmem:[%s5 + $0x138] sm:$0xf]
  %v203 = vld [vmem:[%s5 + $0x13c] sm:$0xf]
  %v204 = vld [vmem:[%s5 + $0x140] sm:$0xf]
  %v205 = vld [vmem:[%s5 + $0x144] sm:$0xf]
  %v206 = vld [vmem:[%s5 + $0x148] sm:$0xf]
  %v207 = vld [vmem:[%s5 + $0x14c] sm:$0xf]
  %v208 = vld [vmem:[%s5 + $0x150] sm:$0xf]
  %v209 = vld [vmem:[%s5 + $0x154] sm:$0xf]
  %v210 = vld [vmem:[%s5 + $0x158] sm:$0xf]
  %v211 = vld [vmem:[%s5 + $0x15c] sm:$0xf]
  %v212 = vld [vmem:[%s5 + $0x160] sm:$0xf]
  %v213 = vld [vmem:[%s5 + $0x164] sm:$0xf]
  %v214 = vld [vmem:[%s5 + $0x168] sm:$0xf]
  %v215 = vld [vmem:[%s5 + $0x16c] sm:$0xf]
  %v216 = vld [vmem:[%s5 + $0x170] sm:$0xf]
  %v217 = vld [vmem:[%s5 + $0x174] sm:$0xf]
  %v218 = vld [vmem:[%s5 + $0x178] sm:$0xf]
  %v219 = vld [vmem:[%s5 + $0x17c] sm:$0xf]
  %v220 = vld [vmem:[%s5 + $0x180] sm:$0xf]
  %v221 = vld [vmem:[%s5 + $0x184] sm:$0xf]
  %v222 = vld [vmem:[%s5 + $0x188] sm:$0xf]
  %v223 = vld [vmem:[%s5 + $0x18c] sm:$0xf]
  %v224 = vld [vmem:[%s5 + $0x190] sm:$0xf]
  %v225 = vld [vmem:[%s5 + $0x194] sm:$0xf]
  %v226 = vld [vmem:[%s5 + $0x198] sm:$0xf]
  %v227 = vld [vmem:[%s5 + $0x19c] sm:$0xf]
  %v228 = vld [vmem:[%s5 + $0x1a0] sm:$0xf]
  %v229 = vld [vmem:[%s5 + $0x1a4] sm:$0xf]
  %v230 = vld [vmem:[%s5 + $0x1a8] sm:$0xf]
  %v231 = vld [vmem:[%s5 + $0x1ac] sm:$0xf]
  %v232 = vld [vmem:[%s5 + $0x1b0] sm:$0xf]
  %v233 = vld [vmem:[%s5 + $0x1b4] sm:$0xf]
  %v234 = vld [vmem:[%s5 + $0x1b8] sm:$0xf]
  %v235 = vld [vmem:[%s5 + $0x1bc] sm:$0xf]
  %v236 = vld [vmem:[%s5 + $0x1c0] sm:$0xf]
  %v237 = vld [vmem:[%s5 + $0x1c4] sm:$0xf]
  %v238 = vld [vmem:[%s5 + $0x1c8] sm:$0xf]
  %v239 = vld [vmem:[%s5 + $0x1cc] sm:$0xf]
  %v240 = vld [vmem:[%s5 + $0x1d0] sm:$0xf]
  %v241 = vld [vmem:[%s5 + $0x1d4] sm:$0xf]
  %v242 = vld [vmem:[%s5 + $0x1d8] sm:$0xf]
  %v243 = vld [vmem:[%s5 + $0x1dc] sm:$0xf]
  %v244 = vld [vmem:[%s5 + $0x1e0] sm:$0xf]
  %v245 = vld [vmem:[%s5 + $0x1e4] sm:$0xf]
  %v246 = vld [vmem:[%s5 + $0x1e8] sm:$0xf]
  %v247 = vld [vmem:[%s5 + $0x1ec] sm:$0xf]
  %v248 = vld [vmem:[%s5 + $0x1f0] sm:$0xf]
  %v249 = vld [vmem:[%s5 + $0x1f4] sm:$0xf]
  %v250 = vld [vmem:[%s5 + $0x1f8] sm:$0xf]
  %v251 = vld [vmem:[%s5 + $0x1fc] sm:$0xf]
  %v252 = vld [vmem:[%s5 + $0x200] sm:$0xf]
  %v253 = vld [vmem:[%s5 + $0x204] sm:$0xf]
  %v254 = vld [vmem:[%s5 + $0x208] sm:$0xf]
  %v255 = vld [vmem:[%s5 + $0x20c] sm:$0xf]
  %v256 = vld [vmem:[%s5 + $0x210] sm:$0xf]
  %v257 = vld [vmem:[%s5 + $0x214] sm:$0xf]
  %v258 = vld [vmem:[%s5 + $0x218] sm:$0xf]
  %v259 = vld [vmem:[%s5 + $0x21c] sm:$0xf]
  %v260 = vld [vmem:[%s5 + $0x220] sm:$0xf]
  %v261 = vld [vmem:[%s5 + $0x224] sm:$0xf]
  %v262 = vld [vmem:[%s5 + $0x228] sm:$0xf]
  %v263 = vld [vmem:[%s5 + $0x22c] sm:$0xf]
  %v264 = vld [vmem:[%s5 + $0x230] sm:$0xf]
  %v265 = vld [vmem:[%s5 + $0x234] sm:$0xf]
  %v266 = vld [vmem:[%s5 + $0x238] sm:$0xf]
  %v267 = vld [vmem:[%s5 + $0x23c] sm:$0xf]
  %v412 = vunpack.c.l.b16 %v124
  %v413 = vunpack.c.l.b16 %v125
  %v414 = vunpack.c.l.b16 %v126
  %v415 = vunpack.c.l.b16 %v127
  %v416 = vunpack.c.l.b16 %v128
  %v417 = vunpack.c.l.b16 %v129
  %v418 = vunpack.c.l.b16 %v130
  %v419 = vunpack.c.l.b16 %v131
  %v420 = vunpack.c.l.b16 %v132
  %v421 = vunpack.c.l.b16 %v133
  %v422 = vunpack.c.l.b16 %v134
  %v423 = vunpack.c.l.b16 %v135
  %v424 = vunpack.c.l.b16 %v136
  %v425 = vunpack.c.l.b16 %v137
  %v426 = vunpack.c.l.b16 %v138
  %v427 = vunpack.c.l.b16 %v139
  %v428 = vunpack.c.l.b16 %v140
  %v429 = vunpack.c.l.b16 %v141
  %v430 = vunpack.c.l.b16 %v142
  %v431 = vunpack.c.l.b16 %v143
  %v432 = vunpack.c.l.b16 %v144
  %v433 = vunpack.c.l.b16 %v145
  %v434 = vunpack.c.l.b16 %v146
  %v435 = vunpack.c.l.b16 %v147
  %v436 = vunpack.c.l.b16 %v148
  %v437 = vunpack.c.l.b16 %v149
  %v438 = vunpack.c.l.b16 %v150
  %v439 = vunpack.c.l.b16 %v151
  %v440 = vunpack.c.l.b16 %v152
  %v441 = vunpack.c.l.b16 %v153
  %v442 = vunpack.c.l.b16 %v154
  %v443 = vunpack.c.l.b16 %v155
  %v444 = vunpack.c.l.b16 %v156
  %v445 = vunpack.c.l.b16 %v157
  %v446 = vunpack.c.l.b16 %v158
  %v447 = vunpack.c.l.b16 %v159
  %v448 = vunpack.c.l.b16 %v160
  %v449 = vunpack.c.l.b16 %v161
  %v450 = vunpack.c.l.b16 %v162
  %v451 = vunpack.c.l.b16 %v163
  %v452 = vunpack.c.l.b16 %v164
  %v453 = vunpack.c.l.b16 %v165
  %v454 = vunpack.c.l.b16 %v166
  %v455 = vunpack.c.l.b16 %v167
  %v456 = vunpack.c.l.b16 %v168
  %v457 = vunpack.c.l.b16 %v169
  %v458 = vunpack.c.l.b16 %v170
  %v459 = vunpack.c.l.b16 %v171
  %v460 = vunpack.c.l.b16 %v172
  %v461 = vunpack.c.l.b16 %v173
  %v462 = vunpack.c.l.b16 %v174
  %v463 = vunpack.c.l.b16 %v175
  %v464 = vunpack.c.l.b16 %v176
  %v465 = vunpack.c.l.b16 %v177
  %v466 = vunpack.c.l.b16 %v178
  %v467 = vunpack.c.l.b16 %v179
  %v468 = vunpack.c.l.b16 %v180
  %v469 = vunpack.c.l.b16 %v181
  %v470 = vunpack.c.l.b16 %v182
  %v471 = vunpack.c.l.b16 %v183
  %v472 = vunpack.c.l.b16 %v184
  %v473 = vunpack.c.l.b16 %v185
  %v474 = vunpack.c.l.b16 %v186
  %v475 = vunpack.c.l.b16 %v187
  %v476 = vunpack.c.l.b16 %v188
  %v477 = vunpack.c.l.b16 %v189
  %v478 = vunpack.c.l.b16 %v190
  %v479 = vunpack.c.l.b16 %v191
  %v480 = vunpack.c.l.b16 %v192
  %v481 = vunpack.c.l.b16 %v193
  %v482 = vunpack.c.l.b16 %v194
  %v483 = vunpack.c.l.b16 %v195
  %v484 = vunpack.c.l.b16 %v196
  %v485 = vunpack.c.l.b16 %v197
  %v486 = vunpack.c.l.b16 %v198
  %v487 = vunpack.c.l.b16 %v199
  %v488 = vunpack.c.l.b16 %v200
  %v489 = vunpack.c.l.b16 %v201
  %v490 = vunpack.c.l.b16 %v202
  %v491 = vunpack.c.l.b16 %v203
  %v492 = vunpack.c.l.b16 %v204
  %v493 = vunpack.c.l.b16 %v205
  %v494 = vunpack.c.l.b16 %v206
  %v495 = vunpack.c.l.b16 %v207
  %v496 = vunpack.c.l.b16 %v208
  %v497 = vunpack.c.l.b16 %v209
  %v498 = vunpack.c.l.b16 %v210
  %v499 = vunpack.c.l.b16 %v211
  %v500 = vunpack.c.l.b16 %v212
  %v501 = vunpack.c.l.b16 %v213
  %v502 = vunpack.c.l.b16 %v214
  %v503 = vunpack.c.l.b16 %v215
  %v504 = vunpack.c.l.b16 %v216
  %v505 = vunpack.c.l.b16 %v217
  %v506 = vunpack.c.l.b16 %v218
  %v507 = vunpack.c.l.b16 %v219
  %v508 = vunpack.c.l.b16 %v220
  %v509 = vunpack.c.l.b16 %v221
  %v510 = vunpack.c.l.b16 %v222
  %v511 = vunpack.c.l.b16 %v223
  %v512 = vunpack.c.l.b16 %v224
  %v513 = vunpack.c.l.b16 %v225
  %v514 = vunpack.c.l.b16 %v226
  %v515 = vunpack.c.l.b16 %v227
  %v516 = vunpack.c.l.b16 %v228
  %v517 = vunpack.c.l.b16 %v229
  %v518 = vunpack.c.l.b16 %v230
  %v519 = vunpack.c.l.b16 %v231
  %v520 = vunpack.c.l.b16 %v232
  %v521 = vunpack.c.l.b16 %v233
  %v522 = vunpack.c.l.b16 %v234
  %v523 = vunpack.c.l.b16 %v235
  %v524 = vunpack.c.l.b16 %v236
  %v525 = vunpack.c.l.b16 %v237
  %v526 = vunpack.c.l.b16 %v238
  %v527 = vunpack.c.l.b16 %v239
  %v528 = vunpack.c.l.b16 %v240
  %v529 = vunpack.c.l.b16 %v241
  %v530 = vunpack.c.l.b16 %v242
  %v531 = vunpack.c.l.b16 %v243
  %v532 = vunpack.c.l.b16 %v244
  %v533 = vunpack.c.l.b16 %v245
  %v534 = vunpack.c.l.b16 %v246
  %v535 = vunpack.c.l.b16 %v247
  %v536 = vunpack.c.l.b16 %v248
  %v537 = vunpack.c.l.b16 %v249
  %v538 = vunpack.c.l.b16 %v250
  %v539 = vunpack.c.l.b16 %v251
  %v540 = vunpack.c.l.b16 %v252
  %v541 = vunpack.c.l.b16 %v253
  %v542 = vunpack.c.l.b16 %v254
  %v543 = vunpack.c.l.b16 %v255
  %v544 = vunpack.c.l.b16 %v256
  %v545 = vunpack.c.l.b16 %v257
  %v546 = vunpack.c.l.b16 %v258
  %v547 = vunpack.c.l.b16 %v259
  %v548 = vunpack.c.l.b16 %v260
  %v549 = vunpack.c.l.b16 %v261
  %v550 = vunpack.c.l.b16 %v262
  %v551 = vunpack.c.l.b16 %v263
  %v552 = vunpack.c.l.b16 %v264
  %v553 = vunpack.c.l.b16 %v265
  %v554 = vunpack.c.l.b16 %v266
  %v555 = vunpack.c.l.b16 %v267
  %v556 = vpack.c.b16 %v413, %v412
  %v557 = vpack.c.b16 %v415, %v414
  %v558 = vpack.c.b16 %v417, %v416
  %v559 = vpack.c.b16 %v419, %v418
  %v560 = vpack.c.b16 %v421, %v420
  %v561 = vpack.c.b16 %v423, %v422
  %v562 = vpack.c.b16 %v425, %v424
  %v563 = vpack.c.b16 %v427, %v426
  %v564 = vpack.c.b16 %v429, %v428
  %v565 = vpack.c.b16 %v431, %v430
  %v566 = vpack.c.b16 %v433, %v432
  %v567 = vpack.c.b16 %v435, %v434
  %v568 = vpack.c.b16 %v437, %v436
  %v569 = vpack.c.b16 %v439, %v438
  %v570 = vpack.c.b16 %v441, %v440
  %v571 = vpack.c.b16 %v443, %v442
  %v572 = vpack.c.b16 %v445, %v444
  %v573 = vpack.c.b16 %v447, %v446
  %v574 = vpack.c.b16 %v449, %v448
  %v575 = vpack.c.b16 %v451, %v450
  %v576 = vpack.c.b16 %v453, %v452
  %v577 = vpack.c.b16 %v455, %v454
  %v578 = vpack.c.b16 %v457, %v456
  %v579 = vpack.c.b16 %v459, %v458
  %v580 = vpack.c.b16 %v461, %v460
  %v581 = vpack.c.b16 %v463, %v462
  %v582 = vpack.c.b16 %v465, %v464
  %v583 = vpack.c.b16 %v467, %v466
  %v584 = vpack.c.b16 %v469, %v468
  %v585 = vpack.c.b16 %v471, %v470
  %v586 = vpack.c.b16 %v473, %v472
  %v587 = vpack.c.b16 %v475, %v474
  %v588 = vpack.c.b16 %v477, %v476
  %v589 = vpack.c.b16 %v479, %v478
  %v590 = vpack.c.b16 %v481, %v480
  %v591 = vpack.c.b16 %v483, %v482
  %v592 = vpack.c.b16 %v485, %v484
  %v593 = vpack.c.b16 %v487, %v486
  %v594 = vpack.c.b16 %v489, %v488
  %v595 = vpack.c.b16 %v491, %v490
  %v596 = vpack.c.b16 %v493, %v492
  %v597 = vpack.c.b16 %v495, %v494
  %v598 = vpack.c.b16 %v497, %v496
  %v599 = vpack.c.b16 %v499, %v498
  %v600 = vpack.c.b16 %v501, %v500
  %v601 = vpack.c.b16 %v503, %v502
  %v602 = vpack.c.b16 %v505, %v504
  %v603 = vpack.c.b16 %v507, %v506
  %v604 = vpack.c.b16 %v509, %v508
  %v605 = vpack.c.b16 %v511, %v510
  %v606 = vpack.c.b16 %v513, %v512
  %v607 = vpack.c.b16 %v515, %v514
  %v608 = vpack.c.b16 %v517, %v516
  %v609 = vpack.c.b16 %v519, %v518
  %v610 = vpack.c.b16 %v521, %v520
  %v611 = vpack.c.b16 %v523, %v522
  %v612 = vpack.c.b16 %v525, %v524
  %v613 = vpack.c.b16 %v527, %v526
  %v614 = vpack.c.b16 %v529, %v528
  %v615 = vpack.c.b16 %v531, %v530
  %v616 = vpack.c.b16 %v533, %v532
  %v617 = vpack.c.b16 %v535, %v534
  %v618 = vpack.c.b16 %v537, %v536
  %v619 = vpack.c.b16 %v539, %v538
  %v620 = vpack.c.b16 %v541, %v540
  %v621 = vpack.c.b16 %v543, %v542
  %v622 = vpack.c.b16 %v545, %v544
  %v623 = vpack.c.b16 %v547, %v546
  %v624 = vpack.c.b16 %v549, %v548
  %v625 = vpack.c.b16 %v551, %v550
  %v626 = vpack.c.b16 %v553, %v552
  %v627 = vpack.c.b16 %v555, %v554
  %700 = vmatprep.subr.bf16.mxu0 0
  %701 = vmatpush1.bf16.msra.mxu0 %v556
  %702 = vmatprep.subr.bf16.mxu0 0
  %703 = vmatpush1.bf16.msra.mxu0 %v557
  %704 = vmatprep.subr.bf16.mxu0 0
  %705 = vmatpush1.bf16.msra.mxu0 %v558
  %706 = vmatprep.subr.bf16.mxu0 0
  %707 = vmatpush1.bf16.msra.mxu0 %v559
  %708 = vmatprep.subr.bf16.mxu0 0
  %709 = vmatpush1.bf16.msra.mxu0 %v560
  %710 = vmatprep.subr.bf16.mxu0 0
  %711 = vmatpush1.bf16.msra.mxu0 %v561
  %712 = vmatprep.subr.bf16.mxu0 0
  %713 = vmatpush1.bf16.msra.mxu0 %v562
  %714 = vmatprep.subr.bf16.mxu0 0
  %715 = vmatpush1.bf16.msra.mxu0 %v563
  %716 = vmatprep.subr.bf16.mxu0 0
  %717 = vmatpush1.bf16.msra.mxu0 %v564
  %718 = vmatprep.subr.bf16.mxu0 0
  %719 = vmatpush1.bf16.msra.mxu0 %v565
  %720 = vmatprep.subr.bf16.mxu0 0
  %721 = vmatpush1.bf16.msra.mxu0 %v566
  %722 = vmatprep.subr.bf16.mxu0 0
  %723 = vmatpush1.bf16.msra.mxu0 %v567
  %724 = vmatprep.subr.bf16.mxu0 0
  %725 = vmatpush1.bf16.msra.mxu0 %v568
  %726 = vmatprep.subr.bf16.mxu0 0
  %727 = vmatpush1.bf16.msra.mxu0 %v569
  %728 = vmatprep.subr.bf16.mxu0 0
  %729 = vmatpush1.bf16.msra.mxu0 %v570
  %730 = vmatprep.subr.bf16.mxu0 0
  %731 = vmatpush1.bf16.msra.mxu0 %v571
  %732 = vmatprep.mubr.bf16.mxu0 %v116
  %733 = vmatmul.mubr.bf16.gmra.mrb[0].mxu0 %v115
  %v734 = vpop.f32.mrb[0].mxu0
  %v735 = vadd.f32 0.0, %v734
  %v736 = vpop.f32.mrb[0].mxu0
  %v737 = vpop.f32.mrb[0].mxu0
  %v738 = vadd.f32 0.0, %v737
  %v739 = vpop.f32.mrb[0].mxu0
  %740 = vdwg.mxu0
  %741 = vmatprep.subr.bf16.mxu0 0
  %742 = vmatpush1.bf16.msra.mxu0 %v572
  %743 = vmatprep.subr.bf16.mxu0 0
  %744 = vmatpush1.bf16.msra.mxu0 %v573
  %745 = vmatprep.subr.bf16.mxu0 0
  %746 = vmatpush1.bf16.msra.mxu0 %v574
  %747 = vmatprep.subr.bf16.mxu0 0
  %748 = vmatpush1.bf16.msra.mxu0 %v575
  %749 = vmatprep.subr.bf16.mxu0 0
  %750 = vmatpush1.bf16.msra.mxu0 %v576
  %751 = vmatprep.subr.bf16.mxu0 0
  %752 = vmatpush1.bf16.msra.mxu0 %v577
  %753 = vmatprep.subr.bf16.mxu0 0
  %754 = vmatpush1.bf16.msra.mxu0 %v578
  %755 = vmatprep.subr.bf16.mxu0 0
  %756 = vmatpush1.bf16.msra.mxu0 %v579
  %757 = vmatprep.subr.bf16.mxu0 0
  %758 = vmatpush1.bf16.msra.mxu0 %v580
  %759 = vmatprep.subr.bf16.mxu0 0
  %760 = vmatpush1.bf16.msra.mxu0 %v581
  %761 = vmatprep.subr.bf16.mxu0 0
  %762 = vmatpush1.bf16.msra.mxu0 %v582
  %763 = vmatprep.subr.bf16.mxu0 0
  %764 = vmatpush1.bf16.msra.mxu0 %v583
  %765 = vmatprep.subr.bf16.mxu0 0
  %766 = vmatpush1.bf16.msra.mxu0 %v584
  %767 = vmatprep.subr.bf16.mxu0 0
  %768 = vmatpush1.bf16.msra.mxu0 %v585
  %769 = vmatprep.subr.bf16.mxu0 0
  %770 = vmatpush1.bf16.msra.mxu0 %v586
  %771 = vmatprep.subr.bf16.mxu0 0
  %772 = vmatpush1.bf16.msra.mxu0 %v587
  %773 = vmatprep.mubr.bf16.mxu0 %v118
  %774 = vmatmul.mubr.bf16.gmra.mrb[0].mxu0 %v117
  %v775 = vpop.f32.mrb[0].mxu0
  %v776 = vadd.f32 %v735, %v775
  %v777 = vpop.f32.mrb[0].mxu0
  %v778 = vpop.f32.mrb[0].mxu0
  %v779 = vadd.f32 %v738, %v778
  %v780 = vpop.f32.mrb[0].mxu0
  %781 = vdwg.mxu0
  %782 = vmatprep.subr.bf16.mxu0 0
  %783 = vmatpush1.bf16.msra.mxu0 %v588
  %784 = vmatprep.subr.bf16.mxu0 0
  %785 = vmatpush1.bf16.msra.mxu0 %v589
  %786 = vmatprep.subr.bf16.mxu0 0
  %787 = vmatpush1.bf16.msra.mxu0 %v590
  %788 = vmatprep.subr.bf16.mxu0 0
  %789 = vmatpush1.bf16.msra.mxu0 %v591
  %790 = vmatprep.subr.bf16.mxu0 0
  %791 = vmatpush1.bf16.msra.mxu0 %v592
  %792 = vmatprep.subr.bf16.mxu0 0
  %793 = vmatpush1.bf16.msra.mxu0 %v593
  %794 = vmatprep.subr.bf16.mxu0 0
  %795 = vmatpush1.bf16.msra.mxu0 %v594
  %796 = vmatprep.subr.bf16.mxu0 0
  %797 = vmatpush1.bf16.msra.mxu0 %v595
  %798 = vmatprep.subr.bf16.mxu0 0
  %799 = vmatpush1.bf16.msra.mxu0 %v596
  %800 = vmatprep.subr.bf16.mxu0 0
  %801 = vmatpush1.bf16.msra.mxu0 %v597
  %802 = vmatprep.subr.bf16.mxu0 0
  %803 = vmatpush1.bf16.msra.mxu0 %v598
  %804 = vmatprep.subr.bf16.mxu0 0
  %805 = vmatpush1.bf16.msra.mxu0 %v599
  %806 = vmatprep.subr.bf16.mxu0 0
  %807 = vmatpush1.bf16.msra.mxu0 %v600
  %808 = vmatprep.subr.bf16.mxu0 0
  %809 = vmatpush1.bf16.msra.mxu0 %v601
  %810 = vmatprep.subr.bf16.mxu0 0
  %811 = vmatpush1.bf16.msra.mxu0 %v602
  %812 = vmatprep.subr.bf16.mxu0 0
  %813 = vmatpush1.bf16.msra.mxu0 %v603
  %814 = vmatprep.mubr.bf16.mxu0 %v120
  %815 = vmatmul.mubr.bf16.gmra.mrb[0].mxu0 %v119
  %v816 = vpop.f32.mrb[0].mxu0
  %v817 = vadd.f32 %v776, %v816
  %v818 = vpop.f32.mrb[0].mxu0
  %v819 = vpop.f32.mrb[0].mxu0
  %v820 = vadd.f32 %v779, %v819
  %v821 = vpop.f32.mrb[0].mxu0
  %822 = vdwg.mxu0
  %823 = vmatprep.subr.bf16.mxu0 0
  %824 = vmatpush1.bf16.msra.mxu0 %v604
  %825 = vmatprep.subr.bf16.mxu0 0
  %826 = vmatpush1.bf16.msra.mxu0 %v605
  %827 = vmatprep.subr.bf16.mxu0 0
  %828 = vmatpush1.bf16.msra.mxu0 %v606
  %829 = vmatprep.subr.bf16.mxu0 0
  %830 = vmatpush1.bf16.msra.mxu0 %v607
  %831 = vmatprep.subr.bf16.mxu0 0
  %832 = vmatpush1.bf16.msra.mxu0 %v608
  %833 = vmatprep.subr.bf16.mxu0 0
  %834 = vmatpush1.bf16.msra.mxu0 %v609
  %835 = vmatprep.subr.bf16.mxu0 0
  %836 = vmatpush1.bf16.msra.mxu0 %v610
  %837 = vmatprep.subr.bf16.mxu0 0
  %838 = vmatpush1.bf16.msra.mxu0 %v611
  %839 = vmatprep.subr.bf16.mxu0 0
  %840 = vmatpush1.bf16.msra.mxu0 %v612
  %841 = vmatprep.subr.bf16.mxu0 0
  %842 = vmatpush1.bf16.msra.mxu0 %v613
  %843 = vmatprep.subr.bf16.mxu0 0
  %844 = vmatpush1.bf16.msra.mxu0 %v614
  %845 = vmatprep.subr.bf16.mxu0 0
  %846 = vmatpush1.bf16.msra.mxu0 %v615
  %847 = vmatprep.subr.bf16.mxu0 0
  %848 = vmatpush1.bf16.msra.mxu0 %v616
  %849 = vmatprep.subr.bf16.mxu0 0
  %850 = vmatpush1.bf16.msra.mxu0 %v617
  %851 = vmatprep.subr.bf16.mxu0 0
  %852 = vmatpush1.bf16.msra.mxu0 %v618
  %853 = vmatprep.subr.bf16.mxu0 0
  %854 = vmatpush1.bf16.msra.mxu0 %v619
  %855 = vmatprep.mubr.bf16.mxu0 %v122
  %856 = vmatmul.mubr.bf16.gmra.mrb[0].mxu0 %v121
  %v857 = vpop.f32.mrb[0].mxu0
  %v858 = vadd.f32 %v817, %v857
  %v859 = vpop.f32.mrb[0].mxu0
  %v860 = vpop.f32.mrb[0].mxu0
  %v861 = vadd.f32 %v820, %v860
  %v862 = vpop.f32.mrb[0].mxu0
  %863 = vdwg.mxu0
  %864 = vmatprep.subr.bf16.mxu0 0
  %865 = vmatpush1.bf16.msra.mxu0 %v620
  %866 = vmatprep.subr.bf16.mxu0 0
  %867 = vmatpush1.bf16.msra.mxu0 %v621
  %868 = vmatprep.subr.bf16.mxu0 0
  %869 = vmatpush1.bf16.msra.mxu0 %v622
  %870 = vmatprep.subr.bf16.mxu0 0
  %871 = vmatpush1.bf16.msra.mxu0 %v623
  %872 = vmatprep.subr.bf16.mxu0 0
  %873 = vmatpush1.bf16.msra.mxu0 %v624
  %874 = vmatprep.subr.bf16.mxu0 0
  %875 = vmatpush1.bf16.msra.mxu0 %v625
  %876 = vmatprep.subr.bf16.mxu0 0
  %877 = vmatpush1.bf16.msra.mxu0 %v626
  %878 = vmatprep.subr.bf16.mxu0 0
  %879 = vmatpush1.bf16.msra.mxu0 %v627
  %880 = vmatprep.subr.bf16.mxu0 0
  %881 = vmatpush1.bf16.msra.mxu0 0
  %882 = vmatprep.subr.bf16.mxu0 0
  %883 = vmatpush1.bf16.msra.mxu0 0
  %884 = vmatprep.subr.bf16.mxu0 0
  %885 = vmatpush1.bf16.msra.mxu0 0
  %886 = vmatprep.subr.bf16.mxu0 0
  %887 = vmatpush1.bf16.msra.mxu0 0
  %888 = vmatprep.subr.bf16.mxu0 0
  %889 = vmatpush1.bf16.msra.mxu0 0
  %890 = vmatprep.subr.bf16.mxu0 0
  %891 = vmatpush1.bf16.msra.mxu0 0
  %892 = vmatprep.subr.bf16.mxu0 0
  %893 = vmatpush1.bf16.msra.mxu0 0
  %894 = vmatprep.subr.bf16.mxu0 0
  %895 = vmatpush1.bf16.msra.mxu0 0
  %896 = vmatprep.mubr.bf16.mxu0 0
  %897 = vmatmul.mubr.bf16.gmra.mrb[0].mxu0 %v123
  %v898 = vpop.f32.mrb[0].mxu0
  %v899 = vadd.f32 %v858, %v898
  %v900 = vpop.f32.mrb[0].mxu0
  %v901 = vpop.f32.mrb[0].mxu0
  %v902 = vadd.f32 %v861, %v901
  %v903 = vpop.f32.mrb[0].mxu0
  %904 = vdwg.mxu0
  %v905 = vsub.f32 %v899, %v36
  %v906 = vsub.f32 %v902, %v37
  %v909 = vrot.slane %v905, 4
  %v910 = vrot.slane %v906, 4
  %v911 = vsel %vm49, %v909, %v910
  %v915 = vsel %vm49, 0.0, %v909
  %v916 = vsel %vm49, %v910, 0.0
  %v919 = vrot.slane %v915, 1
  %v920 = vrot.slane %v911, 1
  %v921 = vsel %vm60, %v919, %v920
  %v922 = vrot.slane %v916, 1
  %v923 = vsel %vm60, %v920, %v922
  %v926 = vrot.slane %v915, 2
  %v927 = vrot.slane %v911, 2
  %v928 = vsel %vm68, %v926, %v927
  %v929 = vrot.slane %v916, 2
  %v930 = vsel %vm68, %v927, %v929
  %v933 = vrot.slane %v915, 3
  %v934 = vrot.slane %v911, 3
  %v935 = vsel %vm76, %v933, %v934
  %v936 = vrot.slane %v916, 3
  %v937 = vsel %vm76, %v934, %v936
  %v940 = vrot.slane %v915, 4
  %v941 = vrot.slane %v911, 4
  %v942 = vsel %vm49, %v940, %v941
  %v943 = vrot.slane %v916, 4
  %v944 = vsel %vm49, %v941, %v943
  %v947 = vrot.slane %v915, 5
  %v948 = vrot.slane %v911, 5
  %v949 = vsel %vm91, %v947, %v948
  %v950 = vrot.slane %v916, 5
  %v951 = vsel %vm91, %v948, %v950
  %v954 = vrot.slane %v915, 6
  %v955 = vrot.slane %v911, 6
  %v956 = vsel %vm99, %v954, %v955
  %v957 = vrot.slane %v916, 6
  %v958 = vsel %vm99, %v955, %v957
  %v961 = vrot.slane %v915, 7
  %v962 = vrot.slane %v911, 7
  %v963 = vsel %vm107, %v961, %v962
  %v964 = vrot.slane %v916, 7
  %v965 = vsel %vm107, %v962, %v964
  %v968 = vpack.c.bf16 %v911, %v915
  %v969 = vpack.c.bf16 %v923, %v921
  %v970 = vpack.c.bf16 %v930, %v928
  %v971 = vpack.c.bf16 %v937, %v935
  %v972 = vpack.c.bf16 %v944, %v942
  %v973 = vpack.c.bf16 %v951, %v949
  %v974 = vpack.c.bf16 %v958, %v956
  %v975 = vpack.c.bf16 %v965, %v963
  %v976 = vpack.c.bf16 %v916, %v911
  %v977 = vld [vmem:[%s6] sm:$0xf]
  %v978 = vld [vmem:[%s6 + $0x4] sm:$0xf]
  %v979 = vld [vmem:[%s6 + $0x8] sm:$0xf]
  %v980 = vld [vmem:[%s6 + $0xc] sm:$0xf]
  %v981 = vld [vmem:[%s6 + $0x10] sm:$0xf]
  %v982 = vld [vmem:[%s6 + $0x14] sm:$0xf]
  %v983 = vld [vmem:[%s6 + $0x18] sm:$0xf]
  %v984 = vld [vmem:[%s6 + $0x1c] sm:$0xf]
  %v985 = vld [vmem:[%s6 + $0x20] sm:$0xf]
  %v986 = vld [vmem:[%s6 + $0x24] sm:$0xf]
  %v987 = vld [vmem:[%s6 + $0x28] sm:$0xf]
  %v988 = vld [vmem:[%s6 + $0x2c] sm:$0xf]
  %v989 = vld [vmem:[%s6 + $0x30] sm:$0xf]
  %v990 = vld [vmem:[%s6 + $0x34] sm:$0xf]
  %v991 = vld [vmem:[%s6 + $0x38] sm:$0xf]
  %v992 = vld [vmem:[%s6 + $0x3c] sm:$0xf]
  %v993 = vld [vmem:[%s6 + $0x40] sm:$0xf]
  %v994 = vld [vmem:[%s6 + $0x44] sm:$0xf]
  %v995 = vld [vmem:[%s6 + $0x48] sm:$0xf]
  %v996 = vld [vmem:[%s6 + $0x4c] sm:$0xf]
  %v997 = vld [vmem:[%s6 + $0x50] sm:$0xf]
  %v998 = vld [vmem:[%s6 + $0x54] sm:$0xf]
  %v999 = vld [vmem:[%s6 + $0x58] sm:$0xf]
  %v1000 = vld [vmem:[%s6 + $0x5c] sm:$0xf]
  %v1001 = vld [vmem:[%s6 + $0x60] sm:$0xf]
  %v1002 = vld [vmem:[%s6 + $0x64] sm:$0xf]
  %v1003 = vld [vmem:[%s6 + $0x68] sm:$0xf]
  %v1004 = vld [vmem:[%s6 + $0x6c] sm:$0xf]
  %v1005 = vld [vmem:[%s6 + $0x70] sm:$0xf]
  %v1006 = vld [vmem:[%s6 + $0x74] sm:$0xf]
  %v1007 = vld [vmem:[%s6 + $0x78] sm:$0xf]
  %v1008 = vld [vmem:[%s6 + $0x7c] sm:$0xf]
  %v1009 = vld [vmem:[%s6 + $0x80] sm:$0xf]
  %v1010 = vld [vmem:[%s6 + $0x84] sm:$0xf]
  %v1011 = vld [vmem:[%s6 + $0x88] sm:$0xf]
  %v1012 = vld [vmem:[%s6 + $0x8c] sm:$0xf]
  %v1013 = vld [vmem:[%s6 + $0x90] sm:$0xf]
  %v1014 = vld [vmem:[%s6 + $0x94] sm:$0xf]
  %v1015 = vld [vmem:[%s6 + $0x98] sm:$0xf]
  %v1016 = vld [vmem:[%s6 + $0x9c] sm:$0xf]
  %v1017 = vld [vmem:[%s6 + $0xa0] sm:$0xf]
  %v1018 = vld [vmem:[%s6 + $0xa4] sm:$0xf]
  %v1019 = vld [vmem:[%s6 + $0xa8] sm:$0xf]
  %v1020 = vld [vmem:[%s6 + $0xac] sm:$0xf]
  %v1021 = vld [vmem:[%s6 + $0xb0] sm:$0xf]
  %v1022 = vld [vmem:[%s6 + $0xb4] sm:$0xf]
  %v1023 = vld [vmem:[%s6 + $0xb8] sm:$0xf]
  %v1024 = vld [vmem:[%s6 + $0xbc] sm:$0xf]
  %v1025 = vld [vmem:[%s6 + $0xc0] sm:$0xf]
  %v1026 = vld [vmem:[%s6 + $0xc4] sm:$0xf]
  %v1027 = vld [vmem:[%s6 + $0xc8] sm:$0xf]
  %v1028 = vld [vmem:[%s6 + $0xcc] sm:$0xf]
  %v1029 = vld [vmem:[%s6 + $0xd0] sm:$0xf]
  %v1030 = vld [vmem:[%s6 + $0xd4] sm:$0xf]
  %v1031 = vld [vmem:[%s6 + $0xd8] sm:$0xf]
  %v1032 = vld [vmem:[%s6 + $0xdc] sm:$0xf]
  %v1033 = vld [vmem:[%s6 + $0xe0] sm:$0xf]
  %v1034 = vld [vmem:[%s6 + $0xe4] sm:$0xf]
  %v1035 = vld [vmem:[%s6 + $0xe8] sm:$0xf]
  %v1036 = vld [vmem:[%s6 + $0xec] sm:$0xf]
  %v1037 = vld [vmem:[%s6 + $0xf0] sm:$0xf]
  %v1038 = vld [vmem:[%s6 + $0xf4] sm:$0xf]
  %v1039 = vld [vmem:[%s6 + $0xf8] sm:$0xf]
  %v1040 = vld [vmem:[%s6 + $0xfc] sm:$0xf]
  %v1041 = vld [vmem:[%s6 + $0x100] sm:$0xf]
  %v1042 = vld [vmem:[%s6 + $0x104] sm:$0xf]
  %v1043 = vld [vmem:[%s6 + $0x108] sm:$0xf]
  %v1044 = vld [vmem:[%s6 + $0x10c] sm:$0xf]
  %v1045 = vld [vmem:[%s6 + $0x110] sm:$0xf]
  %v1046 = vld [vmem:[%s6 + $0x114] sm:$0xf]
  %v1047 = vld [vmem:[%s6 + $0x118] sm:$0xf]
  %v1048 = vld [vmem:[%s6 + $0x11c] sm:$0xf]
  %v1049 = vld [vmem:[%s6 + $0x120] sm:$0xf]
  %v1050 = vld [vmem:[%s6 + $0x124] sm:$0xf]
  %v1051 = vld [vmem:[%s6 + $0x128] sm:$0xf]
  %v1052 = vld [vmem:[%s6 + $0x12c] sm:$0xf]
  %v1053 = vld [vmem:[%s6 + $0x130] sm:$0xf]
  %v1054 = vld [vmem:[%s6 + $0x134] sm:$0xf]
  %v1055 = vld [vmem:[%s6 + $0x138] sm:$0xf]
  %v1056 = vld [vmem:[%s6 + $0x13c] sm:$0xf]
  %v1057 = vld [vmem:[%s6 + $0x140] sm:$0xf]
  %v1058 = vld [vmem:[%s6 + $0x144] sm:$0xf]
  %v1059 = vld [vmem:[%s6 + $0x148] sm:$0xf]
  %v1060 = vld [vmem:[%s6 + $0x14c] sm:$0xf]
  %v1061 = vld [vmem:[%s6 + $0x150] sm:$0xf]
  %v1062 = vld [vmem:[%s6 + $0x154] sm:$0xf]
  %v1063 = vld [vmem:[%s6 + $0x158] sm:$0xf]
  %v1064 = vld [vmem:[%s6 + $0x15c] sm:$0xf]
  %v1065 = vld [vmem:[%s6 + $0x160] sm:$0xf]
  %v1066 = vld [vmem:[%s6 + $0x164] sm:$0xf]
  %v1067 = vld [vmem:[%s6 + $0x168] sm:$0xf]
  %v1068 = vld [vmem:[%s6 + $0x16c] sm:$0xf]
  %v1069 = vld [vmem:[%s6 + $0x170] sm:$0xf]
  %v1070 = vld [vmem:[%s6 + $0x174] sm:$0xf]
  %v1071 = vld [vmem:[%s6 + $0x178] sm:$0xf]
  %v1072 = vld [vmem:[%s6 + $0x17c] sm:$0xf]
  %v1073 = vld [vmem:[%s6 + $0x180] sm:$0xf]
  %v1074 = vld [vmem:[%s6 + $0x184] sm:$0xf]
  %v1075 = vld [vmem:[%s6 + $0x188] sm:$0xf]
  %v1076 = vld [vmem:[%s6 + $0x18c] sm:$0xf]
  %v1077 = vld [vmem:[%s6 + $0x190] sm:$0xf]
  %v1078 = vld [vmem:[%s6 + $0x194] sm:$0xf]
  %v1079 = vld [vmem:[%s6 + $0x198] sm:$0xf]
  %v1080 = vld [vmem:[%s6 + $0x19c] sm:$0xf]
  %v1081 = vld [vmem:[%s6 + $0x1a0] sm:$0xf]
  %v1082 = vld [vmem:[%s6 + $0x1a4] sm:$0xf]
  %v1083 = vld [vmem:[%s6 + $0x1a8] sm:$0xf]
  %v1084 = vld [vmem:[%s6 + $0x1ac] sm:$0xf]
  %v1085 = vld [vmem:[%s6 + $0x1b0] sm:$0xf]
  %v1086 = vld [vmem:[%s6 + $0x1b4] sm:$0xf]
  %v1087 = vld [vmem:[%s6 + $0x1b8] sm:$0xf]
  %v1088 = vld [vmem:[%s6 + $0x1bc] sm:$0xf]
  %v1089 = vld [vmem:[%s6 + $0x1c0] sm:$0xf]
  %v1090 = vld [vmem:[%s6 + $0x1c4] sm:$0xf]
  %v1091 = vld [vmem:[%s6 + $0x1c8] sm:$0xf]
  %v1092 = vld [vmem:[%s6 + $0x1cc] sm:$0xf]
  %v1093 = vld [vmem:[%s6 + $0x1d0] sm:$0xf]
  %v1094 = vld [vmem:[%s6 + $0x1d4] sm:$0xf]
  %v1095 = vld [vmem:[%s6 + $0x1d8] sm:$0xf]
  %v1096 = vld [vmem:[%s6 + $0x1dc] sm:$0xf]
  %v1097 = vld [vmem:[%s6 + $0x1e0] sm:$0xf]
  %v1098 = vld [vmem:[%s6 + $0x1e4] sm:$0xf]
  %v1099 = vld [vmem:[%s6 + $0x1e8] sm:$0xf]
  %v1100 = vld [vmem:[%s6 + $0x1ec] sm:$0xf]
  %v1101 = vld [vmem:[%s6 + $0x1f0] sm:$0xf]
  %v1102 = vld [vmem:[%s6 + $0x1f4] sm:$0xf]
  %v1103 = vld [vmem:[%s6 + $0x1f8] sm:$0xf]
  %v1104 = vld [vmem:[%s6 + $0x1fc] sm:$0xf]
  %v1105 = vld [vmem:[%s6 + $0x200] sm:$0xf]
  %v1106 = vld [vmem:[%s6 + $0x204] sm:$0xf]
  %v1107 = vld [vmem:[%s6 + $0x208] sm:$0xf]
  %v1108 = vld [vmem:[%s6 + $0x20c] sm:$0xf]
  %v1109 = vld [vmem:[%s6 + $0x210] sm:$0xf]
  %v1110 = vld [vmem:[%s6 + $0x214] sm:$0xf]
  %v1111 = vld [vmem:[%s6 + $0x218] sm:$0xf]
  %v1112 = vld [vmem:[%s6 + $0x21c] sm:$0xf]
  %v1113 = vld [vmem:[%s6 + $0x220] sm:$0xf]
  %v1114 = vld [vmem:[%s6 + $0x224] sm:$0xf]
  %v1115 = vld [vmem:[%s6 + $0x228] sm:$0xf]
  %v1116 = vld [vmem:[%s6 + $0x22c] sm:$0xf]
  %v1117 = vld [vmem:[%s6 + $0x230] sm:$0xf]
  %v1118 = vld [vmem:[%s6 + $0x234] sm:$0xf]
  %v1119 = vld [vmem:[%s6 + $0x238] sm:$0xf]
  %v1120 = vld [vmem:[%s6 + $0x23c] sm:$0xf]
  %v1265 = vunpack.c.l.b16 %v977
  %v1266 = vunpack.c.l.b16 %v978
  %v1267 = vunpack.c.l.b16 %v979
  %v1268 = vunpack.c.l.b16 %v980
  %v1269 = vunpack.c.l.b16 %v981
  %v1270 = vunpack.c.l.b16 %v982
  %v1271 = vunpack.c.l.b16 %v983
  %v1272 = vunpack.c.l.b16 %v984
  %v1273 = vunpack.c.l.b16 %v985
  %v1274 = vunpack.c.l.b16 %v986
  %v1275 = vunpack.c.l.b16 %v987
  %v1276 = vunpack.c.l.b16 %v988
  %v1277 = vunpack.c.l.b16 %v989
  %v1278 = vunpack.c.l.b16 %v990
  %v1279 = vunpack.c.l.b16 %v991
  %v1280 = vunpack.c.l.b16 %v992
  %v1281 = vunpack.c.l.b16 %v993
  %v1282 = vunpack.c.l.b16 %v994
  %v1283 = vunpack.c.l.b16 %v995
  %v1284 = vunpack.c.l.b16 %v996
  %v1285 = vunpack.c.l.b16 %v997
  %v1286 = vunpack.c.l.b16 %v998
  %v1287 = vunpack.c.l.b16 %v999
  %v1288 = vunpack.c.l.b16 %v1000
  %v1289 = vunpack.c.l.b16 %v1001
  %v1290 = vunpack.c.l.b16 %v1002
  %v1291 = vunpack.c.l.b16 %v1003
  %v1292 = vunpack.c.l.b16 %v1004
  %v1293 = vunpack.c.l.b16 %v1005
  %v1294 = vunpack.c.l.b16 %v1006
  %v1295 = vunpack.c.l.b16 %v1007
  %v1296 = vunpack.c.l.b16 %v1008
  %v1297 = vunpack.c.l.b16 %v1009
  %v1298 = vunpack.c.l.b16 %v1010
  %v1299 = vunpack.c.l.b16 %v1011
  %v1300 = vunpack.c.l.b16 %v1012
  %v1301 = vunpack.c.l.b16 %v1013
  %v1302 = vunpack.c.l.b16 %v1014
  %v1303 = vunpack.c.l.b16 %v1015
  %v1304 = vunpack.c.l.b16 %v1016
  %v1305 = vunpack.c.l.b16 %v1017
  %v1306 = vunpack.c.l.b16 %v1018
  %v1307 = vunpack.c.l.b16 %v1019
  %v1308 = vunpack.c.l.b16 %v1020
  %v1309 = vunpack.c.l.b16 %v1021
  %v1310 = vunpack.c.l.b16 %v1022
  %v1311 = vunpack.c.l.b16 %v1023
  %v1312 = vunpack.c.l.b16 %v1024
  %v1313 = vunpack.c.l.b16 %v1025
  %v1314 = vunpack.c.l.b16 %v1026
  %v1315 = vunpack.c.l.b16 %v1027
  %v1316 = vunpack.c.l.b16 %v1028
  %v1317 = vunpack.c.l.b16 %v1029
  %v1318 = vunpack.c.l.b16 %v1030
  %v1319 = vunpack.c.l.b16 %v1031
  %v1320 = vunpack.c.l.b16 %v1032
  %v1321 = vunpack.c.l.b16 %v1033
  %v1322 = vunpack.c.l.b16 %v1034
  %v1323 = vunpack.c.l.b16 %v1035
  %v1324 = vunpack.c.l.b16 %v1036
  %v1325 = vunpack.c.l.b16 %v1037
  %v1326 = vunpack.c.l.b16 %v1038
  %v1327 = vunpack.c.l.b16 %v1039
  %v1328 = vunpack.c.l.b16 %v1040
  %v1329 = vunpack.c.l.b16 %v1041
  %v1330 = vunpack.c.l.b16 %v1042
  %v1331 = vunpack.c.l.b16 %v1043
  %v1332 = vunpack.c.l.b16 %v1044
  %v1333 = vunpack.c.l.b16 %v1045
  %v1334 = vunpack.c.l.b16 %v1046
  %v1335 = vunpack.c.l.b16 %v1047
  %v1336 = vunpack.c.l.b16 %v1048
  %v1337 = vunpack.c.l.b16 %v1049
  %v1338 = vunpack.c.l.b16 %v1050
  %v1339 = vunpack.c.l.b16 %v1051
  %v1340 = vunpack.c.l.b16 %v1052
  %v1341 = vunpack.c.l.b16 %v1053
  %v1342 = vunpack.c.l.b16 %v1054
  %v1343 = vunpack.c.l.b16 %v1055
  %v1344 = vunpack.c.l.b16 %v1056
  %v1345 = vunpack.c.l.b16 %v1057
  %v1346 = vunpack.c.l.b16 %v1058
  %v1347 = vunpack.c.l.b16 %v1059
  %v1348 = vunpack.c.l.b16 %v1060
  %v1349 = vunpack.c.l.b16 %v1061
  %v1350 = vunpack.c.l.b16 %v1062
  %v1351 = vunpack.c.l.b16 %v1063
  %v1352 = vunpack.c.l.b16 %v1064
  %v1353 = vunpack.c.l.b16 %v1065
  %v1354 = vunpack.c.l.b16 %v1066
  %v1355 = vunpack.c.l.b16 %v1067
  %v1356 = vunpack.c.l.b16 %v1068
  %v1357 = vunpack.c.l.b16 %v1069
  %v1358 = vunpack.c.l.b16 %v1070
  %v1359 = vunpack.c.l.b16 %v1071
  %v1360 = vunpack.c.l.b16 %v1072
  %v1361 = vunpack.c.l.b16 %v1073
  %v1362 = vunpack.c.l.b16 %v1074
  %v1363 = vunpack.c.l.b16 %v1075
  %v1364 = vunpack.c.l.b16 %v1076
  %v1365 = vunpack.c.l.b16 %v1077
  %v1366 = vunpack.c.l.b16 %v1078
  %v1367 = vunpack.c.l.b16 %v1079
  %v1368 = vunpack.c.l.b16 %v1080
  %v1369 = vunpack.c.l.b16 %v1081
  %v1370 = vunpack.c.l.b16 %v1082
  %v1371 = vunpack.c.l.b16 %v1083
  %v1372 = vunpack.c.l.b16 %v1084
  %v1373 = vunpack.c.l.b16 %v1085
  %v1374 = vunpack.c.l.b16 %v1086
  %v1375 = vunpack.c.l.b16 %v1087
  %v1376 = vunpack.c.l.b16 %v1088
  %v1377 = vunpack.c.l.b16 %v1089
  %v1378 = vunpack.c.l.b16 %v1090
  %v1379 = vunpack.c.l.b16 %v1091
  %v1380 = vunpack.c.l.b16 %v1092
  %v1381 = vunpack.c.l.b16 %v1093
  %v1382 = vunpack.c.l.b16 %v1094
  %v1383 = vunpack.c.l.b16 %v1095
  %v1384 = vunpack.c.l.b16 %v1096
  %v1385 = vunpack.c.l.b16 %v1097
  %v1386 = vunpack.c.l.b16 %v1098
  %v1387 = vunpack.c.l.b16 %v1099
  %v1388 = vunpack.c.l.b16 %v1100
  %v1389 = vunpack.c.l.b16 %v1101
  %v1390 = vunpack.c.l.b16 %v1102
  %v1391 = vunpack.c.l.b16 %v1103
  %v1392 = vunpack.c.l.b16 %v1104
  %v1393 = vunpack.c.l.b16 %v1105
  %v1394 = vunpack.c.l.b16 %v1106
  %v1395 = vunpack.c.l.b16 %v1107
  %v1396 = vunpack.c.l.b16 %v1108
  %v1397 = vunpack.c.l.b16 %v1109
  %v1398 = vunpack.c.l.b16 %v1110
  %v1399 = vunpack.c.l.b16 %v1111
  %v1400 = vunpack.c.l.b16 %v1112
  %v1401 = vunpack.c.l.b16 %v1113
  %v1402 = vunpack.c.l.b16 %v1114
  %v1403 = vunpack.c.l.b16 %v1115
  %v1404 = vunpack.c.l.b16 %v1116
  %v1405 = vunpack.c.l.b16 %v1117
  %v1406 = vunpack.c.l.b16 %v1118
  %v1407 = vunpack.c.l.b16 %v1119
  %v1408 = vunpack.c.l.b16 %v1120
  %v1409 = vpack.c.b16 %v1266, %v1265
  %v1410 = vpack.c.b16 %v1268, %v1267
  %v1411 = vpack.c.b16 %v1270, %v1269
  %v1412 = vpack.c.b16 %v1272, %v1271
  %v1413 = vpack.c.b16 %v1274, %v1273
  %v1414 = vpack.c.b16 %v1276, %v1275
  %v1415 = vpack.c.b16 %v1278, %v1277
  %v1416 = vpack.c.b16 %v1280, %v1279
  %v1417 = vpack.c.b16 %v1282, %v1281
  %v1418 = vpack.c.b16 %v1284, %v1283
  %v1419 = vpack.c.b16 %v1286, %v1285
  %v1420 = vpack.c.b16 %v1288, %v1287
  %v1421 = vpack.c.b16 %v1290, %v1289
  %v1422 = vpack.c.b16 %v1292, %v1291
  %v1423 = vpack.c.b16 %v1294, %v1293
  %v1424 = vpack.c.b16 %v1296, %v1295
  %v1425 = vpack.c.b16 %v1298, %v1297
  %v1426 = vpack.c.b16 %v1300, %v1299
  %v1427 = vpack.c.b16 %v1302, %v1301
  %v1428 = vpack.c.b16 %v1304, %v1303
  %v1429 = vpack.c.b16 %v1306, %v1305
  %v1430 = vpack.c.b16 %v1308, %v1307
  %v1431 = vpack.c.b16 %v1310, %v1309
  %v1432 = vpack.c.b16 %v1312, %v1311
  %v1433 = vpack.c.b16 %v1314, %v1313
  %v1434 = vpack.c.b16 %v1316, %v1315
  %v1435 = vpack.c.b16 %v1318, %v1317
  %v1436 = vpack.c.b16 %v1320, %v1319
  %v1437 = vpack.c.b16 %v1322, %v1321
  %v1438 = vpack.c.b16 %v1324, %v1323
  %v1439 = vpack.c.b16 %v1326, %v1325
  %v1440 = vpack.c.b16 %v1328, %v1327
  %v1441 = vpack.c.b16 %v1330, %v1329
  %v1442 = vpack.c.b16 %v1332, %v1331
  %v1443 = vpack.c.b16 %v1334, %v1333
  %v1444 = vpack.c.b16 %v1336, %v1335
  %v1445 = vpack.c.b16 %v1338, %v1337
  %v1446 = vpack.c.b16 %v1340, %v1339
  %v1447 = vpack.c.b16 %v1342, %v1341
  %v1448 = vpack.c.b16 %v1344, %v1343
  %v1449 = vpack.c.b16 %v1346, %v1345
  %v1450 = vpack.c.b16 %v1348, %v1347
  %v1451 = vpack.c.b16 %v1350, %v1349
  %v1452 = vpack.c.b16 %v1352, %v1351
  %v1453 = vpack.c.b16 %v1354, %v1353
  %v1454 = vpack.c.b16 %v1356, %v1355
  %v1455 = vpack.c.b16 %v1358, %v1357
  %v1456 = vpack.c.b16 %v1360, %v1359
  %v1457 = vpack.c.b16 %v1362, %v1361
  %v1458 = vpack.c.b16 %v1364, %v1363
  %v1459 = vpack.c.b16 %v1366, %v1365
  %v1460 = vpack.c.b16 %v1368, %v1367
  %v1461 = vpack.c.b16 %v1370, %v1369
  %v1462 = vpack.c.b16 %v1372, %v1371
  %v1463 = vpack.c.b16 %v1374, %v1373
  %v1464 = vpack.c.b16 %v1376, %v1375
  %v1465 = vpack.c.b16 %v1378, %v1377
  %v1466 = vpack.c.b16 %v1380, %v1379
  %v1467 = vpack.c.b16 %v1382, %v1381
  %v1468 = vpack.c.b16 %v1384, %v1383
  %v1469 = vpack.c.b16 %v1386, %v1385
  %v1470 = vpack.c.b16 %v1388, %v1387
  %v1471 = vpack.c.b16 %v1390, %v1389
  %v1472 = vpack.c.b16 %v1392, %v1391
  %v1473 = vpack.c.b16 %v1394, %v1393
  %v1474 = vpack.c.b16 %v1396, %v1395
  %v1475 = vpack.c.b16 %v1398, %v1397
  %v1476 = vpack.c.b16 %v1400, %v1399
  %v1477 = vpack.c.b16 %v1402, %v1401
  %v1478 = vpack.c.b16 %v1404, %v1403
  %v1479 = vpack.c.b16 %v1406, %v1405
  %v1480 = vpack.c.b16 %v1408, %v1407
  %1553 = vmatprep.subr.bf16.mxu0 0
  %1554 = vmatpush1.bf16.msra.mxu0 %v1409
  %1555 = vmatprep.subr.bf16.mxu0 0
  %1556 = vmatpush1.bf16.msra.mxu0 %v1410
  %1557 = vmatprep.subr.bf16.mxu0 0
  %1558 = vmatpush1.bf16.msra.mxu0 %v1411
  %1559 = vmatprep.subr.bf16.mxu0 0
  %1560 = vmatpush1.bf16.msra.mxu0 %v1412
  %1561 = vmatprep.subr.bf16.mxu0 0
  %1562 = vmatpush1.bf16.msra.mxu0 %v1413
  %1563 = vmatprep.subr.bf16.mxu0 0
  %1564 = vmatpush1.bf16.msra.mxu0 %v1414
  %1565 = vmatprep.subr.bf16.mxu0 0
  %1566 = vmatpush1.bf16.msra.mxu0 %v1415
  %1567 = vmatprep.subr.bf16.mxu0 0
  %1568 = vmatpush1.bf16.msra.mxu0 %v1416
  %1569 = vmatprep.subr.bf16.mxu0 0
  %1570 = vmatpush1.bf16.msra.mxu0 %v1417
  %1571 = vmatprep.subr.bf16.mxu0 0
  %1572 = vmatpush1.bf16.msra.mxu0 %v1418
  %1573 = vmatprep.subr.bf16.mxu0 0
  %1574 = vmatpush1.bf16.msra.mxu0 %v1419
  %1575 = vmatprep.subr.bf16.mxu0 0
  %1576 = vmatpush1.bf16.msra.mxu0 %v1420
  %1577 = vmatprep.subr.bf16.mxu0 0
  %1578 = vmatpush1.bf16.msra.mxu0 %v1421
  %1579 = vmatprep.subr.bf16.mxu0 0
  %1580 = vmatpush1.bf16.msra.mxu0 %v1422
  %1581 = vmatprep.subr.bf16.mxu0 0
  %1582 = vmatpush1.bf16.msra.mxu0 %v1423
  %1583 = vmatprep.subr.bf16.mxu0 0
  %1584 = vmatpush1.bf16.msra.mxu0 %v1424
  %1585 = vmatprep.mubr.bf16.mxu0 %v969
  %1586 = vmatmul.mubr.bf16.gmra.mrb[0].mxu0 %v968
  %v1587 = vpop.f32.mrb[0].mxu0
  %v1588 = vadd.f32 0.0, %v1587
  %v1589 = vpop.f32.mrb[0].mxu0
  %v1590 = vpop.f32.mrb[0].mxu0
  %v1591 = vadd.f32 0.0, %v1590
  %v1592 = vpop.f32.mrb[0].mxu0
  %1593 = vdwg.mxu0
  %1594 = vmatprep.subr.bf16.mxu0 0
  %1595 = vmatpush1.bf16.msra.mxu0 %v1425
  %1596 = vmatprep.subr.bf16.mxu0 0
  %1597 = vmatpush1.bf16.msra.mxu0 %v1426
  %1598 = vmatprep.subr.bf16.mxu0 0
  %1599 = vmatpush1.bf16.msra.mxu0 %v1427
  %1600 = vmatprep.subr.bf16.mxu0 0
  %1601 = vmatpush1.bf16.msra.mxu0 %v1428
  %1602 = vmatprep.subr.bf16.mxu0 0
  %1603 = vmatpush1.bf16.msra.mxu0 %v1429
  %1604 = vmatprep.subr.bf16.mxu0 0
  %1605 = vmatpush1.bf16.msra.mxu0 %v1430
  %1606 = vmatprep.subr.bf16.mxu0 0
  %1607 = vmatpush1.bf16.msra.mxu0 %v1431
  %1608 = vmatprep.subr.bf16.mxu0 0
  %1609 = vmatpush1.bf16.msra.mxu0 %v1432
  %1610 = vmatprep.subr.bf16.mxu0 0
  %1611 = vmatpush1.bf16.msra.mxu0 %v1433
  %1612 = vmatprep.subr.bf16.mxu0 0
  %1613 = vmatpush1.bf16.msra.mxu0 %v1434
  %1614 = vmatprep.subr.bf16.mxu0 0
  %1615 = vmatpush1.bf16.msra.mxu0 %v1435
  %1616 = vmatprep.subr.bf16.mxu0 0
  %1617 = vmatpush1.bf16.msra.mxu0 %v1436
  %1618 = vmatprep.subr.bf16.mxu0 0
  %1619 = vmatpush1.bf16.msra.mxu0 %v1437
  %1620 = vmatprep.subr.bf16.mxu0 0
  %1621 = vmatpush1.bf16.msra.mxu0 %v1438
  %1622 = vmatprep.subr.bf16.mxu0 0
  %1623 = vmatpush1.bf16.msra.mxu0 %v1439
  %1624 = vmatprep.subr.bf16.mxu0 0
  %1625 = vmatpush1.bf16.msra.mxu0 %v1440
  %1626 = vmatprep.mubr.bf16.mxu0 %v971
  %1627 = vmatmul.mubr.bf16.gmra.mrb[0].mxu0 %v970
  %v1628 = vpop.f32.mrb[0].mxu0
  %v1629 = vadd.f32 %v1588, %v1628
  %v1630 = vpop.f32.mrb[0].mxu0
  %v1631 = vpop.f32.mrb[0].mxu0
  %v1632 = vadd.f32 %v1591, %v1631
  %v1633 = vpop.f32.mrb[0].mxu0
  %1634 = vdwg.mxu0
  %1635 = vmatprep.subr.bf16.mxu0 0
  %1636 = vmatpush1.bf16.msra.mxu0 %v1441
  %1637 = vmatprep.subr.bf16.mxu0 0
  %1638 = vmatpush1.bf16.msra.mxu0 %v1442
  %1639 = vmatprep.subr.bf16.mxu0 0
  %1640 = vmatpush1.bf16.msra.mxu0 %v1443
  %1641 = vmatprep.subr.bf16.mxu0 0
  %1642 = vmatpush1.bf16.msra.mxu0 %v1444
  %1643 = vmatprep.subr.bf16.mxu0 0
  %1644 = vmatpush1.bf16.msra.mxu0 %v1445
  %1645 = vmatprep.subr.bf16.mxu0 0
  %1646 = vmatpush1.bf16.msra.mxu0 %v1446
  %1647 = vmatprep.subr.bf16.mxu0 0
  %1648 = vmatpush1.bf16.msra.mxu0 %v1447
  %1649 = vmatprep.subr.bf16.mxu0 0
  %1650 = vmatpush1.bf16.msra.mxu0 %v1448
  %1651 = vmatprep.subr.bf16.mxu0 0
  %1652 = vmatpush1.bf16.msra.mxu0 %v1449
  %1653 = vmatprep.subr.bf16.mxu0 0
  %1654 = vmatpush1.bf16.msra.mxu0 %v1450
  %1655 = vmatprep.subr.bf16.mxu0 0
  %1656 = vmatpush1.bf16.msra.mxu0 %v1451
  %1657 = vmatprep.subr.bf16.mxu0 0
  %1658 = vmatpush1.bf16.msra.mxu0 %v1452
  %1659 = vmatprep.subr.bf16.mxu0 0
  %1660 = vmatpush1.bf16.msra.mxu0 %v1453
  %1661 = vmatprep.subr.bf16.mxu0 0
  %1662 = vmatpush1.bf16.msra.mxu0 %v1454
  %1663 = vmatprep.subr.bf16.mxu0 0
  %1664 = vmatpush1.bf16.msra.mxu0 %v1455
  %1665 = vmatprep.subr.bf16.mxu0 0
  %1666 = vmatpush1.bf16.msra.mxu0 %v1456
  %1667 = vmatprep.mubr.bf16.mxu0 %v973
  %1668 = vmatmul.mubr.bf16.gmra.mrb[0].mxu0 %v972
  %v1669 = vpop.f32.mrb[0].mxu0
  %v1670 = vadd.f32 %v1629, %v1669
  %v1671 = vpop.f32.mrb[0].mxu0
  %v1672 = vpop.f32.mrb[0].mxu0
  %v1673 = vadd.f32 %v1632, %v1672
  %v1674 = vpop.f32.mrb[0].mxu0
  %1675 = vdwg.mxu0
  %1676 = vmatprep.subr.bf16.mxu0 0
  %1677 = vmatpush1.bf16.msra.mxu0 %v1457
  %1678 = vmatprep.subr.bf16.mxu0 0
  %1679 = vmatpush1.bf16.msra.mxu0 %v1458
  %1680 = vmatprep.subr.bf16.mxu0 0
  %1681 = vmatpush1.bf16.msra.mxu0 %v1459
  %1682 = vmatprep.subr.bf16.mxu0 0
  %1683 = vmatpush1.bf16.msra.mxu0 %v1460
  %1684 = vmatprep.subr.bf16.mxu0 0
  %1685 = vmatpush1.bf16.msra.mxu0 %v1461
  %1686 = vmatprep.subr.bf16.mxu0 0
  %1687 = vmatpush1.bf16.msra.mxu0 %v1462
  %1688 = vmatprep.subr.bf16.mxu0 0
  %1689 = vmatpush1.bf16.msra.mxu0 %v1463
  %1690 = vmatprep.subr.bf16.mxu0 0
  %1691 = vmatpush1.bf16.msra.mxu0 %v1464
  %1692 = vmatprep.subr.bf16.mxu0 0
  %1693 = vmatpush1.bf16.msra.mxu0 %v1465
  %1694 = vmatprep.subr.bf16.mxu0 0
  %1695 = vmatpush1.bf16.msra.mxu0 %v1466
  %1696 = vmatprep.subr.bf16.mxu0 0
  %1697 = vmatpush1.bf16.msra.mxu0 %v1467
  %1698 = vmatprep.subr.bf16.mxu0 0
  %1699 = vmatpush1.bf16.msra.mxu0 %v1468
  %1700 = vmatprep.subr.bf16.mxu0 0
  %1701 = vmatpush1.bf16.msra.mxu0 %v1469
  %1702 = vmatprep.subr.bf16.mxu0 0
  %1703 = vmatpush1.bf16.msra.mxu0 %v1470
  %1704 = vmatprep.subr.bf16.mxu0 0
  %1705 = vmatpush1.bf16.msra.mxu0 %v1471
  %1706 = vmatprep.subr.bf16.mxu0 0
  %1707 = vmatpush1.bf16.msra.mxu0 %v1472
  %1708 = vmatprep.mubr.bf16.mxu0 %v975
  %1709 = vmatmul.mubr.bf16.gmra.mrb[0].mxu0 %v974
  %v1710 = vpop.f32.mrb[0].mxu0
  %v1711 = vadd.f32 %v1670, %v1710
  %v1712 = vpop.f32.mrb[0].mxu0
  %v1713 = vpop.f32.mrb[0].mxu0
  %v1714 = vadd.f32 %v1673, %v1713
  %v1715 = vpop.f32.mrb[0].mxu0
  %1716 = vdwg.mxu0
  %1717 = vmatprep.subr.bf16.mxu0 0
  %1718 = vmatpush1.bf16.msra.mxu0 %v1473
  %1719 = vmatprep.subr.bf16.mxu0 0
  %1720 = vmatpush1.bf16.msra.mxu0 %v1474
  %1721 = vmatprep.subr.bf16.mxu0 0
  %1722 = vmatpush1.bf16.msra.mxu0 %v1475
  %1723 = vmatprep.subr.bf16.mxu0 0
  %1724 = vmatpush1.bf16.msra.mxu0 %v1476
  %1725 = vmatprep.subr.bf16.mxu0 0
  %1726 = vmatpush1.bf16.msra.mxu0 %v1477
  %1727 = vmatprep.subr.bf16.mxu0 0
  %1728 = vmatpush1.bf16.msra.mxu0 %v1478
  %1729 = vmatprep.subr.bf16.mxu0 0
  %1730 = vmatpush1.bf16.msra.mxu0 %v1479
  %1731 = vmatprep.subr.bf16.mxu0 0
  %1732 = vmatpush1.bf16.msra.mxu0 %v1480
  %1733 = vmatprep.subr.bf16.mxu0 0
  %1734 = vmatpush1.bf16.msra.mxu0 0
  %1735 = vmatprep.subr.bf16.mxu0 0
  %1736 = vmatpush1.bf16.msra.mxu0 0
  %1737 = vmatprep.subr.bf16.mxu0 0
  %1738 = vmatpush1.bf16.msra.mxu0 0
  %1739 = vmatprep.subr.bf16.mxu0 0
  %1740 = vmatpush1.bf16.msra.mxu0 0
  %1741 = vmatprep.subr.bf16.mxu0 0
  %1742 = vmatpush1.bf16.msra.mxu0 0
  %1743 = vmatprep.subr.bf16.mxu0 0
  %1744 = vmatpush1.bf16.msra.mxu0 0
  %1745 = vmatprep.subr.bf16.mxu0 0
  %1746 = vmatpush1.bf16.msra.mxu0 0
  %1747 = vmatprep.subr.bf16.mxu0 0
  %1748 = vmatpush1.bf16.msra.mxu0 0
  %1749 = vmatprep.mubr.bf16.mxu0 0
  %1750 = vmatmul.mubr.bf16.gmra.mrb[0].mxu0 %v976
  %v1751 = vpop.f32.mrb[0].mxu0
  %v1752 = vadd.f32 %v1711, %v1751
  %v1753 = vpop.f32.mrb[0].mxu0
  %v1754 = vpop.f32.mrb[0].mxu0
  %v1755 = vadd.f32 %v1714, %v1754
  %v1756 = vpop.f32.mrb[0].mxu0
  %1757 = vdwg.mxu0
  %v1758 = vsub.f32 %v1752, %v905
  %v1759 = vsub.f32 %v1755, %v906
  %v1760 = vmul.f32 %v30, %v36
  %v1761 = vmul.f32 %v31, %v37
  %v1762 = vadd.f32 %v1760, %v1758
  %v1763 = vadd.f32 %v1761, %v1759
  %v1764 = vsub.f32 %v45, %v1762
  %v1765 = vsub.f32 %v46, %v1763
  %v1766 = vmul.f32 %v42, %v36
  %v1767 = vmul.f32 %v42, %v37
  %v1768 = vsub.f32 %v1764, %v1766
  %v1769 = vsub.f32 %v1765, %v1767
  %v1770 = vmul.f32 %v1768, %v1768
  %v1771 = vmul.f32 %v1769, %v1769
  %v1772 = vadd.f32 %v1770, %v1771
  %1773 = vadd.xlane.f32.xlu0 %v1772
  %v1774 = vpop.xlane.xlu0 %1773
  %v1775 = vrot.slane %v1774, 4
  %v1776 = vadd.f32 %v1774, %v1775
  %v1777 = vrot.slane %v1776, 2
  %v1778 = vadd.f32 %v1776, %v1777
  %v1779 = vrot.slane %v1778, 1
  %v1780 = vadd.f32 %v1778, %v1779
  %s1781 = vtos %v1780
  loop: start=0, step=1, limit=10
  $region30: #{bddc_2d_forward.1} parent=0 // loop_pre_header
    _
  $region31: #{bddc_2d_forward.1} parent=0 // loop_header
    %s1783 = sphi 0, %s1787
    %p1784 = scmp.ge.s32.totalorder %s1783, 10
    %v1788 = vphi %v1768, %v3598
    %v1789 = vphi %v1769, %v3599
    %v1790 = vphi %v1768, %v3576
    %v1791 = vphi %v1769, %v3577
    %v1792 = vphi %v36, %v3568
    %v1793 = vphi %v37, %v3569
    %s1794 = sphi %s1781, %s3589
  $region32: #{bddc_2d_forward.1} parent=0 // loop_header_branch
    %1786 = sbr.rel (%p1784) target = $region36
  $region33: #{bddc_2d_forward.1} parent=0 // loop_body
    %v1797 = vrot.slane %v1788, 4
    %v1798 = vrot.slane %v1789, 4
    %v1799 = vsel %vm49, %v1797, %v1798
    %v1803 = vsel %vm49, 0.0, %v1797
    %v1804 = vsel %vm49, %v1798, 0.0
    %v1807 = vrot.slane %v1803, 1
    %v1808 = vrot.slane %v1799, 1
    %v1809 = vsel %vm60, %v1807, %v1808
    %v1810 = vrot.slane %v1804, 1
    %v1811 = vsel %vm60, %v1808, %v1810
    %v1814 = vrot.slane %v1803, 2
    %v1815 = vrot.slane %v1799, 2
    %v1816 = vsel %vm68, %v1814, %v1815
    %v1817 = vrot.slane %v1804, 2
    %v1818 = vsel %vm68, %v1815, %v1817
    %v1821 = vrot.slane %v1803, 3
    %v1822 = vrot.slane %v1799, 3
    %v1823 = vsel %vm76, %v1821, %v1822
    %v1824 = vrot.slane %v1804, 3
    %v1825 = vsel %vm76, %v1822, %v1824
    %v1828 = vrot.slane %v1803, 4
    %v1829 = vrot.slane %v1799, 4
    %v1830 = vsel %vm49, %v1828, %v1829
    %v1831 = vrot.slane %v1804, 4
    %v1832 = vsel %vm49, %v1829, %v1831
    %v1835 = vrot.slane %v1803, 5
    %v1836 = vrot.slane %v1799, 5
    %v1837 = vsel %vm91, %v1835, %v1836
    %v1838 = vrot.slane %v1804, 5
    %v1839 = vsel %vm91, %v1836, %v1838
    %v1842 = vrot.slane %v1803, 6
    %v1843 = vrot.slane %v1799, 6
    %v1844 = vsel %vm99, %v1842, %v1843
    %v1845 = vrot.slane %v1804, 6
    %v1846 = vsel %vm99, %v1843, %v1845
    %v1849 = vrot.slane %v1803, 7
    %v1850 = vrot.slane %v1799, 7
    %v1851 = vsel %vm107, %v1849, %v1850
    %v1852 = vrot.slane %v1804, 7
    %v1853 = vsel %vm107, %v1850, %v1852
    %v1856 = vpack.c.bf16 %v1799, %v1803
    %v1857 = vpack.c.bf16 %v1811, %v1809
    %v1858 = vpack.c.bf16 %v1818, %v1816
    %v1859 = vpack.c.bf16 %v1825, %v1823
    %v1860 = vpack.c.bf16 %v1832, %v1830
    %v1861 = vpack.c.bf16 %v1839, %v1837
    %v1862 = vpack.c.bf16 %v1846, %v1844
    %v1863 = vpack.c.bf16 %v1853, %v1851
    %v1864 = vpack.c.bf16 %v1804, %v1799
    %v1865 = vld [vmem:[%s5] sm:$0xf]
    %v1866 = vld [vmem:[%s5 + $0x4] sm:$0xf]
    %v1867 = vld [vmem:[%s5 + $0x8] sm:$0xf]
    %v1868 = vld [vmem:[%s5 + $0xc] sm:$0xf]
    %v1869 = vld [vmem:[%s5 + $0x10] sm:$0xf]
    %v1870 = vld [vmem:[%s5 + $0x14] sm:$0xf]
    %v1871 = vld [vmem:[%s5 + $0x18] sm:$0xf]
    %v1872 = vld [vmem:[%s5 + $0x1c] sm:$0xf]
    %v1873 = vld [vmem:[%s5 + $0x20] sm:$0xf]
    %v1874 = vld [vmem:[%s5 + $0x24] sm:$0xf]
    %v1875 = vld [vmem:[%s5 + $0x28] sm:$0xf]
    %v1876 = vld [vmem:[%s5 + $0x2c] sm:$0xf]
    %v1877 = vld [vmem:[%s5 + $0x30] sm:$0xf]
    %v1878 = vld [vmem:[%s5 + $0x34] sm:$0xf]
    %v1879 = vld [vmem:[%s5 + $0x38] sm:$0xf]
    %v1880 = vld [vmem:[%s5 + $0x3c] sm:$0xf]
    %v1881 = vld [vmem:[%s5 + $0x40] sm:$0xf]
    %v1882 = vld [vmem:[%s5 + $0x44] sm:$0xf]
    %v1883 = vld [vmem:[%s5 + $0x48] sm:$0xf]
    %v1884 = vld [vmem:[%s5 + $0x4c] sm:$0xf]
    %v1885 = vld [vmem:[%s5 + $0x50] sm:$0xf]
    %v1886 = vld [vmem:[%s5 + $0x54] sm:$0xf]
    %v1887 = vld [vmem:[%s5 + $0x58] sm:$0xf]
    %v1888 = vld [vmem:[%s5 + $0x5c] sm:$0xf]
    %v1889 = vld [vmem:[%s5 + $0x60] sm:$0xf]
    %v1890 = vld [vmem:[%s5 + $0x64] sm:$0xf]
    %v1891 = vld [vmem:[%s5 + $0x68] sm:$0xf]
    %v1892 = vld [vmem:[%s5 + $0x6c] sm:$0xf]
    %v1893 = vld [vmem:[%s5 + $0x70] sm:$0xf]
    %v1894 = vld [vmem:[%s5 + $0x74] sm:$0xf]
    %v1895 = vld [vmem:[%s5 + $0x78] sm:$0xf]
    %v1896 = vld [vmem:[%s5 + $0x7c] sm:$0xf]
    %v1897 = vld [vmem:[%s5 + $0x80] sm:$0xf]
    %v1898 = vld [vmem:[%s5 + $0x84] sm:$0xf]
    %v1899 = vld [vmem:[%s5 + $0x88] sm:$0xf]
    %v1900 = vld [vmem:[%s5 + $0x8c] sm:$0xf]
    %v1901 = vld [vmem:[%s5 + $0x90] sm:$0xf]
    %v1902 = vld [vmem:[%s5 + $0x94] sm:$0xf]
    %v1903 = vld [vmem:[%s5 + $0x98] sm:$0xf]
    %v1904 = vld [vmem:[%s5 + $0x9c] sm:$0xf]
    %v1905 = vld [vmem:[%s5 + $0xa0] sm:$0xf]
    %v1906 = vld [vmem:[%s5 + $0xa4] sm:$0xf]
    %v1907 = vld [vmem:[%s5 + $0xa8] sm:$0xf]
    %v1908 = vld [vmem:[%s5 + $0xac] sm:$0xf]
    %v1909 = vld [vmem:[%s5 + $0xb0] sm:$0xf]
    %v1910 = vld [vmem:[%s5 + $0xb4] sm:$0xf]
    %v1911 = vld [vmem:[%s5 + $0xb8] sm:$0xf]
    %v1912 = vld [vmem:[%s5 + $0xbc] sm:$0xf]
    %v1913 = vld [vmem:[%s5 + $0xc0] sm:$0xf]
    %v1914 = vld [vmem:[%s5 + $0xc4] sm:$0xf]
    %v1915 = vld [vmem:[%s5 + $0xc8] sm:$0xf]
    %v1916 = vld [vmem:[%s5 + $0xcc] sm:$0xf]
    %v1917 = vld [vmem:[%s5 + $0xd0] sm:$0xf]
    %v1918 = vld [vmem:[%s5 + $0xd4] sm:$0xf]
    %v1919 = vld [vmem:[%s5 + $0xd8] sm:$0xf]
    %v1920 = vld [vmem:[%s5 + $0xdc] sm:$0xf]
    %v1921 = vld [vmem:[%s5 + $0xe0] sm:$0xf]
    %v1922 = vld [vmem:[%s5 + $0xe4] sm:$0xf]
    %v1923 = vld [vmem:[%s5 + $0xe8] sm:$0xf]
    %v1924 = vld [vmem:[%s5 + $0xec] sm:$0xf]
    %v1925 = vld [vmem:[%s5 + $0xf0] sm:$0xf]
    %v1926 = vld [vmem:[%s5 + $0xf4] sm:$0xf]
    %v1927 = vld [vmem:[%s5 + $0xf8] sm:$0xf]
    %v1928 = vld [vmem:[%s5 + $0xfc] sm:$0xf]
    %v1929 = vld [vmem:[%s5 + $0x100] sm:$0xf]
    %v1930 = vld [vmem:[%s5 + $0x104] sm:$0xf]
    %v1931 = vld [vmem:[%s5 + $0x108] sm:$0xf]
    %v1932 = vld [vmem:[%s5 + $0x10c] sm:$0xf]
    %v1933 = vld [vmem:[%s5 + $0x110] sm:$0xf]
    %v1934 = vld [vmem:[%s5 + $0x114] sm:$0xf]
    %v1935 = vld [vmem:[%s5 + $0x118] sm:$0xf]
    %v1936 = vld [vmem:[%s5 + $0x11c] sm:$0xf]
    %v1937 = vld [vmem:[%s5 + $0x120] sm:$0xf]
    %v1938 = vld [vmem:[%s5 + $0x124] sm:$0xf]
    %v1939 = vld [vmem:[%s5 + $0x128] sm:$0xf]
    %v1940 = vld [vmem:[%s5 + $0x12c] sm:$0xf]
    %v1941 = vld [vmem:[%s5 + $0x130] sm:$0xf]
    %v1942 = vld [vmem:[%s5 + $0x134] sm:$0xf]
    %v1943 = vld [vmem:[%s5 + $0x138] sm:$0xf]
    %v1944 = vld [vmem:[%s5 + $0x13c] sm:$0xf]
    %v1945 = vld [vmem:[%s5 + $0x140] sm:$0xf]
    %v1946 = vld [vmem:[%s5 + $0x144] sm:$0xf]
    %v1947 = vld [vmem:[%s5 + $0x148] sm:$0xf]
    %v1948 = vld [vmem:[%s5 + $0x14c] sm:$0xf]
    %v1949 = vld [vmem:[%s5 + $0x150] sm:$0xf]
    %v1950 = vld [vmem:[%s5 + $0x154] sm:$0xf]
    %v1951 = vld [vmem:[%s5 + $0x158] sm:$0xf]
    %v1952 = vld [vmem:[%s5 + $0x15c] sm:$0xf]
    %v1953 = vld [vmem:[%s5 + $0x160] sm:$0xf]
    %v1954 = vld [vmem:[%s5 + $0x164] sm:$0xf]
    %v1955 = vld [vmem:[%s5 + $0x168] sm:$0xf]
    %v1956 = vld [vmem:[%s5 + $0x16c] sm:$0xf]
    %v1957 = vld [vmem:[%s5 + $0x170] sm:$0xf]
    %v1958 = vld [vmem:[%s5 + $0x174] sm:$0xf]
    %v1959 = vld [vmem:[%s5 + $0x178] sm:$0xf]
    %v1960 = vld [vmem:[%s5 + $0x17c] sm:$0xf]
    %v1961 = vld [vmem:[%s5 + $0x180] sm:$0xf]
    %v1962 = vld [vmem:[%s5 + $0x184] sm:$0xf]
    %v1963 = vld [vmem:[%s5 + $0x188] sm:$0xf]
    %v1964 = vld [vmem:[%s5 + $0x18c] sm:$0xf]
    %v1965 = vld [vmem:[%s5 + $0x190] sm:$0xf]
    %v1966 = vld [vmem:[%s5 + $0x194] sm:$0xf]
    %v1967 = vld [vmem:[%s5 + $0x198] sm:$0xf]
    %v1968 = vld [vmem:[%s5 + $0x19c] sm:$0xf]
    %v1969 = vld [vmem:[%s5 + $0x1a0] sm:$0xf]
    %v1970 = vld [vmem:[%s5 + $0x1a4] sm:$0xf]
    %v1971 = vld [vmem:[%s5 + $0x1a8] sm:$0xf]
    %v1972 = vld [vmem:[%s5 + $0x1ac] sm:$0xf]
    %v1973 = vld [vmem:[%s5 + $0x1b0] sm:$0xf]
    %v1974 = vld [vmem:[%s5 + $0x1b4] sm:$0xf]
    %v1975 = vld [vmem:[%s5 + $0x1b8] sm:$0xf]
    %v1976 = vld [vmem:[%s5 + $0x1bc] sm:$0xf]
    %v1977 = vld [vmem:[%s5 + $0x1c0] sm:$0xf]
    %v1978 = vld [vmem:[%s5 + $0x1c4] sm:$0xf]
    %v1979 = vld [vmem:[%s5 + $0x1c8] sm:$0xf]
    %v1980 = vld [vmem:[%s5 + $0x1cc] sm:$0xf]
    %v1981 = vld [vmem:[%s5 + $0x1d0] sm:$0xf]
    %v1982 = vld [vmem:[%s5 + $0x1d4] sm:$0xf]
    %v1983 = vld [vmem:[%s5 + $0x1d8] sm:$0xf]
    %v1984 = vld [vmem:[%s5 + $0x1dc] sm:$0xf]
    %v1985 = vld [vmem:[%s5 + $0x1e0] sm:$0xf]
    %v1986 = vld [vmem:[%s5 + $0x1e4] sm:$0xf]
    %v1987 = vld [vmem:[%s5 + $0x1e8] sm:$0xf]
    %v1988 = vld [vmem:[%s5 + $0x1ec] sm:$0xf]
    %v1989 = vld [vmem:[%s5 + $0x1f0] sm:$0xf]
    %v1990 = vld [vmem:[%s5 + $0x1f4] sm:$0xf]
    %v1991 = vld [vmem:[%s5 + $0x1f8] sm:$0xf]
    %v1992 = vld [vmem:[%s5 + $0x1fc] sm:$0xf]
    %v1993 = vld [vmem:[%s5 + $0x200] sm:$0xf]
    %v1994 = vld [vmem:[%s5 + $0x204] sm:$0xf]
    %v1995 = vld [vmem:[%s5 + $0x208] sm:$0xf]
    %v1996 = vld [vmem:[%s5 + $0x20c] sm:$0xf]
    %v1997 = vld [vmem:[%s5 + $0x210] sm:$0xf]
    %v1998 = vld [vmem:[%s5 + $0x214] sm:$0xf]
    %v1999 = vld [vmem:[%s5 + $0x218] sm:$0xf]
    %v2000 = vld [vmem:[%s5 + $0x21c] sm:$0xf]
    %v2001 = vld [vmem:[%s5 + $0x220] sm:$0xf]
    %v2002 = vld [vmem:[%s5 + $0x224] sm:$0xf]
    %v2003 = vld [vmem:[%s5 + $0x228] sm:$0xf]
    %v2004 = vld [vmem:[%s5 + $0x22c] sm:$0xf]
    %v2005 = vld [vmem:[%s5 + $0x230] sm:$0xf]
    %v2006 = vld [vmem:[%s5 + $0x234] sm:$0xf]
    %v2007 = vld [vmem:[%s5 + $0x238] sm:$0xf]
    %v2008 = vld [vmem:[%s5 + $0x23c] sm:$0xf]
    %v2153 = vunpack.c.l.b16 %v1865
    %v2154 = vunpack.c.l.b16 %v1866
    %v2155 = vunpack.c.l.b16 %v1867
    %v2156 = vunpack.c.l.b16 %v1868
    %v2157 = vunpack.c.l.b16 %v1869
    %v2158 = vunpack.c.l.b16 %v1870
    %v2159 = vunpack.c.l.b16 %v1871
    %v2160 = vunpack.c.l.b16 %v1872
    %v2161 = vunpack.c.l.b16 %v1873
    %v2162 = vunpack.c.l.b16 %v1874
    %v2163 = vunpack.c.l.b16 %v1875
    %v2164 = vunpack.c.l.b16 %v1876
    %v2165 = vunpack.c.l.b16 %v1877
    %v2166 = vunpack.c.l.b16 %v1878
    %v2167 = vunpack.c.l.b16 %v1879
    %v2168 = vunpack.c.l.b16 %v1880
    %v2169 = vunpack.c.l.b16 %v1881
    %v2170 = vunpack.c.l.b16 %v1882
    %v2171 = vunpack.c.l.b16 %v1883
    %v2172 = vunpack.c.l.b16 %v1884
    %v2173 = vunpack.c.l.b16 %v1885
    %v2174 = vunpack.c.l.b16 %v1886
    %v2175 = vunpack.c.l.b16 %v1887
    %v2176 = vunpack.c.l.b16 %v1888
    %v2177 = vunpack.c.l.b16 %v1889
    %v2178 = vunpack.c.l.b16 %v1890
    %v2179 = vunpack.c.l.b16 %v1891
    %v2180 = vunpack.c.l.b16 %v1892
    %v2181 = vunpack.c.l.b16 %v1893
    %v2182 = vunpack.c.l.b16 %v1894
    %v2183 = vunpack.c.l.b16 %v1895
    %v2184 = vunpack.c.l.b16 %v1896
    %v2185 = vunpack.c.l.b16 %v1897
    %v2186 = vunpack.c.l.b16 %v1898
    %v2187 = vunpack.c.l.b16 %v1899
    %v2188 = vunpack.c.l.b16 %v1900
    %v2189 = vunpack.c.l.b16 %v1901
    %v2190 = vunpack.c.l.b16 %v1902
    %v2191 = vunpack.c.l.b16 %v1903
    %v2192 = vunpack.c.l.b16 %v1904
    %v2193 = vunpack.c.l.b16 %v1905
    %v2194 = vunpack.c.l.b16 %v1906
    %v2195 = vunpack.c.l.b16 %v1907
    %v2196 = vunpack.c.l.b16 %v1908
    %v2197 = vunpack.c.l.b16 %v1909
    %v2198 = vunpack.c.l.b16 %v1910
    %v2199 = vunpack.c.l.b16 %v1911
    %v2200 = vunpack.c.l.b16 %v1912
    %v2201 = vunpack.c.l.b16 %v1913
    %v2202 = vunpack.c.l.b16 %v1914
    %v2203 = vunpack.c.l.b16 %v1915
    %v2204 = vunpack.c.l.b16 %v1916
    %v2205 = vunpack.c.l.b16 %v1917
    %v2206 = vunpack.c.l.b16 %v1918
    %v2207 = vunpack.c.l.b16 %v1919
    %v2208 = vunpack.c.l.b16 %v1920
    %v2209 = vunpack.c.l.b16 %v1921
    %v2210 = vunpack.c.l.b16 %v1922
    %v2211 = vunpack.c.l.b16 %v1923
    %v2212 = vunpack.c.l.b16 %v1924
    %v2213 = vunpack.c.l.b16 %v1925
    %v2214 = vunpack.c.l.b16 %v1926
    %v2215 = vunpack.c.l.b16 %v1927
    %v2216 = vunpack.c.l.b16 %v1928
    %v2217 = vunpack.c.l.b16 %v1929
    %v2218 = vunpack.c.l.b16 %v1930
    %v2219 = vunpack.c.l.b16 %v1931
    %v2220 = vunpack.c.l.b16 %v1932
    %v2221 = vunpack.c.l.b16 %v1933
    %v2222 = vunpack.c.l.b16 %v1934
    %v2223 = vunpack.c.l.b16 %v1935
    %v2224 = vunpack.c.l.b16 %v1936
    %v2225 = vunpack.c.l.b16 %v1937
    %v2226 = vunpack.c.l.b16 %v1938
    %v2227 = vunpack.c.l.b16 %v1939
    %v2228 = vunpack.c.l.b16 %v1940
    %v2229 = vunpack.c.l.b16 %v1941
    %v2230 = vunpack.c.l.b16 %v1942
    %v2231 = vunpack.c.l.b16 %v1943
    %v2232 = vunpack.c.l.b16 %v1944
    %v2233 = vunpack.c.l.b16 %v1945
    %v2234 = vunpack.c.l.b16 %v1946
    %v2235 = vunpack.c.l.b16 %v1947
    %v2236 = vunpack.c.l.b16 %v1948
    %v2237 = vunpack.c.l.b16 %v1949
    %v2238 = vunpack.c.l.b16 %v1950
    %v2239 = vunpack.c.l.b16 %v1951
    %v2240 = vunpack.c.l.b16 %v1952
    %v2241 = vunpack.c.l.b16 %v1953
    %v2242 = vunpack.c.l.b16 %v1954
    %v2243 = vunpack.c.l.b16 %v1955
    %v2244 = vunpack.c.l.b16 %v1956
    %v2245 = vunpack.c.l.b16 %v1957
    %v2246 = vunpack.c.l.b16 %v1958
    %v2247 = vunpack.c.l.b16 %v1959
    %v2248 = vunpack.c.l.b16 %v1960
    %v2249 = vunpack.c.l.b16 %v1961
    %v2250 = vunpack.c.l.b16 %v1962
    %v2251 = vunpack.c.l.b16 %v1963
    %v2252 = vunpack.c.l.b16 %v1964
    %v2253 = vunpack.c.l.b16 %v1965
    %v2254 = vunpack.c.l.b16 %v1966
    %v2255 = vunpack.c.l.b16 %v1967
    %v2256 = vunpack.c.l.b16 %v1968
    %v2257 = vunpack.c.l.b16 %v1969
    %v2258 = vunpack.c.l.b16 %v1970
    %v2259 = vunpack.c.l.b16 %v1971
    %v2260 = vunpack.c.l.b16 %v1972
    %v2261 = vunpack.c.l.b16 %v1973
    %v2262 = vunpack.c.l.b16 %v1974
    %v2263 = vunpack.c.l.b16 %v1975
    %v2264 = vunpack.c.l.b16 %v1976
    %v2265 = vunpack.c.l.b16 %v1977
    %v2266 = vunpack.c.l.b16 %v1978
    %v2267 = vunpack.c.l.b16 %v1979
    %v2268 = vunpack.c.l.b16 %v1980
    %v2269 = vunpack.c.l.b16 %v1981
    %v2270 = vunpack.c.l.b16 %v1982
    %v2271 = vunpack.c.l.b16 %v1983
    %v2272 = vunpack.c.l.b16 %v1984
    %v2273 = vunpack.c.l.b16 %v1985
    %v2274 = vunpack.c.l.b16 %v1986
    %v2275 = vunpack.c.l.b16 %v1987
    %v2276 = vunpack.c.l.b16 %v1988
    %v2277 = vunpack.c.l.b16 %v1989
    %v2278 = vunpack.c.l.b16 %v1990
    %v2279 = vunpack.c.l.b16 %v1991
    %v2280 = vunpack.c.l.b16 %v1992
    %v2281 = vunpack.c.l.b16 %v1993
    %v2282 = vunpack.c.l.b16 %v1994
    %v2283 = vunpack.c.l.b16 %v1995
    %v2284 = vunpack.c.l.b16 %v1996
    %v2285 = vunpack.c.l.b16 %v1997
    %v2286 = vunpack.c.l.b16 %v1998
    %v2287 = vunpack.c.l.b16 %v1999
    %v2288 = vunpack.c.l.b16 %v2000
    %v2289 = vunpack.c.l.b16 %v2001
    %v2290 = vunpack.c.l.b16 %v2002
    %v2291 = vunpack.c.l.b16 %v2003
    %v2292 = vunpack.c.l.b16 %v2004
    %v2293 = vunpack.c.l.b16 %v2005
    %v2294 = vunpack.c.l.b16 %v2006
    %v2295 = vunpack.c.l.b16 %v2007
    %v2296 = vunpack.c.l.b16 %v2008
    %v2297 = vpack.c.b16 %v2154, %v2153
    %v2298 = vpack.c.b16 %v2156, %v2155
    %v2299 = vpack.c.b16 %v2158, %v2157
    %v2300 = vpack.c.b16 %v2160, %v2159
    %v2301 = vpack.c.b16 %v2162, %v2161
    %v2302 = vpack.c.b16 %v2164, %v2163
    %v2303 = vpack.c.b16 %v2166, %v2165
    %v2304 = vpack.c.b16 %v2168, %v2167
    %v2305 = vpack.c.b16 %v2170, %v2169
    %v2306 = vpack.c.b16 %v2172, %v2171
    %v2307 = vpack.c.b16 %v2174, %v2173
    %v2308 = vpack.c.b16 %v2176, %v2175
    %v2309 = vpack.c.b16 %v2178, %v2177
    %v2310 = vpack.c.b16 %v2180, %v2179
    %v2311 = vpack.c.b16 %v2182, %v2181
    %v2312 = vpack.c.b16 %v2184, %v2183
    %v2313 = vpack.c.b16 %v2186, %v2185
    %v2314 = vpack.c.b16 %v2188, %v2187
    %v2315 = vpack.c.b16 %v2190, %v2189
    %v2316 = vpack.c.b16 %v2192, %v2191
    %v2317 = vpack.c.b16 %v2194, %v2193
    %v2318 = vpack.c.b16 %v2196, %v2195
    %v2319 = vpack.c.b16 %v2198, %v2197
    %v2320 = vpack.c.b16 %v2200, %v2199
    %v2321 = vpack.c.b16 %v2202, %v2201
    %v2322 = vpack.c.b16 %v2204, %v2203
    %v2323 = vpack.c.b16 %v2206, %v2205
    %v2324 = vpack.c.b16 %v2208, %v2207
    %v2325 = vpack.c.b16 %v2210, %v2209
    %v2326 = vpack.c.b16 %v2212, %v2211
    %v2327 = vpack.c.b16 %v2214, %v2213
    %v2328 = vpack.c.b16 %v2216, %v2215
    %v2329 = vpack.c.b16 %v2218, %v2217
    %v2330 = vpack.c.b16 %v2220, %v2219
    %v2331 = vpack.c.b16 %v2222, %v2221
    %v2332 = vpack.c.b16 %v2224, %v2223
    %v2333 = vpack.c.b16 %v2226, %v2225
    %v2334 = vpack.c.b16 %v2228, %v2227
    %v2335 = vpack.c.b16 %v2230, %v2229
    %v2336 = vpack.c.b16 %v2232, %v2231
    %v2337 = vpack.c.b16 %v2234, %v2233
    %v2338 = vpack.c.b16 %v2236, %v2235
    %v2339 = vpack.c.b16 %v2238, %v2237
    %v2340 = vpack.c.b16 %v2240, %v2239
    %v2341 = vpack.c.b16 %v2242, %v2241
    %v2342 = vpack.c.b16 %v2244, %v2243
    %v2343 = vpack.c.b16 %v2246, %v2245
    %v2344 = vpack.c.b16 %v2248, %v2247
    %v2345 = vpack.c.b16 %v2250, %v2249
    %v2346 = vpack.c.b16 %v2252, %v2251
    %v2347 = vpack.c.b16 %v2254, %v2253
    %v2348 = vpack.c.b16 %v2256, %v2255
    %v2349 = vpack.c.b16 %v2258, %v2257
    %v2350 = vpack.c.b16 %v2260, %v2259
    %v2351 = vpack.c.b16 %v2262, %v2261
    %v2352 = vpack.c.b16 %v2264, %v2263
    %v2353 = vpack.c.b16 %v2266, %v2265
    %v2354 = vpack.c.b16 %v2268, %v2267
    %v2355 = vpack.c.b16 %v2270, %v2269
    %v2356 = vpack.c.b16 %v2272, %v2271
    %v2357 = vpack.c.b16 %v2274, %v2273
    %v2358 = vpack.c.b16 %v2276, %v2275
    %v2359 = vpack.c.b16 %v2278, %v2277
    %v2360 = vpack.c.b16 %v2280, %v2279
    %v2361 = vpack.c.b16 %v2282, %v2281
    %v2362 = vpack.c.b16 %v2284, %v2283
    %v2363 = vpack.c.b16 %v2286, %v2285
    %v2364 = vpack.c.b16 %v2288, %v2287
    %v2365 = vpack.c.b16 %v2290, %v2289
    %v2366 = vpack.c.b16 %v2292, %v2291
    %v2367 = vpack.c.b16 %v2294, %v2293
    %v2368 = vpack.c.b16 %v2296, %v2295
    %2441 = vmatprep.subr.bf16.mxu0 0
    %2442 = vmatpush1.bf16.msra.mxu0 %v2297
    %2443 = vmatprep.subr.bf16.mxu0 0
    %2444 = vmatpush1.bf16.msra.mxu0 %v2298
    %2445 = vmatprep.subr.bf16.mxu0 0
    %2446 = vmatpush1.bf16.msra.mxu0 %v2299
    %2447 = vmatprep.subr.bf16.mxu0 0
    %2448 = vmatpush1.bf16.msra.mxu0 %v2300
    %2449 = vmatprep.subr.bf16.mxu0 0
    %2450 = vmatpush1.bf16.msra.mxu0 %v2301
    %2451 = vmatprep.subr.bf16.mxu0 0
    %2452 = vmatpush1.bf16.msra.mxu0 %v2302
    %2453 = vmatprep.subr.bf16.mxu0 0
    %2454 = vmatpush1.bf16.msra.mxu0 %v2303
    %2455 = vmatprep.subr.bf16.mxu0 0
    %2456 = vmatpush1.bf16.msra.mxu0 %v2304
    %2457 = vmatprep.subr.bf16.mxu0 0
    %2458 = vmatpush1.bf16.msra.mxu0 %v2305
    %2459 = vmatprep.subr.bf16.mxu0 0
    %2460 = vmatpush1.bf16.msra.mxu0 %v2306
    %2461 = vmatprep.subr.bf16.mxu0 0
    %2462 = vmatpush1.bf16.msra.mxu0 %v2307
    %2463 = vmatprep.subr.bf16.mxu0 0
    %2464 = vmatpush1.bf16.msra.mxu0 %v2308
    %2465 = vmatprep.subr.bf16.mxu0 0
    %2466 = vmatpush1.bf16.msra.mxu0 %v2309
    %2467 = vmatprep.subr.bf16.mxu0 0
    %2468 = vmatpush1.bf16.msra.mxu0 %v2310
    %2469 = vmatprep.subr.bf16.mxu0 0
    %2470 = vmatpush1.bf16.msra.mxu0 %v2311
    %2471 = vmatprep.subr.bf16.mxu0 0
    %2472 = vmatpush1.bf16.msra.mxu0 %v2312
    %2473 = vmatprep.mubr.bf16.mxu0 %v1857
    %2474 = vmatmul.mubr.bf16.gmra.mrb[0].mxu0 %v1856
    %v2475 = vpop.f32.mrb[0].mxu0
    %v2476 = vadd.f32 0.0, %v2475
    %v2477 = vpop.f32.mrb[0].mxu0
    %v2478 = vpop.f32.mrb[0].mxu0
    %v2479 = vadd.f32 0.0, %v2478
    %v2480 = vpop.f32.mrb[0].mxu0
    %2481 = vdwg.mxu0
    %2482 = vmatprep.subr.bf16.mxu0 0
    %2483 = vmatpush1.bf16.msra.mxu0 %v2313
    %2484 = vmatprep.subr.bf16.mxu0 0
    %2485 = vmatpush1.bf16.msra.mxu0 %v2314
    %2486 = vmatprep.subr.bf16.mxu0 0
    %2487 = vmatpush1.bf16.msra.mxu0 %v2315
    %2488 = vmatprep.subr.bf16.mxu0 0
    %2489 = vmatpush1.bf16.msra.mxu0 %v2316
    %2490 = vmatprep.subr.bf16.mxu0 0
    %2491 = vmatpush1.bf16.msra.mxu0 %v2317
    %2492 = vmatprep.subr.bf16.mxu0 0
    %2493 = vmatpush1.bf16.msra.mxu0 %v2318
    %2494 = vmatprep.subr.bf16.mxu0 0
    %2495 = vmatpush1.bf16.msra.mxu0 %v2319
    %2496 = vmatprep.subr.bf16.mxu0 0
    %2497 = vmatpush1.bf16.msra.mxu0 %v2320
    %2498 = vmatprep.subr.bf16.mxu0 0
    %2499 = vmatpush1.bf16.msra.mxu0 %v2321
    %2500 = vmatprep.subr.bf16.mxu0 0
    %2501 = vmatpush1.bf16.msra.mxu0 %v2322
    %2502 = vmatprep.subr.bf16.mxu0 0
    %2503 = vmatpush1.bf16.msra.mxu0 %v2323
    %2504 = vmatprep.subr.bf16.mxu0 0
    %2505 = vmatpush1.bf16.msra.mxu0 %v2324
    %2506 = vmatprep.subr.bf16.mxu0 0
    %2507 = vmatpush1.bf16.msra.mxu0 %v2325
    %2508 = vmatprep.subr.bf16.mxu0 0
    %2509 = vmatpush1.bf16.msra.mxu0 %v2326
    %2510 = vmatprep.subr.bf16.mxu0 0
    %2511 = vmatpush1.bf16.msra.mxu0 %v2327
    %2512 = vmatprep.subr.bf16.mxu0 0
    %2513 = vmatpush1.bf16.msra.mxu0 %v2328
    %2514 = vmatprep.mubr.bf16.mxu0 %v1859
    %2515 = vmatmul.mubr.bf16.gmra.mrb[0].mxu0 %v1858
    %v2516 = vpop.f32.mrb[0].mxu0
    %v2517 = vadd.f32 %v2476, %v2516
    %v2518 = vpop.f32.mrb[0].mxu0
    %v2519 = vpop.f32.mrb[0].mxu0
    %v2520 = vadd.f32 %v2479, %v2519
    %v2521 = vpop.f32.mrb[0].mxu0
    %2522 = vdwg.mxu0
    %2523 = vmatprep.subr.bf16.mxu0 0
    %2524 = vmatpush1.bf16.msra.mxu0 %v2329
    %2525 = vmatprep.subr.bf16.mxu0 0
    %2526 = vmatpush1.bf16.msra.mxu0 %v2330
    %2527 = vmatprep.subr.bf16.mxu0 0
    %2528 = vmatpush1.bf16.msra.mxu0 %v2331
    %2529 = vmatprep.subr.bf16.mxu0 0
    %2530 = vmatpush1.bf16.msra.mxu0 %v2332
    %2531 = vmatprep.subr.bf16.mxu0 0
    %2532 = vmatpush1.bf16.msra.mxu0 %v2333
    %2533 = vmatprep.subr.bf16.mxu0 0
    %2534 = vmatpush1.bf16.msra.mxu0 %v2334
    %2535 = vmatprep.subr.bf16.mxu0 0
    %2536 = vmatpush1.bf16.msra.mxu0 %v2335
    %2537 = vmatprep.subr.bf16.mxu0 0
    %2538 = vmatpush1.bf16.msra.mxu0 %v2336
    %2539 = vmatprep.subr.bf16.mxu0 0
    %2540 = vmatpush1.bf16.msra.mxu0 %v2337
    %2541 = vmatprep.subr.bf16.mxu0 0
    %2542 = vmatpush1.bf16.msra.mxu0 %v2338
    %2543 = vmatprep.subr.bf16.mxu0 0
    %2544 = vmatpush1.bf16.msra.mxu0 %v2339
    %2545 = vmatprep.subr.bf16.mxu0 0
    %2546 = vmatpush1.bf16.msra.mxu0 %v2340
    %2547 = vmatprep.subr.bf16.mxu0 0
    %2548 = vmatpush1.bf16.msra.mxu0 %v2341
    %2549 = vmatprep.subr.bf16.mxu0 0
    %2550 = vmatpush1.bf16.msra.mxu0 %v2342
    %2551 = vmatprep.subr.bf16.mxu0 0
    %2552 = vmatpush1.bf16.msra.mxu0 %v2343
    %2553 = vmatprep.subr.bf16.mxu0 0
    %2554 = vmatpush1.bf16.msra.mxu0 %v2344
    %2555 = vmatprep.mubr.bf16.mxu0 %v1861
    %2556 = vmatmul.mubr.bf16.gmra.mrb[0].mxu0 %v1860
    %v2557 = vpop.f32.mrb[0].mxu0
    %v2558 = vadd.f32 %v2517, %v2557
    %v2559 = vpop.f32.mrb[0].mxu0
    %v2560 = vpop.f32.mrb[0].mxu0
    %v2561 = vadd.f32 %v2520, %v2560
    %v2562 = vpop.f32.mrb[0].mxu0
    %2563 = vdwg.mxu0
    %2564 = vmatprep.subr.bf16.mxu0 0
    %2565 = vmatpush1.bf16.msra.mxu0 %v2345
    %2566 = vmatprep.subr.bf16.mxu0 0
    %2567 = vmatpush1.bf16.msra.mxu0 %v2346
    %2568 = vmatprep.subr.bf16.mxu0 0
    %2569 = vmatpush1.bf16.msra.mxu0 %v2347
    %2570 = vmatprep.subr.bf16.mxu0 0
    %2571 = vmatpush1.bf16.msra.mxu0 %v2348
    %2572 = vmatprep.subr.bf16.mxu0 0
    %2573 = vmatpush1.bf16.msra.mxu0 %v2349
    %2574 = vmatprep.subr.bf16.mxu0 0
    %2575 = vmatpush1.bf16.msra.mxu0 %v2350
    %2576 = vmatprep.subr.bf16.mxu0 0
    %2577 = vmatpush1.bf16.msra.mxu0 %v2351
    %2578 = vmatprep.subr.bf16.mxu0 0
    %2579 = vmatpush1.bf16.msra.mxu0 %v2352
    %2580 = vmatprep.subr.bf16.mxu0 0
    %2581 = vmatpush1.bf16.msra.mxu0 %v2353
    %2582 = vmatprep.subr.bf16.mxu0 0
    %2583 = vmatpush1.bf16.msra.mxu0 %v2354
    %2584 = vmatprep.subr.bf16.mxu0 0
    %2585 = vmatpush1.bf16.msra.mxu0 %v2355
    %2586 = vmatprep.subr.bf16.mxu0 0
    %2587 = vmatpush1.bf16.msra.mxu0 %v2356
    %2588 = vmatprep.subr.bf16.mxu0 0
    %2589 = vmatpush1.bf16.msra.mxu0 %v2357
    %2590 = vmatprep.subr.bf16.mxu0 0
    %2591 = vmatpush1.bf16.msra.mxu0 %v2358
    %2592 = vmatprep.subr.bf16.mxu0 0
    %2593 = vmatpush1.bf16.msra.mxu0 %v2359
    %2594 = vmatprep.subr.bf16.mxu0 0
    %2595 = vmatpush1.bf16.msra.mxu0 %v2360
    %2596 = vmatprep.mubr.bf16.mxu0 %v1863
    %2597 = vmatmul.mubr.bf16.gmra.mrb[0].mxu0 %v1862
    %v2598 = vpop.f32.mrb[0].mxu0
    %v2599 = vadd.f32 %v2558, %v2598
    %v2600 = vpop.f32.mrb[0].mxu0
    %v2601 = vpop.f32.mrb[0].mxu0
    %v2602 = vadd.f32 %v2561, %v2601
    %v2603 = vpop.f32.mrb[0].mxu0
    %2604 = vdwg.mxu0
    %2605 = vmatprep.subr.bf16.mxu0 0
    %2606 = vmatpush1.bf16.msra.mxu0 %v2361
    %2607 = vmatprep.subr.bf16.mxu0 0
    %2608 = vmatpush1.bf16.msra.mxu0 %v2362
    %2609 = vmatprep.subr.bf16.mxu0 0
    %2610 = vmatpush1.bf16.msra.mxu0 %v2363
    %2611 = vmatprep.subr.bf16.mxu0 0
    %2612 = vmatpush1.bf16.msra.mxu0 %v2364
    %2613 = vmatprep.subr.bf16.mxu0 0
    %2614 = vmatpush1.bf16.msra.mxu0 %v2365
    %2615 = vmatprep.subr.bf16.mxu0 0
    %2616 = vmatpush1.bf16.msra.mxu0 %v2366
    %2617 = vmatprep.subr.bf16.mxu0 0
    %2618 = vmatpush1.bf16.msra.mxu0 %v2367
    %2619 = vmatprep.subr.bf16.mxu0 0
    %2620 = vmatpush1.bf16.msra.mxu0 %v2368
    %2621 = vmatprep.subr.bf16.mxu0 0
    %2622 = vmatpush1.bf16.msra.mxu0 0
    %2623 = vmatprep.subr.bf16.mxu0 0
    %2624 = vmatpush1.bf16.msra.mxu0 0
    %2625 = vmatprep.subr.bf16.mxu0 0
    %2626 = vmatpush1.bf16.msra.mxu0 0
    %2627 = vmatprep.subr.bf16.mxu0 0
    %2628 = vmatpush1.bf16.msra.mxu0 0
    %2629 = vmatprep.subr.bf16.mxu0 0
    %2630 = vmatpush1.bf16.msra.mxu0 0
    %2631 = vmatprep.subr.bf16.mxu0 0
    %2632 = vmatpush1.bf16.msra.mxu0 0
    %2633 = vmatprep.subr.bf16.mxu0 0
    %2634 = vmatpush1.bf16.msra.mxu0 0
    %2635 = vmatprep.subr.bf16.mxu0 0
    %2636 = vmatpush1.bf16.msra.mxu0 0
    %2637 = vmatprep.mubr.bf16.mxu0 0
    %2638 = vmatmul.mubr.bf16.gmra.mrb[0].mxu0 %v1864
    %v2639 = vpop.f32.mrb[0].mxu0
    %v2640 = vadd.f32 %v2599, %v2639
    %v2641 = vpop.f32.mrb[0].mxu0
    %v2642 = vpop.f32.mrb[0].mxu0
    %v2643 = vadd.f32 %v2602, %v2642
    %v2644 = vpop.f32.mrb[0].mxu0
    %2645 = vdwg.mxu0
    %v2646 = vsub.f32 %v2640, %v1788
    %v2647 = vsub.f32 %v2643, %v1789
    %v2650 = vrot.slane %v2646, 4
    %v2651 = vrot.slane %v2647, 4
    %v2652 = vsel %vm49, %v2650, %v2651
    %v2656 = vsel %vm49, 0.0, %v2650
    %v2657 = vsel %vm49, %v2651, 0.0
    %v2660 = vrot.slane %v2656, 1
    %v2661 = vrot.slane %v2652, 1
    %v2662 = vsel %vm60, %v2660, %v2661
    %v2663 = vrot.slane %v2657, 1
    %v2664 = vsel %vm60, %v2661, %v2663
    %v2667 = vrot.slane %v2656, 2
    %v2668 = vrot.slane %v2652, 2
    %v2669 = vsel %vm68, %v2667, %v2668
    %v2670 = vrot.slane %v2657, 2
    %v2671 = vsel %vm68, %v2668, %v2670
    %v2674 = vrot.slane %v2656, 3
    %v2675 = vrot.slane %v2652, 3
    %v2676 = vsel %vm76, %v2674, %v2675
    %v2677 = vrot.slane %v2657, 3
    %v2678 = vsel %vm76, %v2675, %v2677
    %v2681 = vrot.slane %v2656, 4
    %v2682 = vrot.slane %v2652, 4
    %v2683 = vsel %vm49, %v2681, %v2682
    %v2684 = vrot.slane %v2657, 4
    %v2685 = vsel %vm49, %v2682, %v2684
    %v2688 = vrot.slane %v2656, 5
    %v2689 = vrot.slane %v2652, 5
    %v2690 = vsel %vm91, %v2688, %v2689
    %v2691 = vrot.slane %v2657, 5
    %v2692 = vsel %vm91, %v2689, %v2691
    %v2695 = vrot.slane %v2656, 6
    %v2696 = vrot.slane %v2652, 6
    %v2697 = vsel %vm99, %v2695, %v2696
    %v2698 = vrot.slane %v2657, 6
    %v2699 = vsel %vm99, %v2696, %v2698
    %v2702 = vrot.slane %v2656, 7
    %v2703 = vrot.slane %v2652, 7
    %v2704 = vsel %vm107, %v2702, %v2703
    %v2705 = vrot.slane %v2657, 7
    %v2706 = vsel %vm107, %v2703, %v2705
    %v2709 = vpack.c.bf16 %v2652, %v2656
    %v2710 = vpack.c.bf16 %v2664, %v2662
    %v2711 = vpack.c.bf16 %v2671, %v2669
    %v2712 = vpack.c.bf16 %v2678, %v2676
    %v2713 = vpack.c.bf16 %v2685, %v2683
    %v2714 = vpack.c.bf16 %v2692, %v2690
    %v2715 = vpack.c.bf16 %v2699, %v2697
    %v2716 = vpack.c.bf16 %v2706, %v2704
    %v2717 = vpack.c.bf16 %v2657, %v2652
    %v2718 = vld [vmem:[%s6] sm:$0xf]
    %v2719 = vld [vmem:[%s6 + $0x4] sm:$0xf]
    %v2720 = vld [vmem:[%s6 + $0x8] sm:$0xf]
    %v2721 = vld [vmem:[%s6 + $0xc] sm:$0xf]
    %v2722 = vld [vmem:[%s6 + $0x10] sm:$0xf]
    %v2723 = vld [vmem:[%s6 + $0x14] sm:$0xf]
    %v2724 = vld [vmem:[%s6 + $0x18] sm:$0xf]
    %v2725 = vld [vmem:[%s6 + $0x1c] sm:$0xf]
    %v2726 = vld [vmem:[%s6 + $0x20] sm:$0xf]
    %v2727 = vld [vmem:[%s6 + $0x24] sm:$0xf]
    %v2728 = vld [vmem:[%s6 + $0x28] sm:$0xf]
    %v2729 = vld [vmem:[%s6 + $0x2c] sm:$0xf]
    %v2730 = vld [vmem:[%s6 + $0x30] sm:$0xf]
    %v2731 = vld [vmem:[%s6 + $0x34] sm:$0xf]
    %v2732 = vld [vmem:[%s6 + $0x38] sm:$0xf]
    %v2733 = vld [vmem:[%s6 + $0x3c] sm:$0xf]
    %v2734 = vld [vmem:[%s6 + $0x40] sm:$0xf]
    %v2735 = vld [vmem:[%s6 + $0x44] sm:$0xf]
    %v2736 = vld [vmem:[%s6 + $0x48] sm:$0xf]
    %v2737 = vld [vmem:[%s6 + $0x4c] sm:$0xf]
    %v2738 = vld [vmem:[%s6 + $0x50] sm:$0xf]
    %v2739 = vld [vmem:[%s6 + $0x54] sm:$0xf]
    %v2740 = vld [vmem:[%s6 + $0x58] sm:$0xf]
    %v2741 = vld [vmem:[%s6 + $0x5c] sm:$0xf]
    %v2742 = vld [vmem:[%s6 + $0x60] sm:$0xf]
    %v2743 = vld [vmem:[%s6 + $0x64] sm:$0xf]
    %v2744 = vld [vmem:[%s6 + $0x68] sm:$0xf]
    %v2745 = vld [vmem:[%s6 + $0x6c] sm:$0xf]
    %v2746 = vld [vmem:[%s6 + $0x70] sm:$0xf]
    %v2747 = vld [vmem:[%s6 + $0x74] sm:$0xf]
    %v2748 = vld [vmem:[%s6 + $0x78] sm:$0xf]
    %v2749 = vld [vmem:[%s6 + $0x7c] sm:$0xf]
    %v2750 = vld [vmem:[%s6 + $0x80] sm:$0xf]
    %v2751 = vld [vmem:[%s6 + $0x84] sm:$0xf]
    %v2752 = vld [vmem:[%s6 + $0x88] sm:$0xf]
    %v2753 = vld [vmem:[%s6 + $0x8c] sm:$0xf]
    %v2754 = vld [vmem:[%s6 + $0x90] sm:$0xf]
    %v2755 = vld [vmem:[%s6 + $0x94] sm:$0xf]
    %v2756 = vld [vmem:[%s6 + $0x98] sm:$0xf]
    %v2757 = vld [vmem:[%s6 + $0x9c] sm:$0xf]
    %v2758 = vld [vmem:[%s6 + $0xa0] sm:$0xf]
    %v2759 = vld [vmem:[%s6 + $0xa4] sm:$0xf]
    %v2760 = vld [vmem:[%s6 + $0xa8] sm:$0xf]
    %v2761 = vld [vmem:[%s6 + $0xac] sm:$0xf]
    %v2762 = vld [vmem:[%s6 + $0xb0] sm:$0xf]
    %v2763 = vld [vmem:[%s6 + $0xb4] sm:$0xf]
    %v2764 = vld [vmem:[%s6 + $0xb8] sm:$0xf]
    %v2765 = vld [vmem:[%s6 + $0xbc] sm:$0xf]
    %v2766 = vld [vmem:[%s6 + $0xc0] sm:$0xf]
    %v2767 = vld [vmem:[%s6 + $0xc4] sm:$0xf]
    %v2768 = vld [vmem:[%s6 + $0xc8] sm:$0xf]
    %v2769 = vld [vmem:[%s6 + $0xcc] sm:$0xf]
    %v2770 = vld [vmem:[%s6 + $0xd0] sm:$0xf]
    %v2771 = vld [vmem:[%s6 + $0xd4] sm:$0xf]
    %v2772 = vld [vmem:[%s6 + $0xd8] sm:$0xf]
    %v2773 = vld [vmem:[%s6 + $0xdc] sm:$0xf]
    %v2774 = vld [vmem:[%s6 + $0xe0] sm:$0xf]
    %v2775 = vld [vmem:[%s6 + $0xe4] sm:$0xf]
    %v2776 = vld [vmem:[%s6 + $0xe8] sm:$0xf]
    %v2777 = vld [vmem:[%s6 + $0xec] sm:$0xf]
    %v2778 = vld [vmem:[%s6 + $0xf0] sm:$0xf]
    %v2779 = vld [vmem:[%s6 + $0xf4] sm:$0xf]
    %v2780 = vld [vmem:[%s6 + $0xf8] sm:$0xf]
    %v2781 = vld [vmem:[%s6 + $0xfc] sm:$0xf]
    %v2782 = vld [vmem:[%s6 + $0x100] sm:$0xf]
    %v2783 = vld [vmem:[%s6 + $0x104] sm:$0xf]
    %v2784 = vld [vmem:[%s6 + $0x108] sm:$0xf]
    %v2785 = vld [vmem:[%s6 + $0x10c] sm:$0xf]
    %v2786 = vld [vmem:[%s6 + $0x110] sm:$0xf]
    %v2787 = vld [vmem:[%s6 + $0x114] sm:$0xf]
    %v2788 = vld [vmem:[%s6 + $0x118] sm:$0xf]
    %v2789 = vld [vmem:[%s6 + $0x11c] sm:$0xf]
    %v2790 = vld [vmem:[%s6 + $0x120] sm:$0xf]
    %v2791 = vld [vmem:[%s6 + $0x124] sm:$0xf]
    %v2792 = vld [vmem:[%s6 + $0x128] sm:$0xf]
    %v2793 = vld [vmem:[%s6 + $0x12c] sm:$0xf]
    %v2794 = vld [vmem:[%s6 + $0x130] sm:$0xf]
    %v2795 = vld [vmem:[%s6 + $0x134] sm:$0xf]
    %v2796 = vld [vmem:[%s6 + $0x138] sm:$0xf]
    %v2797 = vld [vmem:[%s6 + $0x13c] sm:$0xf]
    %v2798 = vld [vmem:[%s6 + $0x140] sm:$0xf]
    %v2799 = vld [vmem:[%s6 + $0x144] sm:$0xf]
    %v2800 = vld [vmem:[%s6 + $0x148] sm:$0xf]
    %v2801 = vld [vmem:[%s6 + $0x14c] sm:$0xf]
    %v2802 = vld [vmem:[%s6 + $0x150] sm:$0xf]
    %v2803 = vld [vmem:[%s6 + $0x154] sm:$0xf]
    %v2804 = vld [vmem:[%s6 + $0x158] sm:$0xf]
    %v2805 = vld [vmem:[%s6 + $0x15c] sm:$0xf]
    %v2806 = vld [vmem:[%s6 + $0x160] sm:$0xf]
    %v2807 = vld [vmem:[%s6 + $0x164] sm:$0xf]
    %v2808 = vld [vmem:[%s6 + $0x168] sm:$0xf]
    %v2809 = vld [vmem:[%s6 + $0x16c] sm:$0xf]
    %v2810 = vld [vmem:[%s6 + $0x170] sm:$0xf]
    %v2811 = vld [vmem:[%s6 + $0x174] sm:$0xf]
    %v2812 = vld [vmem:[%s6 + $0x178] sm:$0xf]
    %v2813 = vld [vmem:[%s6 + $0x17c] sm:$0xf]
    %v2814 = vld [vmem:[%s6 + $0x180] sm:$0xf]
    %v2815 = vld [vmem:[%s6 + $0x184] sm:$0xf]
    %v2816 = vld [vmem:[%s6 + $0x188] sm:$0xf]
    %v2817 = vld [vmem:[%s6 + $0x18c] sm:$0xf]
    %v2818 = vld [vmem:[%s6 + $0x190] sm:$0xf]
    %v2819 = vld [vmem:[%s6 + $0x194] sm:$0xf]
    %v2820 = vld [vmem:[%s6 + $0x198] sm:$0xf]
    %v2821 = vld [vmem:[%s6 + $0x19c] sm:$0xf]
    %v2822 = vld [vmem:[%s6 + $0x1a0] sm:$0xf]
    %v2823 = vld [vmem:[%s6 + $0x1a4] sm:$0xf]
    %v2824 = vld [vmem:[%s6 + $0x1a8] sm:$0xf]
    %v2825 = vld [vmem:[%s6 + $0x1ac] sm:$0xf]
    %v2826 = vld [vmem:[%s6 + $0x1b0] sm:$0xf]
    %v2827 = vld [vmem:[%s6 + $0x1b4] sm:$0xf]
    %v2828 = vld [vmem:[%s6 + $0x1b8] sm:$0xf]
    %v2829 = vld [vmem:[%s6 + $0x1bc] sm:$0xf]
    %v2830 = vld [vmem:[%s6 + $0x1c0] sm:$0xf]
    %v2831 = vld [vmem:[%s6 + $0x1c4] sm:$0xf]
    %v2832 = vld [vmem:[%s6 + $0x1c8] sm:$0xf]
    %v2833 = vld [vmem:[%s6 + $0x1cc] sm:$0xf]
    %v2834 = vld [vmem:[%s6 + $0x1d0] sm:$0xf]
    %v2835 = vld [vmem:[%s6 + $0x1d4] sm:$0xf]
    %v2836 = vld [vmem:[%s6 + $0x1d8] sm:$0xf]
    %v2837 = vld [vmem:[%s6 + $0x1dc] sm:$0xf]
    %v2838 = vld [vmem:[%s6 + $0x1e0] sm:$0xf]
    %v2839 = vld [vmem:[%s6 + $0x1e4] sm:$0xf]
    %v2840 = vld [vmem:[%s6 + $0x1e8] sm:$0xf]
    %v2841 = vld [vmem:[%s6 + $0x1ec] sm:$0xf]
    %v2842 = vld [vmem:[%s6 + $0x1f0] sm:$0xf]
    %v2843 = vld [vmem:[%s6 + $0x1f4] sm:$0xf]
    %v2844 = vld [vmem:[%s6 + $0x1f8] sm:$0xf]
    %v2845 = vld [vmem:[%s6 + $0x1fc] sm:$0xf]
    %v2846 = vld [vmem:[%s6 + $0x200] sm:$0xf]
    %v2847 = vld [vmem:[%s6 + $0x204] sm:$0xf]
    %v2848 = vld [vmem:[%s6 + $0x208] sm:$0xf]
    %v2849 = vld [vmem:[%s6 + $0x20c] sm:$0xf]
    %v2850 = vld [vmem:[%s6 + $0x210] sm:$0xf]
    %v2851 = vld [vmem:[%s6 + $0x214] sm:$0xf]
    %v2852 = vld [vmem:[%s6 + $0x218] sm:$0xf]
    %v2853 = vld [vmem:[%s6 + $0x21c] sm:$0xf]
    %v2854 = vld [vmem:[%s6 + $0x220] sm:$0xf]
    %v2855 = vld [vmem:[%s6 + $0x224] sm:$0xf]
    %v2856 = vld [vmem:[%s6 + $0x228] sm:$0xf]
    %v2857 = vld [vmem:[%s6 + $0x22c] sm:$0xf]
    %v2858 = vld [vmem:[%s6 + $0x230] sm:$0xf]
    %v2859 = vld [vmem:[%s6 + $0x234] sm:$0xf]
    %v2860 = vld [vmem:[%s6 + $0x238] sm:$0xf]
    %v2861 = vld [vmem:[%s6 + $0x23c] sm:$0xf]
    %v3006 = vunpack.c.l.b16 %v2718
    %v3007 = vunpack.c.l.b16 %v2719
    %v3008 = vunpack.c.l.b16 %v2720
    %v3009 = vunpack.c.l.b16 %v2721
    %v3010 = vunpack.c.l.b16 %v2722
    %v3011 = vunpack.c.l.b16 %v2723
    %v3012 = vunpack.c.l.b16 %v2724
    %v3013 = vunpack.c.l.b16 %v2725
    %v3014 = vunpack.c.l.b16 %v2726
    %v3015 = vunpack.c.l.b16 %v2727
    %v3016 = vunpack.c.l.b16 %v2728
    %v3017 = vunpack.c.l.b16 %v2729
    %v3018 = vunpack.c.l.b16 %v2730
    %v3019 = vunpack.c.l.b16 %v2731
    %v3020 = vunpack.c.l.b16 %v2732
    %v3021 = vunpack.c.l.b16 %v2733
    %v3022 = vunpack.c.l.b16 %v2734
    %v3023 = vunpack.c.l.b16 %v2735
    %v3024 = vunpack.c.l.b16 %v2736
    %v3025 = vunpack.c.l.b16 %v2737
    %v3026 = vunpack.c.l.b16 %v2738
    %v3027 = vunpack.c.l.b16 %v2739
    %v3028 = vunpack.c.l.b16 %v2740
    %v3029 = vunpack.c.l.b16 %v2741
    %v3030 = vunpack.c.l.b16 %v2742
    %v3031 = vunpack.c.l.b16 %v2743
    %v3032 = vunpack.c.l.b16 %v2744
    %v3033 = vunpack.c.l.b16 %v2745
    %v3034 = vunpack.c.l.b16 %v2746
    %v3035 = vunpack.c.l.b16 %v2747
    %v3036 = vunpack.c.l.b16 %v2748
    %v3037 = vunpack.c.l.b16 %v2749
    %v3038 = vunpack.c.l.b16 %v2750
    %v3039 = vunpack.c.l.b16 %v2751
    %v3040 = vunpack.c.l.b16 %v2752
    %v3041 = vunpack.c.l.b16 %v2753
    %v3042 = vunpack.c.l.b16 %v2754
    %v3043 = vunpack.c.l.b16 %v2755
    %v3044 = vunpack.c.l.b16 %v2756
    %v3045 = vunpack.c.l.b16 %v2757
    %v3046 = vunpack.c.l.b16 %v2758
    %v3047 = vunpack.c.l.b16 %v2759
    %v3048 = vunpack.c.l.b16 %v2760
    %v3049 = vunpack.c.l.b16 %v2761
    %v3050 = vunpack.c.l.b16 %v2762
    %v3051 = vunpack.c.l.b16 %v2763
    %v3052 = vunpack.c.l.b16 %v2764
    %v3053 = vunpack.c.l.b16 %v2765
    %v3054 = vunpack.c.l.b16 %v2766
    %v3055 = vunpack.c.l.b16 %v2767
    %v3056 = vunpack.c.l.b16 %v2768
    %v3057 = vunpack.c.l.b16 %v2769
    %v3058 = vunpack.c.l.b16 %v2770
    %v3059 = vunpack.c.l.b16 %v2771
    %v3060 = vunpack.c.l.b16 %v2772
    %v3061 = vunpack.c.l.b16 %v2773
    %v3062 = vunpack.c.l.b16 %v2774
    %v3063 = vunpack.c.l.b16 %v2775
    %v3064 = vunpack.c.l.b16 %v2776
    %v3065 = vunpack.c.l.b16 %v2777
    %v3066 = vunpack.c.l.b16 %v2778
    %v3067 = vunpack.c.l.b16 %v2779
    %v3068 = vunpack.c.l.b16 %v2780
    %v3069 = vunpack.c.l.b16 %v2781
    %v3070 = vunpack.c.l.b16 %v2782
    %v3071 = vunpack.c.l.b16 %v2783
    %v3072 = vunpack.c.l.b16 %v2784
    %v3073 = vunpack.c.l.b16 %v2785
    %v3074 = vunpack.c.l.b16 %v2786
    %v3075 = vunpack.c.l.b16 %v2787
    %v3076 = vunpack.c.l.b16 %v2788
    %v3077 = vunpack.c.l.b16 %v2789
    %v3078 = vunpack.c.l.b16 %v2790
    %v3079 = vunpack.c.l.b16 %v2791
    %v3080 = vunpack.c.l.b16 %v2792
    %v3081 = vunpack.c.l.b16 %v2793
    %v3082 = vunpack.c.l.b16 %v2794
    %v3083 = vunpack.c.l.b16 %v2795
    %v3084 = vunpack.c.l.b16 %v2796
    %v3085 = vunpack.c.l.b16 %v2797
    %v3086 = vunpack.c.l.b16 %v2798
    %v3087 = vunpack.c.l.b16 %v2799
    %v3088 = vunpack.c.l.b16 %v2800
    %v3089 = vunpack.c.l.b16 %v2801
    %v3090 = vunpack.c.l.b16 %v2802
    %v3091 = vunpack.c.l.b16 %v2803
    %v3092 = vunpack.c.l.b16 %v2804
    %v3093 = vunpack.c.l.b16 %v2805
    %v3094 = vunpack.c.l.b16 %v2806
    %v3095 = vunpack.c.l.b16 %v2807
    %v3096 = vunpack.c.l.b16 %v2808
    %v3097 = vunpack.c.l.b16 %v2809
    %v3098 = vunpack.c.l.b16 %v2810
    %v3099 = vunpack.c.l.b16 %v2811
    %v3100 = vunpack.c.l.b16 %v2812
    %v3101 = vunpack.c.l.b16 %v2813
    %v3102 = vunpack.c.l.b16 %v2814
    %v3103 = vunpack.c.l.b16 %v2815
    %v3104 = vunpack.c.l.b16 %v2816
    %v3105 = vunpack.c.l.b16 %v2817
    %v3106 = vunpack.c.l.b16 %v2818
    %v3107 = vunpack.c.l.b16 %v2819
    %v3108 = vunpack.c.l.b16 %v2820
    %v3109 = vunpack.c.l.b16 %v2821
    %v3110 = vunpack.c.l.b16 %v2822
    %v3111 = vunpack.c.l.b16 %v2823
    %v3112 = vunpack.c.l.b16 %v2824
    %v3113 = vunpack.c.l.b16 %v2825
    %v3114 = vunpack.c.l.b16 %v2826
    %v3115 = vunpack.c.l.b16 %v2827
    %v3116 = vunpack.c.l.b16 %v2828
    %v3117 = vunpack.c.l.b16 %v2829
    %v3118 = vunpack.c.l.b16 %v2830
    %v3119 = vunpack.c.l.b16 %v2831
    %v3120 = vunpack.c.l.b16 %v2832
    %v3121 = vunpack.c.l.b16 %v2833
    %v3122 = vunpack.c.l.b16 %v2834
    %v3123 = vunpack.c.l.b16 %v2835
    %v3124 = vunpack.c.l.b16 %v2836
    %v3125 = vunpack.c.l.b16 %v2837
    %v3126 = vunpack.c.l.b16 %v2838
    %v3127 = vunpack.c.l.b16 %v2839
    %v3128 = vunpack.c.l.b16 %v2840
    %v3129 = vunpack.c.l.b16 %v2841
    %v3130 = vunpack.c.l.b16 %v2842
    %v3131 = vunpack.c.l.b16 %v2843
    %v3132 = vunpack.c.l.b16 %v2844
    %v3133 = vunpack.c.l.b16 %v2845
    %v3134 = vunpack.c.l.b16 %v2846
    %v3135 = vunpack.c.l.b16 %v2847
    %v3136 = vunpack.c.l.b16 %v2848
    %v3137 = vunpack.c.l.b16 %v2849
    %v3138 = vunpack.c.l.b16 %v2850
    %v3139 = vunpack.c.l.b16 %v2851
    %v3140 = vunpack.c.l.b16 %v2852
    %v3141 = vunpack.c.l.b16 %v2853
    %v3142 = vunpack.c.l.b16 %v2854
    %v3143 = vunpack.c.l.b16 %v2855
    %v3144 = vunpack.c.l.b16 %v2856
    %v3145 = vunpack.c.l.b16 %v2857
    %v3146 = vunpack.c.l.b16 %v2858
    %v3147 = vunpack.c.l.b16 %v2859
    %v3148 = vunpack.c.l.b16 %v2860
    %v3149 = vunpack.c.l.b16 %v2861
    %v3150 = vpack.c.b16 %v3007, %v3006
    %v3151 = vpack.c.b16 %v3009, %v3008
    %v3152 = vpack.c.b16 %v3011, %v3010
    %v3153 = vpack.c.b16 %v3013, %v3012
    %v3154 = vpack.c.b16 %v3015, %v3014
    %v3155 = vpack.c.b16 %v3017, %v3016
    %v3156 = vpack.c.b16 %v3019, %v3018
    %v3157 = vpack.c.b16 %v3021, %v3020
    %v3158 = vpack.c.b16 %v3023, %v3022
    %v3159 = vpack.c.b16 %v3025, %v3024
    %v3160 = vpack.c.b16 %v3027, %v3026
    %v3161 = vpack.c.b16 %v3029, %v3028
    %v3162 = vpack.c.b16 %v3031, %v3030
    %v3163 = vpack.c.b16 %v3033, %v3032
    %v3164 = vpack.c.b16 %v3035, %v3034
    %v3165 = vpack.c.b16 %v3037, %v3036
    %v3166 = vpack.c.b16 %v3039, %v3038
    %v3167 = vpack.c.b16 %v3041, %v3040
    %v3168 = vpack.c.b16 %v3043, %v3042
    %v3169 = vpack.c.b16 %v3045, %v3044
    %v3170 = vpack.c.b16 %v3047, %v3046
    %v3171 = vpack.c.b16 %v3049, %v3048
    %v3172 = vpack.c.b16 %v3051, %v3050
    %v3173 = vpack.c.b16 %v3053, %v3052
    %v3174 = vpack.c.b16 %v3055, %v3054
    %v3175 = vpack.c.b16 %v3057, %v3056
    %v3176 = vpack.c.b16 %v3059, %v3058
    %v3177 = vpack.c.b16 %v3061, %v3060
    %v3178 = vpack.c.b16 %v3063, %v3062
    %v3179 = vpack.c.b16 %v3065, %v3064
    %v3180 = vpack.c.b16 %v3067, %v3066
    %v3181 = vpack.c.b16 %v3069, %v3068
    %v3182 = vpack.c.b16 %v3071, %v3070
    %v3183 = vpack.c.b16 %v3073, %v3072
    %v3184 = vpack.c.b16 %v3075, %v3074
    %v3185 = vpack.c.b16 %v3077, %v3076
    %v3186 = vpack.c.b16 %v3079, %v3078
    %v3187 = vpack.c.b16 %v3081, %v3080
    %v3188 = vpack.c.b16 %v3083, %v3082
    %v3189 = vpack.c.b16 %v3085, %v3084
    %v3190 = vpack.c.b16 %v3087, %v3086
    %v3191 = vpack.c.b16 %v3089, %v3088
    %v3192 = vpack.c.b16 %v3091, %v3090
    %v3193 = vpack.c.b16 %v3093, %v3092
    %v3194 = vpack.c.b16 %v3095, %v3094
    %v3195 = vpack.c.b16 %v3097, %v3096
    %v3196 = vpack.c.b16 %v3099, %v3098
    %v3197 = vpack.c.b16 %v3101, %v3100
    %v3198 = vpack.c.b16 %v3103, %v3102
    %v3199 = vpack.c.b16 %v3105, %v3104
    %v3200 = vpack.c.b16 %v3107, %v3106
    %v3201 = vpack.c.b16 %v3109, %v3108
    %v3202 = vpack.c.b16 %v3111, %v3110
    %v3203 = vpack.c.b16 %v3113, %v3112
    %v3204 = vpack.c.b16 %v3115, %v3114
    %v3205 = vpack.c.b16 %v3117, %v3116
    %v3206 = vpack.c.b16 %v3119, %v3118
    %v3207 = vpack.c.b16 %v3121, %v3120
    %v3208 = vpack.c.b16 %v3123, %v3122
    %v3209 = vpack.c.b16 %v3125, %v3124
    %v3210 = vpack.c.b16 %v3127, %v3126
    %v3211 = vpack.c.b16 %v3129, %v3128
    %v3212 = vpack.c.b16 %v3131, %v3130
    %v3213 = vpack.c.b16 %v3133, %v3132
    %v3214 = vpack.c.b16 %v3135, %v3134
    %v3215 = vpack.c.b16 %v3137, %v3136
    %v3216 = vpack.c.b16 %v3139, %v3138
    %v3217 = vpack.c.b16 %v3141, %v3140
    %v3218 = vpack.c.b16 %v3143, %v3142
    %v3219 = vpack.c.b16 %v3145, %v3144
    %v3220 = vpack.c.b16 %v3147, %v3146
    %v3221 = vpack.c.b16 %v3149, %v3148
    %3294 = vmatprep.subr.bf16.mxu0 0
    %3295 = vmatpush1.bf16.msra.mxu0 %v3150
    %3296 = vmatprep.subr.bf16.mxu0 0
    %3297 = vmatpush1.bf16.msra.mxu0 %v3151
    %3298 = vmatprep.subr.bf16.mxu0 0
    %3299 = vmatpush1.bf16.msra.mxu0 %v3152
    %3300 = vmatprep.subr.bf16.mxu0 0
    %3301 = vmatpush1.bf16.msra.mxu0 %v3153
    %3302 = vmatprep.subr.bf16.mxu0 0
    %3303 = vmatpush1.bf16.msra.mxu0 %v3154
    %3304 = vmatprep.subr.bf16.mxu0 0
    %3305 = vmatpush1.bf16.msra.mxu0 %v3155
    %3306 = vmatprep.subr.bf16.mxu0 0
    %3307 = vmatpush1.bf16.msra.mxu0 %v3156
    %3308 = vmatprep.subr.bf16.mxu0 0
    %3309 = vmatpush1.bf16.msra.mxu0 %v3157
    %3310 = vmatprep.subr.bf16.mxu0 0
    %3311 = vmatpush1.bf16.msra.mxu0 %v3158
    %3312 = vmatprep.subr.bf16.mxu0 0
    %3313 = vmatpush1.bf16.msra.mxu0 %v3159
    %3314 = vmatprep.subr.bf16.mxu0 0
    %3315 = vmatpush1.bf16.msra.mxu0 %v3160
    %3316 = vmatprep.subr.bf16.mxu0 0
    %3317 = vmatpush1.bf16.msra.mxu0 %v3161
    %3318 = vmatprep.subr.bf16.mxu0 0
    %3319 = vmatpush1.bf16.msra.mxu0 %v3162
    %3320 = vmatprep.subr.bf16.mxu0 0
    %3321 = vmatpush1.bf16.msra.mxu0 %v3163
    %3322 = vmatprep.subr.bf16.mxu0 0
    %3323 = vmatpush1.bf16.msra.mxu0 %v3164
    %3324 = vmatprep.subr.bf16.mxu0 0
    %3325 = vmatpush1.bf16.msra.mxu0 %v3165
    %3326 = vmatprep.mubr.bf16.mxu0 %v2710
    %3327 = vmatmul.mubr.bf16.gmra.mrb[0].mxu0 %v2709
    %v3328 = vpop.f32.mrb[0].mxu0
    %v3329 = vadd.f32 0.0, %v3328
    %v3330 = vpop.f32.mrb[0].mxu0
    %v3331 = vpop.f32.mrb[0].mxu0
    %v3332 = vadd.f32 0.0, %v3331
    %v3333 = vpop.f32.mrb[0].mxu0
    %3334 = vdwg.mxu0
    %3335 = vmatprep.subr.bf16.mxu0 0
    %3336 = vmatpush1.bf16.msra.mxu0 %v3166
    %3337 = vmatprep.subr.bf16.mxu0 0
    %3338 = vmatpush1.bf16.msra.mxu0 %v3167
    %3339 = vmatprep.subr.bf16.mxu0 0
    %3340 = vmatpush1.bf16.msra.mxu0 %v3168
    %3341 = vmatprep.subr.bf16.mxu0 0
    %3342 = vmatpush1.bf16.msra.mxu0 %v3169
    %3343 = vmatprep.subr.bf16.mxu0 0
    %3344 = vmatpush1.bf16.msra.mxu0 %v3170
    %3345 = vmatprep.subr.bf16.mxu0 0
    %3346 = vmatpush1.bf16.msra.mxu0 %v3171
    %3347 = vmatprep.subr.bf16.mxu0 0
    %3348 = vmatpush1.bf16.msra.mxu0 %v3172
    %3349 = vmatprep.subr.bf16.mxu0 0
    %3350 = vmatpush1.bf16.msra.mxu0 %v3173
    %3351 = vmatprep.subr.bf16.mxu0 0
    %3352 = vmatpush1.bf16.msra.mxu0 %v3174
    %3353 = vmatprep.subr.bf16.mxu0 0
    %3354 = vmatpush1.bf16.msra.mxu0 %v3175
    %3355 = vmatprep.subr.bf16.mxu0 0
    %3356 = vmatpush1.bf16.msra.mxu0 %v3176
    %3357 = vmatprep.subr.bf16.mxu0 0
    %3358 = vmatpush1.bf16.msra.mxu0 %v3177
    %3359 = vmatprep.subr.bf16.mxu0 0
    %3360 = vmatpush1.bf16.msra.mxu0 %v3178
    %3361 = vmatprep.subr.bf16.mxu0 0
    %3362 = vmatpush1.bf16.msra.mxu0 %v3179
    %3363 = vmatprep.subr.bf16.mxu0 0
    %3364 = vmatpush1.bf16.msra.mxu0 %v3180
    %3365 = vmatprep.subr.bf16.mxu0 0
    %3366 = vmatpush1.bf16.msra.mxu0 %v3181
    %3367 = vmatprep.mubr.bf16.mxu0 %v2712
    %3368 = vmatmul.mubr.bf16.gmra.mrb[0].mxu0 %v2711
    %v3369 = vpop.f32.mrb[0].mxu0
    %v3370 = vadd.f32 %v3329, %v3369
    %v3371 = vpop.f32.mrb[0].mxu0
    %v3372 = vpop.f32.mrb[0].mxu0
    %v3373 = vadd.f32 %v3332, %v3372
    %v3374 = vpop.f32.mrb[0].mxu0
    %3375 = vdwg.mxu0
    %3376 = vmatprep.subr.bf16.mxu0 0
    %3377 = vmatpush1.bf16.msra.mxu0 %v3182
    %3378 = vmatprep.subr.bf16.mxu0 0
    %3379 = vmatpush1.bf16.msra.mxu0 %v3183
    %3380 = vmatprep.subr.bf16.mxu0 0
    %3381 = vmatpush1.bf16.msra.mxu0 %v3184
    %3382 = vmatprep.subr.bf16.mxu0 0
    %3383 = vmatpush1.bf16.msra.mxu0 %v3185
    %3384 = vmatprep.subr.bf16.mxu0 0
    %3385 = vmatpush1.bf16.msra.mxu0 %v3186
    %3386 = vmatprep.subr.bf16.mxu0 0
    %3387 = vmatpush1.bf16.msra.mxu0 %v3187
    %3388 = vmatprep.subr.bf16.mxu0 0
    %3389 = vmatpush1.bf16.msra.mxu0 %v3188
    %3390 = vmatprep.subr.bf16.mxu0 0
    %3391 = vmatpush1.bf16.msra.mxu0 %v3189
    %3392 = vmatprep.subr.bf16.mxu0 0
    %3393 = vmatpush1.bf16.msra.mxu0 %v3190
    %3394 = vmatprep.subr.bf16.mxu0 0
    %3395 = vmatpush1.bf16.msra.mxu0 %v3191
    %3396 = vmatprep.subr.bf16.mxu0 0
    %3397 = vmatpush1.bf16.msra.mxu0 %v3192
    %3398 = vmatprep.subr.bf16.mxu0 0
    %3399 = vmatpush1.bf16.msra.mxu0 %v3193
    %3400 = vmatprep.subr.bf16.mxu0 0
    %3401 = vmatpush1.bf16.msra.mxu0 %v3194
    %3402 = vmatprep.subr.bf16.mxu0 0
    %3403 = vmatpush1.bf16.msra.mxu0 %v3195
    %3404 = vmatprep.subr.bf16.mxu0 0
    %3405 = vmatpush1.bf16.msra.mxu0 %v3196
    %3406 = vmatprep.subr.bf16.mxu0 0
    %3407 = vmatpush1.bf16.msra.mxu0 %v3197
    %3408 = vmatprep.mubr.bf16.mxu0 %v2714
    %3409 = vmatmul.mubr.bf16.gmra.mrb[0].mxu0 %v2713
    %v3410 = vpop.f32.mrb[0].mxu0
    %v3411 = vadd.f32 %v3370, %v3410
    %v3412 = vpop.f32.mrb[0].mxu0
    %v3413 = vpop.f32.mrb[0].mxu0
    %v3414 = vadd.f32 %v3373, %v3413
    %v3415 = vpop.f32.mrb[0].mxu0
    %3416 = vdwg.mxu0
    %3417 = vmatprep.subr.bf16.mxu0 0
    %3418 = vmatpush1.bf16.msra.mxu0 %v3198
    %3419 = vmatprep.subr.bf16.mxu0 0
    %3420 = vmatpush1.bf16.msra.mxu0 %v3199
    %3421 = vmatprep.subr.bf16.mxu0 0
    %3422 = vmatpush1.bf16.msra.mxu0 %v3200
    %3423 = vmatprep.subr.bf16.mxu0 0
    %3424 = vmatpush1.bf16.msra.mxu0 %v3201
    %3425 = vmatprep.subr.bf16.mxu0 0
    %3426 = vmatpush1.bf16.msra.mxu0 %v3202
    %3427 = vmatprep.subr.bf16.mxu0 0
    %3428 = vmatpush1.bf16.msra.mxu0 %v3203
    %3429 = vmatprep.subr.bf16.mxu0 0
    %3430 = vmatpush1.bf16.msra.mxu0 %v3204
    %3431 = vmatprep.subr.bf16.mxu0 0
    %3432 = vmatpush1.bf16.msra.mxu0 %v3205
    %3433 = vmatprep.subr.bf16.mxu0 0
    %3434 = vmatpush1.bf16.msra.mxu0 %v3206
    %3435 = vmatprep.subr.bf16.mxu0 0
    %3436 = vmatpush1.bf16.msra.mxu0 %v3207
    %3437 = vmatprep.subr.bf16.mxu0 0
    %3438 = vmatpush1.bf16.msra.mxu0 %v3208
    %3439 = vmatprep.subr.bf16.mxu0 0
    %3440 = vmatpush1.bf16.msra.mxu0 %v3209
    %3441 = vmatprep.subr.bf16.mxu0 0
    %3442 = vmatpush1.bf16.msra.mxu0 %v3210
    %3443 = vmatprep.subr.bf16.mxu0 0
    %3444 = vmatpush1.bf16.msra.mxu0 %v3211
    %3445 = vmatprep.subr.bf16.mxu0 0
    %3446 = vmatpush1.bf16.msra.mxu0 %v3212
    %3447 = vmatprep.subr.bf16.mxu0 0
    %3448 = vmatpush1.bf16.msra.mxu0 %v3213
    %3449 = vmatprep.mubr.bf16.mxu0 %v2716
    %3450 = vmatmul.mubr.bf16.gmra.mrb[0].mxu0 %v2715
    %v3451 = vpop.f32.mrb[0].mxu0
    %v3452 = vadd.f32 %v3411, %v3451
    %v3453 = vpop.f32.mrb[0].mxu0
    %v3454 = vpop.f32.mrb[0].mxu0
    %v3455 = vadd.f32 %v3414, %v3454
    %v3456 = vpop.f32.mrb[0].mxu0
    %3457 = vdwg.mxu0
    %3458 = vmatprep.subr.bf16.mxu0 0
    %3459 = vmatpush1.bf16.msra.mxu0 %v3214
    %3460 = vmatprep.subr.bf16.mxu0 0
    %3461 = vmatpush1.bf16.msra.mxu0 %v3215
    %3462 = vmatprep.subr.bf16.mxu0 0
    %3463 = vmatpush1.bf16.msra.mxu0 %v3216
    %3464 = vmatprep.subr.bf16.mxu0 0
    %3465 = vmatpush1.bf16.msra.mxu0 %v3217
    %3466 = vmatprep.subr.bf16.mxu0 0
    %3467 = vmatpush1.bf16.msra.mxu0 %v3218
    %3468 = vmatprep.subr.bf16.mxu0 0
    %3469 = vmatpush1.bf16.msra.mxu0 %v3219
    %3470 = vmatprep.subr.bf16.mxu0 0
    %3471 = vmatpush1.bf16.msra.mxu0 %v3220
    %3472 = vmatprep.subr.bf16.mxu0 0
    %3473 = vmatpush1.bf16.msra.mxu0 %v3221
    %3474 = vmatprep.subr.bf16.mxu0 0
    %3475 = vmatpush1.bf16.msra.mxu0 0
    %3476 = vmatprep.subr.bf16.mxu0 0
    %3477 = vmatpush1.bf16.msra.mxu0 0
    %3478 = vmatprep.subr.bf16.mxu0 0
    %3479 = vmatpush1.bf16.msra.mxu0 0
    %3480 = vmatprep.subr.bf16.mxu0 0
    %3481 = vmatpush1.bf16.msra.mxu0 0
    %3482 = vmatprep.subr.bf16.mxu0 0
    %3483 = vmatpush1.bf16.msra.mxu0 0
    %3484 = vmatprep.subr.bf16.mxu0 0
    %3485 = vmatpush1.bf16.msra.mxu0 0
    %3486 = vmatprep.subr.bf16.mxu0 0
    %3487 = vmatpush1.bf16.msra.mxu0 0
    %3488 = vmatprep.subr.bf16.mxu0 0
    %3489 = vmatpush1.bf16.msra.mxu0 0
    %3490 = vmatprep.mubr.bf16.mxu0 0
    %3491 = vmatmul.mubr.bf16.gmra.mrb[0].mxu0 %v2717
    %v3492 = vpop.f32.mrb[0].mxu0
    %v3493 = vadd.f32 %v3452, %v3492
    %v3494 = vpop.f32.mrb[0].mxu0
    %v3495 = vpop.f32.mrb[0].mxu0
    %v3496 = vadd.f32 %v3455, %v3495
    %v3497 = vpop.f32.mrb[0].mxu0
    %3498 = vdwg.mxu0
    %v3499 = vsub.f32 %v3493, %v2646
    %v3500 = vsub.f32 %v3496, %v2647
    %v3501 = vmul.f32 %v30, %v1788
    %v3502 = vmul.f32 %v31, %v1789
    %v3503 = vadd.f32 %v3501, %v3499
    %v3504 = vadd.f32 %v3502, %v3500
    %v3505 = vmul.f32 %v42, %v1788
    %v3506 = vmul.f32 %v42, %v1789
    %v3507 = vadd.f32 %v3503, %v3505
    %v3508 = vadd.f32 %v3504, %v3506
    %3509 = vrot.lane.b32.xlu0 %v1788, 64
    %v3510 = vpop.permute.xlu0 %3509
    %3511 = vrot.lane.b32.xlu0 %v1789, 64
    %v3512 = vpop.permute.xlu0 %3511
    %v3513 = vmul.f32 %v3510, %v41
    %v3514 = vmul.f32 %v3512, %v41
    %3515 = vrot.lane.b32.xlu0 %v3507, 64
    %v3516 = vpop.permute.xlu0 %3515
    %3517 = vrot.lane.b32.xlu0 %v3508, 64
    %v3518 = vpop.permute.xlu0 %3517
    %v3519 = vmul.f32 %v3516, %v41
    %v3520 = vmul.f32 %v3518, %v41
    %v3521 = vmul.f32 %v3507, %v1788
    %v3522 = vmul.f32 %v3508, %v1789
    %v3523 = vadd.f32 %v3521, %v3522
    %3524 = vadd.xlane.f32.xlu0 %v3523
    %v3525 = vpop.xlane.xlu0 %3524
    %v3526 = vrot.slane %v3525, 4
    %v3527 = vadd.f32 %v3525, %v3526
    %v3528 = vrot.slane %v3527, 2
    %v3529 = vadd.f32 %v3527, %v3528
    %v3530 = vrot.slane %v3529, 1
    %v3531 = vadd.f32 %v3529, %v3530
    %s3532 = vtos %v3531
    %v3533 = vmul.f32 %v3507, %v3513
    %v3534 = vmul.f32 %v3508, %v3514
    %v3535 = vadd.f32 %v3533, %v3534
    %3536 = vadd.xlane.f32.xlu0 %v3535
    %v3537 = vpop.xlane.xlu0 %3536
    %v3538 = vrot.slane %v3537, 4
    %v3539 = vadd.f32 %v3537, %v3538
    %v3540 = vrot.slane %v3539, 2
    %v3541 = vadd.f32 %v3539, %v3540
    %v3542 = vrot.slane %v3541, 1
    %v3543 = vadd.f32 %v3541, %v3542
    %s3544 = vtos %v3543
    %s3545 = smul.f32 %s3532, %s3532
    %s3546 = smul.f32 %s3544, %s3544
    %s3547 = sadd.f32 %s3545, %s3546
    %s3548 = sadd.f32 %s3547, 1e-30
    %s3549 = smul.f32 %s1794, %s3532
    %v3550 = vstv %s3548
    %v3551 = vrcp.pop %v3550
    %s3552 = vtos %v3551
    %s3553 = smul.f32 %s3549, %s3552
    %s3554 = ssub.f32 0.0, %s1794
    %s3555 = smul.f32 %s3554, %s3544
    %v3556 = vstv %s3548
    %v3557 = vrcp.pop %v3556
    %s3558 = vtos %v3557
    %s3559 = smul.f32 %s3555, %s3558
    %v3560 = vstv %s3553
    %v3561 = vmul.f32 %v3560, %v1788
    %v3562 = vmul.f32 %v3560, %v1789
    %v3563 = vadd.f32 %v1792, %v3561
    %v3564 = vadd.f32 %v1793, %v3562
    %v3565 = vstv %s3559
    %v3566 = vmul.f32 %v3565, %v3513
    %v3567 = vmul.f32 %v3565, %v3514
    %v3568 = vadd.f32 %v3563, %v3566
    %v3569 = vadd.f32 %v3564, %v3567
    %v3570 = vmul.f32 %v3560, %v3507
    %v3571 = vmul.f32 %v3560, %v3508
    %v3572 = vmul.f32 %v3565, %v3519
    %v3573 = vmul.f32 %v3565, %v3520
    %v3574 = vadd.f32 %v3570, %v3572
    %v3575 = vadd.f32 %v3571, %v3573
    %v3576 = vsub.f32 %v1790, %v3574
    %v3577 = vsub.f32 %v1791, %v3575
    %v3578 = vmul.f32 %v3576, %v3576
    %v3579 = vmul.f32 %v3577, %v3577
    %v3580 = vadd.f32 %v3578, %v3579
    %3581 = vadd.xlane.f32.xlu0 %v3580
    %v3582 = vpop.xlane.xlu0 %3581
    %v3583 = vrot.slane %v3582, 4
    %v3584 = vadd.f32 %v3582, %v3583
    %v3585 = vrot.slane %v3584, 2
    %v3586 = vadd.f32 %v3584, %v3585
    %v3587 = vrot.slane %v3586, 1
    %v3588 = vadd.f32 %v3586, %v3587
    %s3589 = vtos %v3588
    %s3590 = sadd.f32 %s1794, 1e-30
    %v3591 = vstv %s3590
    %v3592 = vrcp.pop %v3591
    %s3593 = vtos %v3592
    %s3594 = smul.f32 %s3589, %s3593
    %v3595 = vstv %s3594
    %v3596 = vmul.f32 %v3595, %v1788
    %v3597 = vmul.f32 %v3595, %v1789
    %v3598 = vadd.f32 %v3576, %v3596
    %v3599 = vadd.f32 %v3577, %v3597
  $region34: #{bddc_2d_forward.1} parent=0 // loop_footer
    %s1787 = sadd.s32 1, %s1783
  $region35: #{bddc_2d_forward.1} parent=0 // loop_footer_branch
    %1782 = sbr.rel target = $region31
  $region36: #{bddc_2d_forward.1} parent=0 // loop_exit
    _
  %3600 = vst [vmem:[%s7] sm:$0xff] %v1792
  %3601 = vst [vmem:[%s7 + $0x8] sm:$0xff] %v1793
  // Predicated region
  $region37: #{bddc_2d_forward.1} parent=0 // pred_check
    _
  $region38: #{bddc_2d_forward.1} parent=0 // pred_check_branch
    %3603 = sbr.rel (0) target = $region40
  $region39: #{bddc_2d_forward.1} parent=0 // pred_region
    _
  $region40: #{bddc_2d_forward.1} parent=0 // pred_fallthru
    _
  // Predicated region
  $region41: #{bddc_2d_forward.1} parent=0 // pred_check
    _
  $region42: #{bddc_2d_forward.1} parent=0 // pred_check_branch
    %3605 = sbr.rel (0) target = $region44
  $region43: #{bddc_2d_forward.1} parent=0 // pred_region
    _
  $region44: #{bddc_2d_forward.1} parent=0 // pred_fallthru
    _

</llo_original>
